<compile_context>
chip_gen: v7x
topology: tpu7x:2x2x1
jax: 0.10.0
libtpu: 0.0.40
codegen_flags: <defaults>
</compile_context>

<pallas_src>
import jax
import jax.numpy as jnp
from jax import lax
from jax.experimental import pallas as pl
from jax.experimental.pallas import tpu as pltpu

EPS = 1e-5


# ------------------------------ Pallas kernel -------------------------------

def fused_block_kernel(p2_ref, w12_ref, w3_ref, bn_ref, out_ref, im3_ref):
    """Whole basic_block_2 forward, fused in VMEM.

    p2_ref  : [M, K2P]            bf16 im2col of x for the 3x3 s2 p1 conv
                                  (K2P = 9*Cin zero-padded to a multiple of 128)
    w12_ref : [K2P, 2*CP]         bf16; cols 0:CP   -> conv2 (3x3 s2) weights,
                                  cols CP:2CP -> conv1 (1x1 s2) weights placed
                                  on the center-tap rows (zeros elsewhere)
    w3_ref  : [9*CP, CP]          bf16 conv3 (3x3 s1) weights, tap-major rows
    bn_ref  : [6, CP]             f32 packed (g1, be1, g2, be2, g3, be3)
    out_ref : [N, Ho, Wo, CP]     f32 final output (lane-dense, CP = 128k)
    im3_ref : [N, Ho, Wo, 9*CP]   bf16 VMEM scratch: conv3 im2col of t
    """
    N, Ho, Wo, CP = out_ref.shape
    M = N * Ho * Wo
    K3 = im3_ref.shape[-1]
    inv_m = 1.0 / M

    bnv = bn_ref[...]                       # [6, CP]
    g1, be1 = bnv[0:1, :], bnv[1:2, :]
    g2, be2 = bnv[2:3, :], bnv[3:4, :]
    g3, be3 = bnv[4:5, :], bnv[5:6, :]

    def bn_train(y, g, b):
        # training-mode BatchNorm2d over (N, H, W), centered two-pass moments
        mu = jnp.sum(y, axis=0, keepdims=True) * inv_m
        c = y - mu
        var = jnp.sum(c * c, axis=0, keepdims=True) * inv_m   # biased variance
        return c * lax.rsqrt(var + EPS) * g + b

    # ---- conv1(1x1,s2) + conv2(3x3,s2,p1) fused into ONE MXU pass (N=2*CP) ----
    y12 = jnp.dot(p2_ref[...], w12_ref[...],
                  preferred_element_type=jnp.float32)          # [M, 2*CP] f32
    y2 = y12[:, 0:CP]
    y1 = y12[:, CP:2 * CP]

    out1 = bn_train(y1, g1, be1)                               # [M, CP]
    t = jnp.maximum(bn_train(y2, g2, be2), 0.0)                # [M, CP]
    tn = t.reshape(N, Ho, Wo, CP).astype(im3_ref.dtype)        # bf16, stays in VMEM

    # ---- conv3 im2col: shifted windows of t written straight to scratch ----
    # (only the 1-px halo strips are zeroed; the interior is fully overwritten)
    for dy in range(3):
        for dx in range(3):
            tap = dy * 3 + dx
            cs = slice(tap * CP, (tap + 1) * CP)               # 128-lane aligned
            y_lo, y_hi = max(0, 1 - dy), Ho - max(0, dy - 1)
            x_lo, x_hi = max(0, 1 - dx), Wo - max(0, dx - 1)
            if dy == 0:
                im3_ref[:, 0:1, :, cs] = jnp.zeros((N, 1, Wo, CP), im3_ref.dtype)
            if dy == 2:
                im3_ref[:, Ho - 1:Ho, :, cs] = jnp.zeros((N, 1, Wo, CP), im3_ref.dtype)
            if dx == 0:
                im3_ref[:, :, 0:1, cs] = jnp.zeros((N, Ho, 1, CP), im3_ref.dtype)
            if dx == 2:
                im3_ref[:, :, Wo - 1:Wo, cs] = jnp.zeros((N, Ho, 1, CP), im3_ref.dtype)
            im3_ref[:, y_lo:y_hi, x_lo:x_hi, cs] = \
                tn[:, y_lo + dy - 1:y_hi + dy - 1, x_lo + dx - 1:x_hi + dx - 1, :]

    # ---- conv3 (3x3 s1 p1) as ONE matmul with K = 9*CP ----
    y3 = jnp.dot(im3_ref[...].reshape(M, K3), w3_ref[...],
                 preferred_element_type=jnp.float32)           # [M, CP] f32
    out2 = bn_train(y3, g3, be3)

    # ---- residual add + ReLU ----
    out_ref[...] = jnp.maximum(out1 + out2, 0.0).reshape(N, Ho, Wo, CP)


# ------------------------------- JAX wrapper ---------------------------------

def basic_block_2_forward(x_nchw, params):
    N, Cin, H, W = x_nchw.shape
    Cout = params["w1"].shape[0]
    assert H % 2 == 0 and W % 2 == 0, "even spatial dims assumed"
    Ho, Wo = H // 2, W // 2
    M = N * Ho * Wo
    CP = max(128, ((Cout + 127) // 128) * 128)      # lane-dense output channels
    K2 = 9 * Cin
    K2P = max(128, ((K2 + 127) // 128) * 128)       # lane-dense conv2 K

    x = jnp.transpose(x_nchw, (0, 2, 3, 1)).astype(jnp.float32)      # NHWC
    xp = jnp.pad(x, ((0, 0), (1, 1), (1, 1), (0, 0)))                # pad=1

    # lane-dense im2col for the 3x3 stride-2 conv: column = tap*Cin + ci
    taps = [xp[:, ky:ky + 2 * Ho:2, kx:kx + 2 * Wo:2, :]
            for ky in range(3) for kx in range(3)]                   # 9 x [N,Ho,Wo,Cin]
    p2 = jnp.concatenate(taps, axis=-1).reshape(M, K2)
    p2 = jnp.pad(p2, ((0, 0), (0, K2P - K2))).astype(jnp.bfloat16)   # [M, K2P]

    # combined weight: cols 0:CP = conv2 taps, cols CP:2CP = conv1 (center tap)
    w2mat = jnp.transpose(params["w2"], (2, 3, 1, 0)).reshape(K2, Cout)
    w2mat = jnp.pad(w2mat, ((0, K2P - K2), (0, CP - Cout)))          # [K2P, CP]
    w1mat = params["w1"].reshape(Cout, Cin).T                        # [Cin, Cout]
    w1big = jnp.zeros((K2P, CP), jnp.float32).at[4 * Cin:5 * Cin, :Cout].set(w1mat)
    w12 = jnp.concatenate([w2mat, w1big], axis=1).astype(jnp.bfloat16)  # [K2P, 2*CP]

    # conv3 weights, tap-major rows to match the im2col scratch layout
    w3 = jnp.transpose(params["w3"], (2, 3, 1, 0)).reshape(9, Cout, Cout)
    w3 = jnp.pad(w3, ((0, 0), (0, CP - Cout), (0, CP - Cout)))
    w3 = w3.reshape(9 * CP, CP).astype(jnp.bfloat16)                 # [9*CP, CP]

    # packed BN params (gamma/beta padded with zeros -> padded channels output 0)
    bn = jnp.stack([params["g1"], params["be1"],
                    params["g2"], params["be2"],
                    params["g3"], params["be3"]], axis=0)            # [6, Cout]
    bn = jnp.pad(bn, ((0, 0), (0, CP - Cout))).astype(jnp.float32)   # [6, CP]

    vmem = pl.BlockSpec(memory_space=pltpu.MemorySpace.VMEM)
    out = pl.pallas_call(
        fused_block_kernel,
        out_shape=jax.ShapeDtypeStruct((N, Ho, Wo, CP), jnp.float32),
        in_specs=[vmem] * 4,
        out_specs=vmem,
        scratch_shapes=[pltpu.VMEM((N, Ho, Wo, 9 * CP), jnp.bfloat16)],
    )(p2, w12, w3, bn)

    return jnp.transpose(out[..., :Cout], (0, 3, 1, 2))              # back to NCHW


# --------------------------- pure-JAX reference ------------------------------

def reference_forward(x, p):
    dn = ("NCHW", "OIHW", "NCHW")

    def conv(x, w, b, stride, pad):
        y = lax.conv_general_dilated(x, w, (stride, stride),
                                     [(pad, pad), (pad, pad)],
                                     dimension_numbers=dn,
                                     precision=lax.Precision.HIGHEST)
        return y + b.reshape(1, -1, 1, 1)

    def bn(y, g, be):
        mu = jnp.mean(y, axis=(0, 2, 3), keepdims=True)
        var = jnp.mean((y - mu) ** 2, axis=(0, 2, 3), keepdims=True)
        return (y - mu) * lax.rsqrt(var + EPS) * g.reshape(1, -1, 1, 1) \
            + be.reshape(1, -1, 1, 1)

    out1 = bn(conv(x, p["w1"], p["b1"], 2, 0), p["g1"], p["be1"])
    t = jnp.maximum(bn(conv(x, p["w2"], p["b2"], 2, 1), p["g2"], p["be2"]), 0.0)
    out2 = bn(conv(t, p["w3"], p["b3"], 1, 1), p["g3"], p["be3"])
    return jnp.maximum(out1 + out2, 0.0)


# --------------------------------- main --------------------------------------

if __name__ == "__main__":
    N, Cin, Cout, H, W = 2, 4, 8, 16, 16
    key = jax.random.PRNGKey(0)
    ks = jax.random.split(key, 13)

    params = {
        "w1": 0.2 * jax.random.normal(ks[0], (Cout, Cin, 1, 1), jnp.float32),
        "b1": 0.1 * jax.random.normal(ks[1], (Cout,), jnp.float32),
        "g1": 1.0 + 0.1 * jax.random.normal(ks[2], (Cout,), jnp.float32),
        "be1": 0.1 * jax.random.normal(ks[3], (Cout,), jnp.float32),
        "w2": 0.2 * jax.random.normal(ks[4], (Cout, Cin, 3, 3), jnp.float32),
        "b2": 0.1 * jax.random.normal(ks[5], (Cout,), jnp.float32),
        "g2": 1.0 + 0.1 * jax.random.normal(ks[6], (Cout,), jnp.float32),
        "be2": 0.1 * jax.random.normal(ks[7], (Cout,), jnp.float32),
        "w3": 0.2 * jax.random.normal(ks[8], (Cout, Cout, 3, 3), jnp.float32),
        "b3": 0.1 * jax.random.normal(ks[9], (Cout,), jnp.float32),
        "g3": 1.0 + 0.1 * jax.random.normal(ks[10], (Cout,), jnp.float32),
        "be3": 0.1 * jax.random.normal(ks[11], (Cout,), jnp.float32),
    }
    x = jax.random.normal(ks[12], (N, Cin, H, W), jnp.float32)

    fwd = jax.jit(basic_block_2_forward)
    out = jax.block_until_ready(fwd(x, params))
    assert out.shape == (N, Cout, H // 2, W // 2), out.shape

    ref = jax.block_until_ready(reference_forward(x, params))
    # Kernel feeds bf16 to the MXU (same rounding as default-precision f32
    # dots) vs a full-f32 HIGHEST reference; BN's rsqrt(var) amplifies the
    # ~1e-3 relative matmul error, so compare at 2e-2 (semantics are exact,
    # only matmul rounding differs).
    assert jnp.allclose(out, ref, atol=2e-2, rtol=2e-2), \
        float(jnp.max(jnp.abs(out - ref)))

    print("KERNEL_OK")
</pallas_src>

<mosaic_0001>
module attributes {stable_mosaic.version = 11 : i64} {
  func.func @fused_block_kernel(%arg0: memref<128x128xbf16, #tpu.memory_space<vmem>>, %arg1: memref<128x256xbf16, #tpu.memory_space<vmem>>, %arg2: memref<1152x128xbf16, #tpu.memory_space<vmem>>, %arg3: memref<6x128xf32, #tpu.memory_space<vmem>>, %arg4: memref<2x8x8x128xf32, #tpu.memory_space<vmem>>, %arg5: memref<2x8x8x1152xbf16, #tpu.memory_space<vmem>>) attributes {dimension_semantics = [], scalar_prefetch = 0 : i64, scratch_operands = 1 : i64, tpu.core_type = #tpu.core_type<tc>} {
    %c0 = arith.constant 0 : index
    %c0_0 = arith.constant 0 : index
    %0 = vector.load %arg3[%c0, %c0_0] : memref<6x128xf32, #tpu.memory_space<vmem>>, vector<6x128xf32>
    %1 = vector.extract_strided_slice %0 {offsets = [0, 0], sizes = [1, 128], strides = [1, 1]} : vector<6x128xf32> to vector<1x128xf32>
    %2 = vector.extract_strided_slice %0 {offsets = [1, 0], sizes = [1, 128], strides = [1, 1]} : vector<6x128xf32> to vector<1x128xf32>
    %3 = vector.extract_strided_slice %0 {offsets = [2, 0], sizes = [1, 128], strides = [1, 1]} : vector<6x128xf32> to vector<1x128xf32>
    %4 = vector.extract_strided_slice %0 {offsets = [3, 0], sizes = [1, 128], strides = [1, 1]} : vector<6x128xf32> to vector<1x128xf32>
    %5 = vector.extract_strided_slice %0 {offsets = [4, 0], sizes = [1, 128], strides = [1, 1]} : vector<6x128xf32> to vector<1x128xf32>
    %6 = vector.extract_strided_slice %0 {offsets = [5, 0], sizes = [1, 128], strides = [1, 1]} : vector<6x128xf32> to vector<1x128xf32>
    %c0_1 = arith.constant 0 : index
    %c0_2 = arith.constant 0 : index
    %7 = vector.load %arg0[%c0_1, %c0_2] : memref<128x128xbf16, #tpu.memory_space<vmem>>, vector<128x128xbf16>
    %c0_3 = arith.constant 0 : index
    %c0_4 = arith.constant 0 : index
    %8 = vector.load %arg1[%c0_3, %c0_4] : memref<128x256xbf16, #tpu.memory_space<vmem>>, vector<128x256xbf16>
    %cst = arith.constant dense<0.000000e+00> : vector<128x256xf32>
    %9 = tpu.matmul %7, %8, %cst {dimension_numbers = #tpu.dot_dimension_numbers<[1], [0], [0], [1], [0, 0, 1, 1], [], []>} : vector<128x128xbf16>, vector<128x256xbf16>, vector<128x256xf32> -> vector<128x256xf32>
    %10 = vector.extract_strided_slice %9 {offsets = [0, 0], sizes = [128, 128], strides = [1, 1]} : vector<128x256xf32> to vector<128x128xf32>
    %11 = vector.extract_strided_slice %9 {offsets = [0, 128], sizes = [128, 128], strides = [1, 1]} : vector<128x256xf32> to vector<128x128xf32>
    %cst_5 = arith.constant dense<0.000000e+00> : vector<128xf32>
    %12 = vector.multi_reduction <add>, %11, %cst_5 [0] : vector<128x128xf32> to vector<128xf32>
    %13 = vector.shape_cast %12 : vector<128xf32> to vector<1x128xf32>
    %cst_6 = arith.constant 7.812500e-03 : f32
    %14 = vector.broadcast %cst_6 : f32 to vector<1x128xf32>
    %15 = arith.mulf %13, %14 : vector<1x128xf32>
    %16 = vector.broadcast %15 : vector<1x128xf32> to vector<128x128xf32>
    %17 = arith.subf %11, %16 : vector<128x128xf32>
    %18 = arith.mulf %17, %17 : vector<128x128xf32>
    %cst_7 = arith.constant dense<0.000000e+00> : vector<128xf32>
    %19 = vector.multi_reduction <add>, %18, %cst_7 [0] : vector<128x128xf32> to vector<128xf32>
    %20 = vector.shape_cast %19 : vector<128xf32> to vector<1x128xf32>
    %cst_8 = arith.constant 7.812500e-03 : f32
    %21 = vector.broadcast %cst_8 : f32 to vector<1x128xf32>
    %22 = arith.mulf %20, %21 : vector<1x128xf32>
    %cst_9 = arith.constant 9.99999974E-6 : f32
    %23 = vector.broadcast %cst_9 : f32 to vector<1x128xf32>
    %24 = arith.addf %22, %23 : vector<1x128xf32>
    %25 = math.rsqrt %24 : vector<1x128xf32>
    %26 = vector.broadcast %25 : vector<1x128xf32> to vector<128x128xf32>
    %27 = arith.mulf %17, %26 : vector<128x128xf32>
    %28 = vector.broadcast %1 : vector<1x128xf32> to vector<128x128xf32>
    %29 = arith.mulf %27, %28 : vector<128x128xf32>
    %30 = vector.broadcast %2 : vector<1x128xf32> to vector<128x128xf32>
    %31 = arith.addf %29, %30 : vector<128x128xf32>
    %cst_10 = arith.constant dense<0.000000e+00> : vector<128xf32>
    %32 = vector.multi_reduction <add>, %10, %cst_10 [0] : vector<128x128xf32> to vector<128xf32>
    %33 = vector.shape_cast %32 : vector<128xf32> to vector<1x128xf32>
    %cst_11 = arith.constant 7.812500e-03 : f32
    %34 = vector.broadcast %cst_11 : f32 to vector<1x128xf32>
    %35 = arith.mulf %33, %34 : vector<1x128xf32>
    %36 = vector.broadcast %35 : vector<1x128xf32> to vector<128x128xf32>
    %37 = arith.subf %10, %36 : vector<128x128xf32>
    %38 = arith.mulf %37, %37 : vector<128x128xf32>
    %cst_12 = arith.constant dense<0.000000e+00> : vector<128xf32>
    %39 = vector.multi_reduction <add>, %38, %cst_12 [0] : vector<128x128xf32> to vector<128xf32>
    %40 = vector.shape_cast %39 : vector<128xf32> to vector<1x128xf32>
    %cst_13 = arith.constant 7.812500e-03 : f32
    %41 = vector.broadcast %cst_13 : f32 to vector<1x128xf32>
    %42 = arith.mulf %40, %41 : vector<1x128xf32>
    %cst_14 = arith.constant 9.99999974E-6 : f32
    %43 = vector.broadcast %cst_14 : f32 to vector<1x128xf32>
    %44 = arith.addf %42, %43 : vector<1x128xf32>
    %45 = math.rsqrt %44 : vector<1x128xf32>
    %46 = vector.broadcast %45 : vector<1x128xf32> to vector<128x128xf32>
    %47 = arith.mulf %37, %46 : vector<128x128xf32>
    %48 = vector.broadcast %3 : vector<1x128xf32> to vector<128x128xf32>
    %49 = arith.mulf %47, %48 : vector<128x128xf32>
    %50 = vector.broadcast %4 : vector<1x128xf32> to vector<128x128xf32>
    %51 = arith.addf %49, %50 : vector<128x128xf32>
    %cst_15 = arith.constant 0.000000e+00 : f32
    %52 = vector.broadcast %cst_15 : f32 to vector<128x128xf32>
    %53 = arith.maximumf %51, %52 : vector<128x128xf32>
    %54 = vector.shape_cast %53 : vector<128x128xf32> to vector<2x8x8x128xf32>
    %55 = arith.truncf %54 : vector<2x8x8x128xf32> to vector<2x8x8x128xbf16>
    %cst_16 = arith.constant 0.000000e+00 : bf16
    %56 = vector.broadcast %cst_16 : bf16 to vector<2x1x8x128xbf16>
    %c0_17 = arith.constant 0 : index
    %c0_18 = arith.constant 0 : index
    %c0_19 = arith.constant 0 : index
    %c0_20 = arith.constant 0 : index
    %57 = vector.load %arg5[%c0_17, %c0_18, %c0_19, %c0_20] : memref<2x8x8x1152xbf16, #tpu.memory_space<vmem>>, vector<2x1x8x128xbf16>
    tpu.vector_store %arg5[%c0_17, %c0_18, %c0_19, %c0_20], %56 {strides = array<i32>} : memref<2x8x8x1152xbf16, #tpu.memory_space<vmem>>, vector<2x1x8x128xbf16>,
    %cst_21 = arith.constant 0.000000e+00 : bf16
    %58 = vector.broadcast %cst_21 : bf16 to vector<2x8x1x128xbf16>
    %c0_22 = arith.constant 0 : index
    %c0_23 = arith.constant 0 : index
    %c0_24 = arith.constant 0 : index
    %c0_25 = arith.constant 0 : index
    %59 = vector.load %arg5[%c0_22, %c0_23, %c0_24, %c0_25] : memref<2x8x8x1152xbf16, #tpu.memory_space<vmem>>, vector<2x8x1x128xbf16>
    tpu.vector_store %arg5[%c0_22, %c0_23, %c0_24, %c0_25], %58 {strides = array<i32>} : memref<2x8x8x1152xbf16, #tpu.memory_space<vmem>>, vector<2x8x1x128xbf16>,
    %60 = vector.extract_strided_slice %55 {offsets = [0, 0, 0, 0], sizes = [2, 7, 7, 128], strides = [1, 1, 1, 1]} : vector<2x8x8x128xbf16> to vector<2x7x7x128xbf16>
    %c0_26 = arith.constant 0 : index
    %c1 = arith.constant 1 : index
    %c1_27 = arith.constant 1 : index
    %c0_28 = arith.constant 0 : index
    %61 = vector.load %arg5[%c0_26, %c1, %c1_27, %c0_28] : memref<2x8x8x1152xbf16, #tpu.memory_space<vmem>>, vector<2x7x7x128xbf16>
    tpu.vector_store %arg5[%c0_26, %c1, %c1_27, %c0_28], %60 {strides = array<i32>} : memref<2x8x8x1152xbf16, #tpu.memory_space<vmem>>, vector<2x7x7x128xbf16>,
    %cst_29 = arith.constant 0.000000e+00 : bf16
    %62 = vector.broadcast %cst_29 : bf16 to vector<2x1x8x128xbf16>
    %c0_30 = arith.constant 0 : index
    %c0_31 = arith.constant 0 : index
    %c0_32 = arith.constant 0 : index
    %c128 = arith.constant 128 : index
    %63 = vector.load %arg5[%c0_30, %c0_31, %c0_32, %c128] : memref<2x8x8x1152xbf16, #tpu.memory_space<vmem>>, vector<2x1x8x128xbf16>
    tpu.vector_store %arg5[%c0_30, %c0_31, %c0_32, %c128], %62 {strides = array<i32>} : memref<2x8x8x1152xbf16, #tpu.memory_space<vmem>>, vector<2x1x8x128xbf16>,
    %64 = vector.extract_strided_slice %55 {offsets = [0, 0, 0, 0], sizes = [2, 7, 8, 128], strides = [1, 1, 1, 1]} : vector<2x8x8x128xbf16> to vector<2x7x8x128xbf16>
    %c0_33 = arith.constant 0 : index
    %c1_34 = arith.constant 1 : index
    %c0_35 = arith.constant 0 : index
    %c128_36 = arith.constant 128 : index
    %65 = vector.load %arg5[%c0_33, %c1_34, %c0_35, %c128_36] : memref<2x8x8x1152xbf16, #tpu.memory_space<vmem>>, vector<2x7x8x128xbf16>
    tpu.vector_store %arg5[%c0_33, %c1_34, %c0_35, %c128_36], %64 {strides = array<i32>} : memref<2x8x8x1152xbf16, #tpu.memory_space<vmem>>, vector<2x7x8x128xbf16>,
    %cst_37 = arith.constant 0.000000e+00 : bf16
    %66 = vector.broadcast %cst_37 : bf16 to vector<2x1x8x128xbf16>
    %c0_38 = arith.constant 0 : index
    %c0_39 = arith.constant 0 : index
    %c0_40 = arith.constant 0 : index
    %c256 = arith.constant 256 : index
    %67 = vector.load %arg5[%c0_38, %c0_39, %c0_40, %c256] : memref<2x8x8x1152xbf16, #tpu.memory_space<vmem>>, vector<2x1x8x128xbf16>
    tpu.vector_store %arg5[%c0_38, %c0_39, %c0_40, %c256], %66 {strides = array<i32>} : memref<2x8x8x1152xbf16, #tpu.memory_space<vmem>>, vector<2x1x8x128xbf16>,
    %cst_41 = arith.constant 0.000000e+00 : bf16
    %68 = vector.broadcast %cst_41 : bf16 to vector<2x8x1x128xbf16>
    %c0_42 = arith.constant 0 : index
    %c0_43 = arith.constant 0 : index
    %c7 = arith.constant 7 : index
    %c256_44 = arith.constant 256 : index
    %69 = vector.load %arg5[%c0_42, %c0_43, %c7, %c256_44] : memref<2x8x8x1152xbf16, #tpu.memory_space<vmem>>, vector<2x8x1x128xbf16>
    tpu.vector_store %arg5[%c0_42, %c0_43, %c7, %c256_44], %68 {strides = array<i32>} : memref<2x8x8x1152xbf16, #tpu.memory_space<vmem>>, vector<2x8x1x128xbf16>,
    %70 = vector.extract_strided_slice %55 {offsets = [0, 0, 1, 0], sizes = [2, 7, 7, 128], strides = [1, 1, 1, 1]} : vector<2x8x8x128xbf16> to vector<2x7x7x128xbf16>
    %c0_45 = arith.constant 0 : index
    %c1_46 = arith.constant 1 : index
    %c0_47 = arith.constant 0 : index
    %c256_48 = arith.constant 256 : index
    %71 = vector.load %arg5[%c0_45, %c1_46, %c0_47, %c256_48] : memref<2x8x8x1152xbf16, #tpu.memory_space<vmem>>, vector<2x7x7x128xbf16>
    tpu.vector_store %arg5[%c0_45, %c1_46, %c0_47, %c256_48], %70 {strides = array<i32>} : memref<2x8x8x1152xbf16, #tpu.memory_space<vmem>>, vector<2x7x7x128xbf16>,
    %cst_49 = arith.constant 0.000000e+00 : bf16
    %72 = vector.broadcast %cst_49 : bf16 to vector<2x8x1x128xbf16>
    %c0_50 = arith.constant 0 : index
    %c0_51 = arith.constant 0 : index
    %c0_52 = arith.constant 0 : index
    %c384 = arith.constant 384 : index
    %73 = vector.load %arg5[%c0_50, %c0_51, %c0_52, %c384] : memref<2x8x8x1152xbf16, #tpu.memory_space<vmem>>, vector<2x8x1x128xbf16>
    tpu.vector_store %arg5[%c0_50, %c0_51, %c0_52, %c384], %72 {strides = array<i32>} : memref<2x8x8x1152xbf16, #tpu.memory_space<vmem>>, vector<2x8x1x128xbf16>,
    %74 = vector.extract_strided_slice %55 {offsets = [0, 0, 0, 0], sizes = [2, 8, 7, 128], strides = [1, 1, 1, 1]} : vector<2x8x8x128xbf16> to vector<2x8x7x128xbf16>
    %c0_53 = arith.constant 0 : index
    %c0_54 = arith.constant 0 : index
    %c1_55 = arith.constant 1 : index
    %c384_56 = arith.constant 384 : index
    %75 = vector.load %arg5[%c0_53, %c0_54, %c1_55, %c384_56] : memref<2x8x8x1152xbf16, #tpu.memory_space<vmem>>, vector<2x8x7x128xbf16>
    tpu.vector_store %arg5[%c0_53, %c0_54, %c1_55, %c384_56], %74 {strides = array<i32>} : memref<2x8x8x1152xbf16, #tpu.memory_space<vmem>>, vector<2x8x7x128xbf16>,
    %c0_57 = arith.constant 0 : index
    %c0_58 = arith.constant 0 : index
    %c0_59 = arith.constant 0 : index
    %c512 = arith.constant 512 : index
    %76 = vector.load %arg5[%c0_57, %c0_58, %c0_59, %c512] : memref<2x8x8x1152xbf16, #tpu.memory_space<vmem>>, vector<2x8x8x128xbf16>
    tpu.vector_store %arg5[%c0_57, %c0_58, %c0_59, %c512], %55 {strides = array<i32>} : memref<2x8x8x1152xbf16, #tpu.memory_space<vmem>>, vector<2x8x8x128xbf16>,
    %cst_60 = arith.constant 0.000000e+00 : bf16
    %77 = vector.broadcast %cst_60 : bf16 to vector<2x8x1x128xbf16>
    %c0_61 = arith.constant 0 : index
    %c0_62 = arith.constant 0 : index
    %c7_63 = arith.constant 7 : index
    %c640 = arith.constant 640 : index
    %78 = vector.load %arg5[%c0_61, %c0_62, %c7_63, %c640] : memref<2x8x8x1152xbf16, #tpu.memory_space<vmem>>, vector<2x8x1x128xbf16>
    tpu.vector_store %arg5[%c0_61, %c0_62, %c7_63, %c640], %77 {strides = array<i32>} : memref<2x8x8x1152xbf16, #tpu.memory_space<vmem>>, vector<2x8x1x128xbf16>,
    %79 = vector.extract_strided_slice %55 {offsets = [0, 0, 1, 0], sizes = [2, 8, 7, 128], strides = [1, 1, 1, 1]} : vector<2x8x8x128xbf16> to vector<2x8x7x128xbf16>
    %c0_64 = arith.constant 0 : index
    %c0_65 = arith.constant 0 : index
    %c0_66 = arith.constant 0 : index
    %c640_67 = arith.constant 640 : index
    %80 = vector.load %arg5[%c0_64, %c0_65, %c0_66, %c640_67] : memref<2x8x8x1152xbf16, #tpu.memory_space<vmem>>, vector<2x8x7x128xbf16>
    tpu.vector_store %arg5[%c0_64, %c0_65, %c0_66, %c640_67], %79 {strides = array<i32>} : memref<2x8x8x1152xbf16, #tpu.memory_space<vmem>>, vector<2x8x7x128xbf16>,
    %cst_68 = arith.constant 0.000000e+00 : bf16
    %81 = vector.broadcast %cst_68 : bf16 to vector<2x1x8x128xbf16>
    %c0_69 = arith.constant 0 : index
    %c7_70 = arith.constant 7 : index
    %c0_71 = arith.constant 0 : index
    %c768 = arith.constant 768 : index
    %82 = vector.load %arg5[%c0_69, %c7_70, %c0_71, %c768] : memref<2x8x8x1152xbf16, #tpu.memory_space<vmem>>, vector<2x1x8x128xbf16>
    tpu.vector_store %arg5[%c0_69, %c7_70, %c0_71, %c768], %81 {strides = array<i32>} : memref<2x8x8x1152xbf16, #tpu.memory_space<vmem>>, vector<2x1x8x128xbf16>,
    %cst_72 = arith.constant 0.000000e+00 : bf16
    %83 = vector.broadcast %cst_72 : bf16 to vector<2x8x1x128xbf16>
    %c0_73 = arith.constant 0 : index
    %c0_74 = arith.constant 0 : index
    %c0_75 = arith.constant 0 : index
    %c768_76 = arith.constant 768 : index
    %84 = vector.load %arg5[%c0_73, %c0_74, %c0_75, %c768_76] : memref<2x8x8x1152xbf16, #tpu.memory_space<vmem>>, vector<2x8x1x128xbf16>
    tpu.vector_store %arg5[%c0_73, %c0_74, %c0_75, %c768_76], %83 {strides = array<i32>} : memref<2x8x8x1152xbf16, #tpu.memory_space<vmem>>, vector<2x8x1x128xbf16>,
    %85 = vector.extract_strided_slice %55 {offsets = [0, 1, 0, 0], sizes = [2, 7, 7, 128], strides = [1, 1, 1, 1]} : vector<2x8x8x128xbf16> to vector<2x7x7x128xbf16>
    %c0_77 = arith.constant 0 : index
    %c0_78 = arith.constant 0 : index
    %c1_79 = arith.constant 1 : index
    %c768_80 = arith.constant 768 : index
    %86 = vector.load %arg5[%c0_77, %c0_78, %c1_79, %c768_80] : memref<2x8x8x1152xbf16, #tpu.memory_space<vmem>>, vector<2x7x7x128xbf16>
    tpu.vector_store %arg5[%c0_77, %c0_78, %c1_79, %c768_80], %85 {strides = array<i32>} : memref<2x8x8x1152xbf16, #tpu.memory_space<vmem>>, vector<2x7x7x128xbf16>,
    %cst_81 = arith.constant 0.000000e+00 : bf16
    %87 = vector.broadcast %cst_81 : bf16 to vector<2x1x8x128xbf16>
    %c0_82 = arith.constant 0 : index
    %c7_83 = arith.constant 7 : index
    %c0_84 = arith.constant 0 : index
    %c896 = arith.constant 896 : index
    %88 = vector.load %arg5[%c0_82, %c7_83, %c0_84, %c896] : memref<2x8x8x1152xbf16, #tpu.memory_space<vmem>>, vector<2x1x8x128xbf16>
    tpu.vector_store %arg5[%c0_82, %c7_83, %c0_84, %c896], %87 {strides = array<i32>} : memref<2x8x8x1152xbf16, #tpu.memory_space<vmem>>, vector<2x1x8x128xbf16>,
    %89 = vector.extract_strided_slice %55 {offsets = [0, 1, 0, 0], sizes = [2, 7, 8, 128], strides = [1, 1, 1, 1]} : vector<2x8x8x128xbf16> to vector<2x7x8x128xbf16>
    %c0_85 = arith.constant 0 : index
    %c0_86 = arith.constant 0 : index
    %c0_87 = arith.constant 0 : index
    %c896_88 = arith.constant 896 : index
    %90 = vector.load %arg5[%c0_85, %c0_86, %c0_87, %c896_88] : memref<2x8x8x1152xbf16, #tpu.memory_space<vmem>>, vector<2x7x8x128xbf16>
    tpu.vector_store %arg5[%c0_85, %c0_86, %c0_87, %c896_88], %89 {strides = array<i32>} : memref<2x8x8x1152xbf16, #tpu.memory_space<vmem>>, vector<2x7x8x128xbf16>,
    %cst_89 = arith.constant 0.000000e+00 : bf16
    %91 = vector.broadcast %cst_89 : bf16 to vector<2x1x8x128xbf16>
    %c0_90 = arith.constant 0 : index
    %c7_91 = arith.constant 7 : index
    %c0_92 = arith.constant 0 : index
    %c1024 = arith.constant 1024 : index
    %92 = vector.load %arg5[%c0_90, %c7_91, %c0_92, %c1024] : memref<2x8x8x1152xbf16, #tpu.memory_space<vmem>>, vector<2x1x8x128xbf16>
    tpu.vector_store %arg5[%c0_90, %c7_91, %c0_92, %c1024], %91 {strides = array<i32>} : memref<2x8x8x1152xbf16, #tpu.memory_space<vmem>>, vector<2x1x8x128xbf16>,
    %cst_93 = arith.constant 0.000000e+00 : bf16
    %93 = vector.broadcast %cst_93 : bf16 to vector<2x8x1x128xbf16>
    %c0_94 = arith.constant 0 : index
    %c0_95 = arith.constant 0 : index
    %c7_96 = arith.constant 7 : index
    %c1024_97 = arith.constant 1024 : index
    %94 = vector.load %arg5[%c0_94, %c0_95, %c7_96, %c1024_97] : memref<2x8x8x1152xbf16, #tpu.memory_space<vmem>>, vector<2x8x1x128xbf16>
    tpu.vector_store %arg5[%c0_94, %c0_95, %c7_96, %c1024_97], %93 {strides = array<i32>} : memref<2x8x8x1152xbf16, #tpu.memory_space<vmem>>, vector<2x8x1x128xbf16>,
    %95 = vector.extract_strided_slice %55 {offsets = [0, 1, 1, 0], sizes = [2, 7, 7, 128], strides = [1, 1, 1, 1]} : vector<2x8x8x128xbf16> to vector<2x7x7x128xbf16>
    %c0_98 = arith.constant 0 : index
    %c0_99 = arith.constant 0 : index
    %c0_100 = arith.constant 0 : index
    %c1024_101 = arith.constant 1024 : index
    %96 = vector.load %arg5[%c0_98, %c0_99, %c0_100, %c1024_101] : memref<2x8x8x1152xbf16, #tpu.memory_space<vmem>>, vector<2x7x7x128xbf16>
    tpu.vector_store %arg5[%c0_98, %c0_99, %c0_100, %c1024_101], %95 {strides = array<i32>} : memref<2x8x8x1152xbf16, #tpu.memory_space<vmem>>, vector<2x7x7x128xbf16>,
    %c0_102 = arith.constant 0 : index
    %c0_103 = arith.constant 0 : index
    %c0_104 = arith.constant 0 : index
    %c0_105 = arith.constant 0 : index
    %97 = vector.load %arg5[%c0_102, %c0_103, %c0_104, %c0_105] : memref<2x8x8x1152xbf16, #tpu.memory_space<vmem>>, vector<2x8x8x1152xbf16>
    %98 = vector.shape_cast %97 : vector<2x8x8x1152xbf16> to vector<128x1152xbf16>
    %c0_106 = arith.constant 0 : index
    %c0_107 = arith.constant 0 : index
    %99 = vector.load %arg2[%c0_106, %c0_107] : memref<1152x128xbf16, #tpu.memory_space<vmem>>, vector<1152x128xbf16>
    %cst_108 = arith.constant dense<0.000000e+00> : vector<128x128xf32>
    %100 = tpu.matmul %98, %99, %cst_108 {dimension_numbers = #tpu.dot_dimension_numbers<[1], [0], [0], [1], [0, 0, 1, 1], [], []>} : vector<128x1152xbf16>, vector<1152x128xbf16>, vector<128x128xf32> -> vector<128x128xf32>
    %cst_109 = arith.constant dense<0.000000e+00> : vector<128xf32>
    %101 = vector.multi_reduction <add>, %100, %cst_109 [0] : vector<128x128xf32> to vector<128xf32>
    %102 = vector.shape_cast %101 : vector<128xf32> to vector<1x128xf32>
    %cst_110 = arith.constant 7.812500e-03 : f32
    %103 = vector.broadcast %cst_110 : f32 to vector<1x128xf32>
    %104 = arith.mulf %102, %103 : vector<1x128xf32>
    %105 = vector.broadcast %104 : vector<1x128xf32> to vector<128x128xf32>
    %106 = arith.subf %100, %105 : vector<128x128xf32>
    %107 = arith.mulf %106, %106 : vector<128x128xf32>
    %cst_111 = arith.constant dense<0.000000e+00> : vector<128xf32>
    %108 = vector.multi_reduction <add>, %107, %cst_111 [0] : vector<128x128xf32> to vector<128xf32>
    %109 = vector.shape_cast %108 : vector<128xf32> to vector<1x128xf32>
    %cst_112 = arith.constant 7.812500e-03 : f32
    %110 = vector.broadcast %cst_112 : f32 to vector<1x128xf32>
    %111 = arith.mulf %109, %110 : vector<1x128xf32>
    %cst_113 = arith.constant 9.99999974E-6 : f32
    %112 = vector.broadcast %cst_113 : f32 to vector<1x128xf32>
    %113 = arith.addf %111, %112 : vector<1x128xf32>
    %114 = math.rsqrt %113 : vector<1x128xf32>
    %115 = vector.broadcast %114 : vector<1x128xf32> to vector<128x128xf32>
    %116 = arith.mulf %106, %115 : vector<128x128xf32>
    %117 = vector.broadcast %5 : vector<1x128xf32> to vector<128x128xf32>
    %118 = arith.mulf %116, %117 : vector<128x128xf32>
    %119 = vector.broadcast %6 : vector<1x128xf32> to vector<128x128xf32>
    %120 = arith.addf %118, %119 : vector<128x128xf32>
    %121 = arith.addf %31, %120 : vector<128x128xf32>
    %cst_114 = arith.constant 0.000000e+00 : f32
    %122 = vector.broadcast %cst_114 : f32 to vector<128x128xf32>
    %123 = arith.maximumf %121, %122 : vector<128x128xf32>
    %124 = vector.shape_cast %123 : vector<128x128xf32> to vector<2x8x8x128xf32>
    %c0_115 = arith.constant 0 : index
    %c0_116 = arith.constant 0 : index
    %c0_117 = arith.constant 0 : index
    %c0_118 = arith.constant 0 : index
    %125 = vector.load %arg4[%c0_115, %c0_116, %c0_117, %c0_118] : memref<2x8x8x128xf32, #tpu.memory_space<vmem>>, vector<2x8x8x128xf32>
    tpu.vector_store %arg4[%c0_115, %c0_116, %c0_117, %c0_118], %124 {strides = array<i32>} : memref<2x8x8x128xf32, #tpu.memory_space<vmem>>, vector<2x8x8x128xf32>,
    return
  }
}

</mosaic_0001>

<llo_original>
// kernel: basic_block_2_forward.1
$region0: #{basic_block_2_forward.1}
  #allocation0 [shape = 'u32[]', space=smem, size = 0x4, offset = 0x4, fixed_abs, tag = 'smem constant byte address 0x4 - core index']
  #allocation1 [shape = 'u32[144,128]{1,0:T(1,128)}', space=vmem, size = 0x12000, scoped, tag = 'internal scratch']
  #allocation2 [shape = 'bf16[2,8,8,1152]{3,2,1,0:T(8,128)(2,1)}', space=vmem, size = 0x48000, scoped, tag = 'scratch operand']
  %s0 = inlined_call_operand.vmem [shape: bf16[128,128], index: 0, kind: input, shape index: {}]
  %s1 = inlined_call_operand.vmem [shape: bf16[128,256], index: 1, kind: input, shape index: {}]
  %s2 = inlined_call_operand.vmem [shape: bf16[1152,128], index: 2, kind: input, shape index: {}]
  %s3 = inlined_call_operand.vmem [shape: f32[6,128], index: 3, kind: input, shape index: {}]
  %s4 = inlined_call_operand.vmem [shape: f32[2,8,8,128], index: 4, kind: output, shape index: {}]
  %s5 = sld [smem:[#allocation0]]
  $region26: #{basic_block_2_forward.1} parent=0
    _
  %s7 = ssub.s32 1, %s5
  %s8 = scalar_select 0, %s7, %s5
  // Predicated region
  $region2: #{basic_block_2_forward.1} parent=0 // pred_check
    _
  $region3: #{basic_block_2_forward.1} parent=0 // pred_check_branch
    %10 = sbr.rel (0) target = $region5
  $region4: #{basic_block_2_forward.1} parent=0 // pred_region
    _
  $region5: #{basic_block_2_forward.1} parent=0 // pred_fallthru
    _
  // Predicated region
  $region6: #{basic_block_2_forward.1} parent=0 // pred_check
    _
  $region7: #{basic_block_2_forward.1} parent=0 // pred_check_branch
    %12 = sbr.rel (0) target = $region9
  $region8: #{basic_block_2_forward.1} parent=0 // pred_region
    _
  $region9: #{basic_block_2_forward.1} parent=0 // pred_fallthru
    _
  // Predicated region
  $region10: #{basic_block_2_forward.1} parent=0 // pred_check
    _
  $region11: #{basic_block_2_forward.1} parent=0 // pred_check_branch
    %14 = sbr.rel (0) target = $region13
  $region12: #{basic_block_2_forward.1} parent=0 // pred_region
    _
  $region13: #{basic_block_2_forward.1} parent=0 // pred_fallthru
    _
  // Predicated region
  $region14: #{basic_block_2_forward.1} parent=0 // pred_check
    _
  $region15: #{basic_block_2_forward.1} parent=0 // pred_check_branch
    %16 = sbr.rel (0) target = $region17
  $region16: #{basic_block_2_forward.1} parent=0 // pred_region
    _
  $region17: #{basic_block_2_forward.1} parent=0 // pred_fallthru
    _
  %v18 = vld [vmem:[%s3] sm:$0x3f]
  %v19 = vld [vmem:[%s0] sm:$0xf]
  %v20 = vld [vmem:[%s0 + $0x4] sm:$0xf]
  %v21 = vld [vmem:[%s0 + $0x8] sm:$0xf]
  %v22 = vld [vmem:[%s0 + $0xc] sm:$0xf]
  %v23 = vld [vmem:[%s0 + $0x10] sm:$0xf]
  %v24 = vld [vmem:[%s0 + $0x14] sm:$0xf]
  %v25 = vld [vmem:[%s0 + $0x18] sm:$0xf]
  %v26 = vld [vmem:[%s0 + $0x1c] sm:$0xf]
  %v27 = vld [vmem:[%s0 + $0x20] sm:$0xf]
  %v28 = vld [vmem:[%s0 + $0x24] sm:$0xf]
  %v29 = vld [vmem:[%s0 + $0x28] sm:$0xf]
  %v30 = vld [vmem:[%s0 + $0x2c] sm:$0xf]
  %v31 = vld [vmem:[%s0 + $0x30] sm:$0xf]
  %v32 = vld [vmem:[%s0 + $0x34] sm:$0xf]
  %v33 = vld [vmem:[%s0 + $0x38] sm:$0xf]
  %v34 = vld [vmem:[%s0 + $0x3c] sm:$0xf]
  %v35 = vld [vmem:[%s1] sm:$0xff]
  %v36 = vld [vmem:[%s1 + $0x8] sm:$0xff]
  %v37 = vld [vmem:[%s1 + $0x10] sm:$0xff]
  %v38 = vld [vmem:[%s1 + $0x18] sm:$0xff]
  %v39 = vld [vmem:[%s1 + $0x20] sm:$0xff]
  %v40 = vld [vmem:[%s1 + $0x28] sm:$0xff]
  %v41 = vld [vmem:[%s1 + $0x30] sm:$0xff]
  %v42 = vld [vmem:[%s1 + $0x38] sm:$0xff]
  %v43 = vld [vmem:[%s1 + $0x40] sm:$0xff]
  %v44 = vld [vmem:[%s1 + $0x48] sm:$0xff]
  %v45 = vld [vmem:[%s1 + $0x50] sm:$0xff]
  %v46 = vld [vmem:[%s1 + $0x58] sm:$0xff]
  %v47 = vld [vmem:[%s1 + $0x60] sm:$0xff]
  %v48 = vld [vmem:[%s1 + $0x68] sm:$0xff]
  %v49 = vld [vmem:[%s1 + $0x70] sm:$0xff]
  %v50 = vld [vmem:[%s1 + $0x78] sm:$0xff]
  %v67 = vunpack.c.l.b16 %v19
  %v68 = vunpack.c.l.b16 %v20
  %v69 = vunpack.c.l.b16 %v21
  %v70 = vunpack.c.l.b16 %v22
  %v71 = vunpack.c.l.b16 %v23
  %v72 = vunpack.c.l.b16 %v24
  %v73 = vunpack.c.l.b16 %v25
  %v74 = vunpack.c.l.b16 %v26
  %v75 = vunpack.c.l.b16 %v27
  %v76 = vunpack.c.l.b16 %v28
  %v77 = vunpack.c.l.b16 %v29
  %v78 = vunpack.c.l.b16 %v30
  %v79 = vunpack.c.l.b16 %v31
  %v80 = vunpack.c.l.b16 %v32
  %v81 = vunpack.c.l.b16 %v33
  %v82 = vunpack.c.l.b16 %v34
  %v83 = vpack.c.b16 %v68, %v67
  %v84 = vpack.c.b16 %v70, %v69
  %v85 = vpack.c.b16 %v72, %v71
  %v86 = vpack.c.b16 %v74, %v73
  %v87 = vpack.c.b16 %v76, %v75
  %v88 = vpack.c.b16 %v78, %v77
  %v89 = vpack.c.b16 %v80, %v79
  %v90 = vpack.c.b16 %v82, %v81
  %v115 = vunpack.c.l.b16 %v35
  %v116 = vunpack.c.h.b16 %v35
  %v117 = vunpack.c.l.b16 %v36
  %v118 = vunpack.c.h.b16 %v36
  %v119 = vunpack.c.l.b16 %v37
  %v120 = vunpack.c.h.b16 %v37
  %v121 = vunpack.c.l.b16 %v38
  %v122 = vunpack.c.h.b16 %v38
  %v123 = vunpack.c.l.b16 %v39
  %v124 = vunpack.c.h.b16 %v39
  %v125 = vunpack.c.l.b16 %v40
  %v126 = vunpack.c.h.b16 %v40
  %v127 = vunpack.c.l.b16 %v41
  %v128 = vunpack.c.h.b16 %v41
  %v129 = vunpack.c.l.b16 %v42
  %v130 = vunpack.c.h.b16 %v42
  %v131 = vunpack.c.l.b16 %v43
  %v132 = vunpack.c.h.b16 %v43
  %v133 = vunpack.c.l.b16 %v44
  %v134 = vunpack.c.h.b16 %v44
  %v135 = vunpack.c.l.b16 %v45
  %v136 = vunpack.c.h.b16 %v45
  %v137 = vunpack.c.l.b16 %v46
  %v138 = vunpack.c.h.b16 %v46
  %v139 = vunpack.c.l.b16 %v47
  %v140 = vunpack.c.h.b16 %v47
  %v141 = vunpack.c.l.b16 %v48
  %v142 = vunpack.c.h.b16 %v48
  %v143 = vunpack.c.l.b16 %v49
  %v144 = vunpack.c.h.b16 %v49
  %v145 = vunpack.c.l.b16 %v50
  %v146 = vunpack.c.h.b16 %v50
  %v147 = vpack.c.b16 %v117, %v115
  %v148 = vpack.c.b16 %v118, %v116
  %v149 = vpack.c.b16 %v121, %v119
  %v150 = vpack.c.b16 %v122, %v120
  %v151 = vpack.c.b16 %v125, %v123
  %v152 = vpack.c.b16 %v126, %v124
  %v153 = vpack.c.b16 %v129, %v127
  %v154 = vpack.c.b16 %v130, %v128
  %v155 = vpack.c.b16 %v133, %v131
  %v156 = vpack.c.b16 %v134, %v132
  %v157 = vpack.c.b16 %v137, %v135
  %v158 = vpack.c.b16 %v138, %v136
  %v159 = vpack.c.b16 %v141, %v139
  %v160 = vpack.c.b16 %v142, %v140
  %v161 = vpack.c.b16 %v145, %v143
  %v162 = vpack.c.b16 %v146, %v144
  %179 = vmatprep.subr.bf16.mxu0 %v148
  %180 = vmatpush1.bf16.msra.mxu0 %v147
  %181 = vmatprep.subr.bf16.mxu0 %v150
  %182 = vmatpush1.bf16.msra.mxu0 %v149
  %183 = vmatprep.subr.bf16.mxu0 %v152
  %184 = vmatpush1.bf16.msra.mxu0 %v151
  %185 = vmatprep.subr.bf16.mxu0 %v154
  %186 = vmatpush1.bf16.msra.mxu0 %v153
  %187 = vmatprep.subr.bf16.mxu0 %v156
  %188 = vmatpush1.bf16.msra.mxu0 %v155
  %189 = vmatprep.subr.bf16.mxu0 %v158
  %190 = vmatpush1.bf16.msra.mxu0 %v157
  %191 = vmatprep.subr.bf16.mxu0 %v160
  %192 = vmatpush1.bf16.msra.mxu0 %v159
  %193 = vmatprep.subr.bf16.mxu0 %v162
  %194 = vmatpush1.bf16.msra.mxu0 %v161
  %195 = vmatprep.subr.bf16.mxu0 0
  %196 = vmatpush1.bf16.msra.mxu0 0
  %197 = vmatprep.subr.bf16.mxu0 0
  %198 = vmatpush1.bf16.msra.mxu0 0
  %199 = vmatprep.subr.bf16.mxu0 0
  %200 = vmatpush1.bf16.msra.mxu0 0
  %201 = vmatprep.subr.bf16.mxu0 0
  %202 = vmatpush1.bf16.msra.mxu0 0
  %203 = vmatprep.subr.bf16.mxu0 0
  %204 = vmatpush1.bf16.msra.mxu0 0
  %205 = vmatprep.subr.bf16.mxu0 0
  %206 = vmatpush1.bf16.msra.mxu0 0
  %207 = vmatprep.subr.bf16.mxu0 0
  %208 = vmatpush1.bf16.msra.mxu0 0
  %209 = vmatprep.subr.bf16.mxu0 0
  %210 = vmatpush1.bf16.msra.mxu0 0
  %211 = vmatprep.mubr.bf16.mxu0 0
  %212 = vmatmul.mubr.bf16.gmra.mrb[0].mxu0 %v83
  %v213 = vpop.f32.mrb[0].mxu0
  %v214 = vadd.f32 0.0, %v213
  %v215 = vpop.f32.mrb[0].mxu0
  %v216 = vadd.f32 0.0, %v215
  %v217 = vpop.f32.mrb[0].mxu0
  %v218 = vadd.f32 0.0, %v217
  %v219 = vpop.f32.mrb[0].mxu0
  %v220 = vadd.f32 0.0, %v219
  %221 = vmatprep.mubr.bf16.mxu0 0
  %222 = vmatmul.mubr.bf16.gmra.mrb[0].mxu0 %v84
  %v223 = vpop.f32.mrb[0].mxu0
  %v224 = vadd.f32 0.0, %v223
  %v225 = vpop.f32.mrb[0].mxu0
  %v226 = vadd.f32 0.0, %v225
  %v227 = vpop.f32.mrb[0].mxu0
  %v228 = vadd.f32 0.0, %v227
  %v229 = vpop.f32.mrb[0].mxu0
  %v230 = vadd.f32 0.0, %v229
  %231 = vmatprep.mubr.bf16.mxu0 0
  %232 = vmatmul.mubr.bf16.gmra.mrb[0].mxu0 %v85
  %v233 = vpop.f32.mrb[0].mxu0
  %v234 = vadd.f32 0.0, %v233
  %v235 = vpop.f32.mrb[0].mxu0
  %v236 = vadd.f32 0.0, %v235
  %v237 = vpop.f32.mrb[0].mxu0
  %v238 = vadd.f32 0.0, %v237
  %v239 = vpop.f32.mrb[0].mxu0
  %v240 = vadd.f32 0.0, %v239
  %241 = vmatprep.mubr.bf16.mxu0 0
  %242 = vmatmul.mubr.bf16.gmra.mrb[0].mxu0 %v86
  %v243 = vpop.f32.mrb[0].mxu0
  %v244 = vadd.f32 0.0, %v243
  %v245 = vpop.f32.mrb[0].mxu0
  %v246 = vadd.f32 0.0, %v245
  %v247 = vpop.f32.mrb[0].mxu0
  %v248 = vadd.f32 0.0, %v247
  %v249 = vpop.f32.mrb[0].mxu0
  %v250 = vadd.f32 0.0, %v249
  %251 = vmatprep.mubr.bf16.mxu0 0
  %252 = vmatmul.mubr.bf16.gmra.mrb[0].mxu0 %v87
  %v253 = vpop.f32.mrb[0].mxu0
  %v254 = vadd.f32 0.0, %v253
  %v255 = vpop.f32.mrb[0].mxu0
  %v256 = vadd.f32 0.0, %v255
  %v257 = vpop.f32.mrb[0].mxu0
  %v258 = vadd.f32 0.0, %v257
  %v259 = vpop.f32.mrb[0].mxu0
  %v260 = vadd.f32 0.0, %v259
  %261 = vmatprep.mubr.bf16.mxu0 0
  %262 = vmatmul.mubr.bf16.gmra.mrb[0].mxu0 %v88
  %v263 = vpop.f32.mrb[0].mxu0
  %v264 = vadd.f32 0.0, %v263
  %v265 = vpop.f32.mrb[0].mxu0
  %v266 = vadd.f32 0.0, %v265
  %v267 = vpop.f32.mrb[0].mxu0
  %v268 = vadd.f32 0.0, %v267
  %v269 = vpop.f32.mrb[0].mxu0
  %v270 = vadd.f32 0.0, %v269
  %271 = vmatprep.mubr.bf16.mxu0 0
  %272 = vmatmul.mubr.bf16.gmra.mrb[0].mxu0 %v89
  %v273 = vpop.f32.mrb[0].mxu0
  %v274 = vadd.f32 0.0, %v273
  %v275 = vpop.f32.mrb[0].mxu0
  %v276 = vadd.f32 0.0, %v275
  %v277 = vpop.f32.mrb[0].mxu0
  %v278 = vadd.f32 0.0, %v277
  %v279 = vpop.f32.mrb[0].mxu0
  %v280 = vadd.f32 0.0, %v279
  %281 = vmatprep.mubr.bf16.mxu0 0
  %282 = vmatmul.mubr.bf16.gmra.mrb[0].mxu0 %v90
  %v283 = vpop.f32.mrb[0].mxu0
  %v284 = vadd.f32 0.0, %v283
  %v285 = vpop.f32.mrb[0].mxu0
  %v286 = vadd.f32 0.0, %v285
  %v287 = vpop.f32.mrb[0].mxu0
  %v288 = vadd.f32 0.0, %v287
  %v289 = vpop.f32.mrb[0].mxu0
  %v290 = vadd.f32 0.0, %v289
  %291 = vdwg.mxu0
  %v292 = vadd.f32 %v216, %v220
  %v293 = vadd.f32 %v292, %v226
  %v294 = vadd.f32 %v293, %v230
  %v295 = vadd.f32 %v294, %v236
  %v296 = vadd.f32 %v295, %v240
  %v297 = vadd.f32 %v296, %v246
  %v298 = vadd.f32 %v297, %v250
  %v299 = vadd.f32 %v298, %v256
  %v300 = vadd.f32 %v299, %v260
  %v301 = vadd.f32 %v300, %v266
  %v302 = vadd.f32 %v301, %v270
  %v303 = vadd.f32 %v302, %v276
  %v304 = vadd.f32 %v303, %v280
  %v305 = vadd.f32 %v304, %v286
  %v306 = vadd.f32 %v305, %v290
  %v307 = vrot.slane %v306, 4
  %v308 = vadd.f32 %v306, %v307
  %v309 = vrot.slane %v308, 2
  %v310 = vadd.f32 %v308, %v309
  %v311 = vrot.slane %v310, 1
  %v312 = vadd.f32 %v310, %v311
  %v313 = vmul.f32 %v312, 0.0078125
  %v314 = vsub.f32 %v216, %v313
  %v315 = vsub.f32 %v220, %v313
  %v316 = vsub.f32 %v226, %v313
  %v317 = vsub.f32 %v230, %v313
  %v318 = vsub.f32 %v236, %v313
  %v319 = vsub.f32 %v240, %v313
  %v320 = vsub.f32 %v246, %v313
  %v321 = vsub.f32 %v250, %v313
  %v322 = vsub.f32 %v256, %v313
  %v323 = vsub.f32 %v260, %v313
  %v324 = vsub.f32 %v266, %v313
  %v325 = vsub.f32 %v270, %v313
  %v326 = vsub.f32 %v276, %v313
  %v327 = vsub.f32 %v280, %v313
  %v328 = vsub.f32 %v286, %v313
  %v329 = vsub.f32 %v290, %v313
  %v330 = vmul.f32 %v314, %v314
  %v331 = vmul.f32 %v315, %v315
  %v332 = vmul.f32 %v316, %v316
  %v333 = vmul.f32 %v317, %v317
  %v334 = vmul.f32 %v318, %v318
  %v335 = vmul.f32 %v319, %v319
  %v336 = vmul.f32 %v320, %v320
  %v337 = vmul.f32 %v321, %v321
  %v338 = vmul.f32 %v322, %v322
  %v339 = vmul.f32 %v323, %v323
  %v340 = vmul.f32 %v324, %v324
  %v341 = vmul.f32 %v325, %v325
  %v342 = vmul.f32 %v326, %v326
  %v343 = vmul.f32 %v327, %v327
  %v344 = vmul.f32 %v328, %v328
  %v345 = vmul.f32 %v329, %v329
  %v346 = vadd.f32 %v330, %v331
  %v347 = vadd.f32 %v346, %v332
  %v348 = vadd.f32 %v347, %v333
  %v349 = vadd.f32 %v348, %v334
  %v350 = vadd.f32 %v349, %v335
  %v351 = vadd.f32 %v350, %v336
  %v352 = vadd.f32 %v351, %v337
  %v353 = vadd.f32 %v352, %v338
  %v354 = vadd.f32 %v353, %v339
  %v355 = vadd.f32 %v354, %v340
  %v356 = vadd.f32 %v355, %v341
  %v357 = vadd.f32 %v356, %v342
  %v358 = vadd.f32 %v357, %v343
  %v359 = vadd.f32 %v358, %v344
  %v360 = vadd.f32 %v359, %v345
  %v361 = vrot.slane %v360, 4
  %v362 = vadd.f32 %v360, %v361
  %v363 = vrot.slane %v362, 2
  %v364 = vadd.f32 %v362, %v363
  %v365 = vrot.slane %v364, 1
  %v366 = vadd.f32 %v364, %v365
  %v367 = vmul.f32 %v366, 0.0078125
  %v368 = vadd.f32 %v367, 1e-05
  %v369 = vrsqrt.pop %v368
  %v370 = vmul.f32 %v314, %v369
  %v371 = vmul.f32 %v315, %v369
  %v372 = vmul.f32 %v316, %v369
  %v373 = vmul.f32 %v317, %v369
  %v374 = vmul.f32 %v318, %v369
  %v375 = vmul.f32 %v319, %v369
  %v376 = vmul.f32 %v320, %v369
  %v377 = vmul.f32 %v321, %v369
  %v378 = vmul.f32 %v322, %v369
  %v379 = vmul.f32 %v323, %v369
  %v380 = vmul.f32 %v324, %v369
  %v381 = vmul.f32 %v325, %v369
  %v382 = vmul.f32 %v326, %v369
  %v383 = vmul.f32 %v327, %v369
  %v384 = vmul.f32 %v328, %v369
  %v385 = vmul.f32 %v329, %v369
  %v386 = vlaneseq
  %v387 = vshrl.u32 %v386, 7
  %v388 = vsub.s32 0, %v387
  %v389 = vrot.slane %v18, %v388
  %v390 = vmul.f32 %v370, %v389
  %v391 = vmul.f32 %v371, %v389
  %v392 = vmul.f32 %v372, %v389
  %v393 = vmul.f32 %v373, %v389
  %v394 = vmul.f32 %v374, %v389
  %v395 = vmul.f32 %v375, %v389
  %v396 = vmul.f32 %v376, %v389
  %v397 = vmul.f32 %v377, %v389
  %v398 = vmul.f32 %v378, %v389
  %v399 = vmul.f32 %v379, %v389
  %v400 = vmul.f32 %v380, %v389
  %v401 = vmul.f32 %v381, %v389
  %v402 = vmul.f32 %v382, %v389
  %v403 = vmul.f32 %v383, %v389
  %v404 = vmul.f32 %v384, %v389
  %v405 = vmul.f32 %v385, %v389
  %v406 = vlaneseq
  %v407 = vshrl.u32 %v406, 7
  %v408 = vsub.s32 1, %v407
  %v409 = vrot.slane %v18, %v408
  %v410 = vadd.f32 %v390, %v409
  %v411 = vadd.f32 %v391, %v409
  %v412 = vadd.f32 %v392, %v409
  %v413 = vadd.f32 %v393, %v409
  %v414 = vadd.f32 %v394, %v409
  %v415 = vadd.f32 %v395, %v409
  %v416 = vadd.f32 %v396, %v409
  %v417 = vadd.f32 %v397, %v409
  %v418 = vadd.f32 %v398, %v409
  %v419 = vadd.f32 %v399, %v409
  %v420 = vadd.f32 %v400, %v409
  %v421 = vadd.f32 %v401, %v409
  %v422 = vadd.f32 %v402, %v409
  %v423 = vadd.f32 %v403, %v409
  %v424 = vadd.f32 %v404, %v409
  %v425 = vadd.f32 %v405, %v409
  %v426 = vadd.f32 %v214, %v218
  %v427 = vadd.f32 %v426, %v224
  %v428 = vadd.f32 %v427, %v228
  %v429 = vadd.f32 %v428, %v234
  %v430 = vadd.f32 %v429, %v238
  %v431 = vadd.f32 %v430, %v244
  %v432 = vadd.f32 %v431, %v248
  %v433 = vadd.f32 %v432, %v254
  %v434 = vadd.f32 %v433, %v258
  %v435 = vadd.f32 %v434, %v264
  %v436 = vadd.f32 %v435, %v268
  %v437 = vadd.f32 %v436, %v274
  %v438 = vadd.f32 %v437, %v278
  %v439 = vadd.f32 %v438, %v284
  %v440 = vadd.f32 %v439, %v288
  %v441 = vrot.slane %v440, 4
  %v442 = vadd.f32 %v440, %v441
  %v443 = vrot.slane %v442, 2
  %v444 = vadd.f32 %v442, %v443
  %v445 = vrot.slane %v444, 1
  %v446 = vadd.f32 %v444, %v445
  %v447 = vmul.f32 %v446, 0.0078125
  %v448 = vsub.f32 %v214, %v447
  %v449 = vsub.f32 %v218, %v447
  %v450 = vsub.f32 %v224, %v447
  %v451 = vsub.f32 %v228, %v447
  %v452 = vsub.f32 %v234, %v447
  %v453 = vsub.f32 %v238, %v447
  %v454 = vsub.f32 %v244, %v447
  %v455 = vsub.f32 %v248, %v447
  %v456 = vsub.f32 %v254, %v447
  %v457 = vsub.f32 %v258, %v447
  %v458 = vsub.f32 %v264, %v447
  %v459 = vsub.f32 %v268, %v447
  %v460 = vsub.f32 %v274, %v447
  %v461 = vsub.f32 %v278, %v447
  %v462 = vsub.f32 %v284, %v447
  %v463 = vsub.f32 %v288, %v447
  %v464 = vmul.f32 %v448, %v448
  %v465 = vmul.f32 %v449, %v449
  %v466 = vmul.f32 %v450, %v450
  %v467 = vmul.f32 %v451, %v451
  %v468 = vmul.f32 %v452, %v452
  %v469 = vmul.f32 %v453, %v453
  %v470 = vmul.f32 %v454, %v454
  %v471 = vmul.f32 %v455, %v455
  %v472 = vmul.f32 %v456, %v456
  %v473 = vmul.f32 %v457, %v457
  %v474 = vmul.f32 %v458, %v458
  %v475 = vmul.f32 %v459, %v459
  %v476 = vmul.f32 %v460, %v460
  %v477 = vmul.f32 %v461, %v461
  %v478 = vmul.f32 %v462, %v462
  %v479 = vmul.f32 %v463, %v463
  %v480 = vadd.f32 %v464, %v465
  %v481 = vadd.f32 %v480, %v466
  %v482 = vadd.f32 %v481, %v467
  %v483 = vadd.f32 %v482, %v468
  %v484 = vadd.f32 %v483, %v469
  %v485 = vadd.f32 %v484, %v470
  %v486 = vadd.f32 %v485, %v471
  %v487 = vadd.f32 %v486, %v472
  %v488 = vadd.f32 %v487, %v473
  %v489 = vadd.f32 %v488, %v474
  %v490 = vadd.f32 %v489, %v475
  %v491 = vadd.f32 %v490, %v476
  %v492 = vadd.f32 %v491, %v477
  %v493 = vadd.f32 %v492, %v478
  %v494 = vadd.f32 %v493, %v479
  %v495 = vrot.slane %v494, 4
  %v496 = vadd.f32 %v494, %v495
  %v497 = vrot.slane %v496, 2
  %v498 = vadd.f32 %v496, %v497
  %v499 = vrot.slane %v498, 1
  %v500 = vadd.f32 %v498, %v499
  %v501 = vmul.f32 %v500, 0.0078125
  %v502 = vadd.f32 %v501, 1e-05
  %v503 = vrsqrt.pop %v502
  %v504 = vmul.f32 %v448, %v503
  %v505 = vmul.f32 %v449, %v503
  %v506 = vmul.f32 %v450, %v503
  %v507 = vmul.f32 %v451, %v503
  %v508 = vmul.f32 %v452, %v503
  %v509 = vmul.f32 %v453, %v503
  %v510 = vmul.f32 %v454, %v503
  %v511 = vmul.f32 %v455, %v503
  %v512 = vmul.f32 %v456, %v503
  %v513 = vmul.f32 %v457, %v503
  %v514 = vmul.f32 %v458, %v503
  %v515 = vmul.f32 %v459, %v503
  %v516 = vmul.f32 %v460, %v503
  %v517 = vmul.f32 %v461, %v503
  %v518 = vmul.f32 %v462, %v503
  %v519 = vmul.f32 %v463, %v503
  %v520 = vlaneseq
  %v521 = vshrl.u32 %v520, 7
  %v522 = vsub.s32 2, %v521
  %v523 = vrot.slane %v18, %v522
  %v524 = vmul.f32 %v504, %v523
  %v525 = vmul.f32 %v505, %v523
  %v526 = vmul.f32 %v506, %v523
  %v527 = vmul.f32 %v507, %v523
  %v528 = vmul.f32 %v508, %v523
  %v529 = vmul.f32 %v509, %v523
  %v530 = vmul.f32 %v510, %v523
  %v531 = vmul.f32 %v511, %v523
  %v532 = vmul.f32 %v512, %v523
  %v533 = vmul.f32 %v513, %v523
  %v534 = vmul.f32 %v514, %v523
  %v535 = vmul.f32 %v515, %v523
  %v536 = vmul.f32 %v516, %v523
  %v537 = vmul.f32 %v517, %v523
  %v538 = vmul.f32 %v518, %v523
  %v539 = vmul.f32 %v519, %v523
  %v540 = vlaneseq
  %v541 = vshrl.u32 %v540, 7
  %v542 = vsub.s32 3, %v541
  %v543 = vrot.slane %v18, %v542
  %v544 = vadd.f32 %v524, %v543
  %v545 = vadd.f32 %v525, %v543
  %v546 = vadd.f32 %v526, %v543
  %v547 = vadd.f32 %v527, %v543
  %v548 = vadd.f32 %v528, %v543
  %v549 = vadd.f32 %v529, %v543
  %v550 = vadd.f32 %v530, %v543
  %v551 = vadd.f32 %v531, %v543
  %v552 = vadd.f32 %v532, %v543
  %v553 = vadd.f32 %v533, %v543
  %v554 = vadd.f32 %v534, %v543
  %v555 = vadd.f32 %v535, %v543
  %v556 = vadd.f32 %v536, %v543
  %v557 = vadd.f32 %v537, %v543
  %v558 = vadd.f32 %v538, %v543
  %v559 = vadd.f32 %v539, %v543
  %v560 = vmax.f32 %v544, 0.0
  %v561 = vmax.f32 %v545, 0.0
  %v562 = vmax.f32 %v546, 0.0
  %v563 = vmax.f32 %v547, 0.0
  %v564 = vmax.f32 %v548, 0.0
  %v565 = vmax.f32 %v549, 0.0
  %v566 = vmax.f32 %v550, 0.0
  %v567 = vmax.f32 %v551, 0.0
  %v568 = vmax.f32 %v552, 0.0
  %v569 = vmax.f32 %v553, 0.0
  %v570 = vmax.f32 %v554, 0.0
  %v571 = vmax.f32 %v555, 0.0
  %v572 = vmax.f32 %v556, 0.0
  %v573 = vmax.f32 %v557, 0.0
  %v574 = vmax.f32 %v558, 0.0
  %v575 = vmax.f32 %v559, 0.0
  %v576 = vpack.c.bf16 %v560, %v560
  %v577 = vpack.c.bf16 %v561, %v561
  %v578 = vpack.c.bf16 %v562, %v562
  %v579 = vpack.c.bf16 %v563, %v563
  %v580 = vpack.c.bf16 %v564, %v564
  %v581 = vpack.c.bf16 %v565, %v565
  %v582 = vpack.c.bf16 %v566, %v566
  %v583 = vpack.c.bf16 %v567, %v567
  %v584 = vpack.c.bf16 %v568, %v568
  %v585 = vpack.c.bf16 %v569, %v569
  %v586 = vpack.c.bf16 %v570, %v570
  %v587 = vpack.c.bf16 %v571, %v571
  %v588 = vpack.c.bf16 %v572, %v572
  %v589 = vpack.c.bf16 %v573, %v573
  %v590 = vpack.c.bf16 %v574, %v574
  %v591 = vpack.c.bf16 %v575, %v575
  %592 = vst [vmem:[#allocation2] sm:$0xf] 0
  %593 = vst [vmem:[#allocation2 + $0x120] sm:$0xf] 0
  %vm594 = vcmask 1040384
  %vm595 = vsmask.f32 256
  %vm596 = vmand %vm594, %vm595
  %v597 = vld [vmem:[#allocation2] sm:$0x1]
  %v598 = vsel %vm596, 0, %v597
  %599 = vst [vmem:[#allocation2] sm:$0x1] %v598
  %v600 = vld [vmem:[#allocation2 + $0x24] sm:$0x1]
  %v601 = vsel %vm596, 0, %v600
  %602 = vst [vmem:[#allocation2 + $0x24] sm:$0x1] %v601
  %v603 = vld [vmem:[#allocation2 + $0x48] sm:$0x1]
  %v604 = vsel %vm596, 0, %v603
  %605 = vst [vmem:[#allocation2 + $0x48] sm:$0x1] %v604
  %v606 = vld [vmem:[#allocation2 + $0x6c] sm:$0x1]
  %v607 = vsel %vm596, 0, %v606
  %608 = vst [vmem:[#allocation2 + $0x6c] sm:$0x1] %v607
  %v609 = vld [vmem:[#allocation2 + $0x90] sm:$0x1]
  %v610 = vsel %vm596, 0, %v609
  %611 = vst [vmem:[#allocation2 + $0x90] sm:$0x1] %v610
  %v612 = vld [vmem:[#allocation2 + $0xb4] sm:$0x1]
  %v613 = vsel %vm596, 0, %v612
  %614 = vst [vmem:[#allocation2 + $0xb4] sm:$0x1] %v613
  %v615 = vld [vmem:[#allocation2 + $0xd8] sm:$0x1]
  %v616 = vsel %vm596, 0, %v615
  %617 = vst [vmem:[#allocation2 + $0xd8] sm:$0x1] %v616
  %v618 = vld [vmem:[#allocation2 + $0xfc] sm:$0x1]
  %v619 = vsel %vm596, 0, %v618
  %620 = vst [vmem:[#allocation2 + $0xfc] sm:$0x1] %v619
  %v621 = vld [vmem:[#allocation2 + $0x120] sm:$0x1]
  %v622 = vsel %vm596, 0, %v621
  %623 = vst [vmem:[#allocation2 + $0x120] sm:$0x1] %v622
  %v624 = vld [vmem:[#allocation2 + $0x144] sm:$0x1]
  %v625 = vsel %vm596, 0, %v624
  %626 = vst [vmem:[#allocation2 + $0x144] sm:$0x1] %v625
  %v627 = vld [vmem:[#allocation2 + $0x168] sm:$0x1]
  %v628 = vsel %vm596, 0, %v627
  %629 = vst [vmem:[#allocation2 + $0x168] sm:$0x1] %v628
  %v630 = vld [vmem:[#allocation2 + $0x18c] sm:$0x1]
  %v631 = vsel %vm596, 0, %v630
  %632 = vst [vmem:[#allocation2 + $0x18c] sm:$0x1] %v631
  %v633 = vld [vmem:[#allocation2 + $0x1b0] sm:$0x1]
  %v634 = vsel %vm596, 0, %v633
  %635 = vst [vmem:[#allocation2 + $0x1b0] sm:$0x1] %v634
  %v636 = vld [vmem:[#allocation2 + $0x1d4] sm:$0x1]
  %v637 = vsel %vm596, 0, %v636
  %638 = vst [vmem:[#allocation2 + $0x1d4] sm:$0x1] %v637
  %v639 = vld [vmem:[#allocation2 + $0x1f8] sm:$0x1]
  %v640 = vsel %vm596, 0, %v639
  %641 = vst [vmem:[#allocation2 + $0x1f8] sm:$0x1] %v640
  %v642 = vld [vmem:[#allocation2 + $0x21c] sm:$0x1]
  %v643 = vsel %vm596, 0, %v642
  %644 = vst [vmem:[#allocation2 + $0x21c] sm:$0x1] %v643
  %v659 = vunpack.c.l.b16 %v576
  %v660 = vunpack.c.l.b16 %v577
  %v661 = vunpack.c.l.b16 %v578
  %v662 = vunpack.c.l.b16 %v579
  %v663 = vunpack.c.l.b16 %v580
  %v664 = vunpack.c.l.b16 %v581
  %v665 = vunpack.c.l.b16 %v582
  %v666 = vunpack.c.l.b16 %v584
  %v667 = vunpack.c.l.b16 %v585
  %v668 = vunpack.c.l.b16 %v586
  %v669 = vunpack.c.l.b16 %v587
  %v670 = vunpack.c.l.b16 %v588
  %v671 = vunpack.c.l.b16 %v589
  %v672 = vunpack.c.l.b16 %v590
  %v673 = vpack.c.b16 %v659, %v659
  %v674 = vpack.c.b16 %v660, %v660
  %v675 = vpack.c.b16 %v661, %v661
  %v676 = vpack.c.b16 %v662, %v662
  %v677 = vpack.c.b16 %v663, %v663
  %v678 = vpack.c.b16 %v664, %v664
  %v679 = vpack.c.b16 %v665, %v665
  %v680 = vpack.c.b16 %v666, %v666
  %v681 = vpack.c.b16 %v667, %v667
  %v682 = vpack.c.b16 %v668, %v668
  %v683 = vpack.c.b16 %v669, %v669
  %v684 = vpack.c.b16 %v670, %v670
  %v685 = vpack.c.b16 %v671, %v671
  %v686 = vpack.c.b16 %v672, %v672
  %v688 = vshrl.u32 %v673, 16
  %v690 = vrot.slane %v688, 7
  %v691 = vshll.u32 %v673, 16
  %v693 = vor.u32 %v690, %v691
  %v695 = vshrl.u32 %v674, 16
  %v697 = vrot.slane %v695, 7
  %v698 = vshll.u32 %v674, 16
  %v700 = vor.u32 %v697, %v698
  %v702 = vshrl.u32 %v675, 16
  %v704 = vrot.slane %v702, 7
  %v705 = vshll.u32 %v675, 16
  %v707 = vor.u32 %v704, %v705
  %v709 = vshrl.u32 %v676, 16
  %v711 = vrot.slane %v709, 7
  %v712 = vshll.u32 %v676, 16
  %v714 = vor.u32 %v711, %v712
  %v716 = vshrl.u32 %v677, 16
  %v718 = vrot.slane %v716, 7
  %v719 = vshll.u32 %v677, 16
  %v721 = vor.u32 %v718, %v719
  %v723 = vshrl.u32 %v678, 16
  %v725 = vrot.slane %v723, 7
  %v726 = vshll.u32 %v678, 16
  %v728 = vor.u32 %v725, %v726
  %v730 = vshrl.u32 %v679, 16
  %v732 = vrot.slane %v730, 7
  %v733 = vshll.u32 %v679, 16
  %v735 = vor.u32 %v732, %v733
  %v737 = vshrl.u32 %v680, 16
  %v739 = vrot.slane %v737, 7
  %v740 = vshll.u32 %v680, 16
  %v742 = vor.u32 %v739, %v740
  %v744 = vshrl.u32 %v681, 16
  %v746 = vrot.slane %v744, 7
  %v747 = vshll.u32 %v681, 16
  %v749 = vor.u32 %v746, %v747
  %v751 = vshrl.u32 %v682, 16
  %v753 = vrot.slane %v751, 7
  %v754 = vshll.u32 %v682, 16
  %v756 = vor.u32 %v753, %v754
  %v758 = vshrl.u32 %v683, 16
  %v760 = vrot.slane %v758, 7
  %v761 = vshll.u32 %v683, 16
  %v763 = vor.u32 %v760, %v761
  %v765 = vshrl.u32 %v684, 16
  %v767 = vrot.slane %v765, 7
  %v768 = vshll.u32 %v684, 16
  %v770 = vor.u32 %v767, %v768
  %v772 = vshrl.u32 %v685, 16
  %v774 = vrot.slane %v772, 7
  %v775 = vshll.u32 %v685, 16
  %v777 = vor.u32 %v774, %v775
  %v779 = vshrl.u32 %v686, 16
  %v781 = vrot.slane %v779, 7
  %v782 = vshll.u32 %v686, 16
  %v784 = vor.u32 %v781, %v782
  %s799 = scalar_lea.vmem [#allocation2], 36
  %vm800 = vcmask 1043456
  %vm801 = vsmask.f32 7938
  %vm802 = vmand %vm800, %vm801
  %v803 = vld [vmem:[%s799] sm:$0xf]
  %v804 = vsel %vm802, %v693, %v803
  %805 = vst [vmem:[%s799] sm:$0xf] %v804
  %v806 = vld [vmem:[%s799 + $0x24] sm:$0xf]
  %v807 = vsel %vm802, %v700, %v806
  %808 = vst [vmem:[%s799 + $0x24] sm:$0xf] %v807
  %v809 = vld [vmem:[%s799 + $0x48] sm:$0xf]
  %v810 = vsel %vm802, %v707, %v809
  %811 = vst [vmem:[%s799 + $0x48] sm:$0xf] %v810
  %v812 = vld [vmem:[%s799 + $0x6c] sm:$0xf]
  %v813 = vsel %vm802, %v714, %v812
  %814 = vst [vmem:[%s799 + $0x6c] sm:$0xf] %v813
  %v815 = vld [vmem:[%s799 + $0x90] sm:$0xf]
  %v816 = vsel %vm802, %v721, %v815
  %817 = vst [vmem:[%s799 + $0x90] sm:$0xf] %v816
  %v818 = vld [vmem:[%s799 + $0xb4] sm:$0xf]
  %v819 = vsel %vm802, %v728, %v818
  %820 = vst [vmem:[%s799 + $0xb4] sm:$0xf] %v819
  %v821 = vld [vmem:[%s799 + $0xd8] sm:$0xf]
  %v822 = vsel %vm802, %v735, %v821
  %823 = vst [vmem:[%s799 + $0xd8] sm:$0xf] %v822
  %v824 = vld [vmem:[%s799 + $0x120] sm:$0xf]
  %v825 = vsel %vm802, %v742, %v824
  %826 = vst [vmem:[%s799 + $0x120] sm:$0xf] %v825
  %v827 = vld [vmem:[%s799 + $0x144] sm:$0xf]
  %v828 = vsel %vm802, %v749, %v827
  %829 = vst [vmem:[%s799 + $0x144] sm:$0xf] %v828
  %v830 = vld [vmem:[%s799 + $0x168] sm:$0xf]
  %v831 = vsel %vm802, %v756, %v830
  %832 = vst [vmem:[%s799 + $0x168] sm:$0xf] %v831
  %v833 = vld [vmem:[%s799 + $0x18c] sm:$0xf]
  %v834 = vsel %vm802, %v763, %v833
  %835 = vst [vmem:[%s799 + $0x18c] sm:$0xf] %v834
  %v836 = vld [vmem:[%s799 + $0x1b0] sm:$0xf]
  %v837 = vsel %vm802, %v770, %v836
  %838 = vst [vmem:[%s799 + $0x1b0] sm:$0xf] %v837
  %v839 = vld [vmem:[%s799 + $0x1d4] sm:$0xf]
  %v840 = vsel %vm802, %v777, %v839
  %841 = vst [vmem:[%s799 + $0x1d4] sm:$0xf] %v840
  %v842 = vld [vmem:[%s799 + $0x1f8] sm:$0xf]
  %v843 = vsel %vm802, %v784, %v842
  %844 = vst [vmem:[%s799 + $0x1f8] sm:$0xf] %v843
  %845 = vst [vmem:[#allocation2 + $0x4] sm:$0xf] 0
  %846 = vst [vmem:[#allocation2 + $0x124] sm:$0xf] 0
  %847 = vst [vmem:[%s799 + $0x4] sm:$0xf] %v576
  %848 = vst [vmem:[%s799 + $0x28] sm:$0xf] %v577
  %849 = vst [vmem:[%s799 + $0x4c] sm:$0xf] %v578
  %850 = vst [vmem:[%s799 + $0x70] sm:$0xf] %v579
  %851 = vst [vmem:[%s799 + $0x94] sm:$0xf] %v580
  %852 = vst [vmem:[%s799 + $0xb8] sm:$0xf] %v581
  %853 = vst [vmem:[%s799 + $0xdc] sm:$0xf] %v582
  %854 = vst [vmem:[%s799 + $0x124] sm:$0xf] %v584
  %855 = vst [vmem:[%s799 + $0x148] sm:$0xf] %v585
  %856 = vst [vmem:[%s799 + $0x16c] sm:$0xf] %v586
  %857 = vst [vmem:[%s799 + $0x190] sm:$0xf] %v587
  %858 = vst [vmem:[%s799 + $0x1b4] sm:$0xf] %v588
  %859 = vst [vmem:[%s799 + $0x1d8] sm:$0xf] %v589
  %860 = vst [vmem:[%s799 + $0x1fc] sm:$0xf] %v590
  %861 = vst [vmem:[#allocation2 + $0x8] sm:$0xf] 0
  %862 = vst [vmem:[#allocation2 + $0x128] sm:$0xf] 0
  %vm863 = vcmask 1043459
  %vm864 = vsmask.f32 7950
  %vm865 = vmand %vm863, %vm864
  %v866 = vld [vmem:[#allocation2 + $0x8] sm:$0x8]
  %v867 = vsel %vm865, 0, %v866
  %868 = vst [vmem:[#allocation2 + $0x8] sm:$0x8] %v867
  %v869 = vld [vmem:[#allocation2 + $0x2c] sm:$0x8]
  %v870 = vsel %vm865, 0, %v869
  %871 = vst [vmem:[#allocation2 + $0x2c] sm:$0x8] %v870
  %v872 = vld [vmem:[#allocation2 + $0x50] sm:$0x8]
  %v873 = vsel %vm865, 0, %v872
  %874 = vst [vmem:[#allocation2 + $0x50] sm:$0x8] %v873
  %v875 = vld [vmem:[#allocation2 + $0x74] sm:$0x8]
  %v876 = vsel %vm865, 0, %v875
  %877 = vst [vmem:[#allocation2 + $0x74] sm:$0x8] %v876
  %v878 = vld [vmem:[#allocation2 + $0x98] sm:$0x8]
  %v879 = vsel %vm865, 0, %v878
  %880 = vst [vmem:[#allocation2 + $0x98] sm:$0x8] %v879
  %v881 = vld [vmem:[#allocation2 + $0xbc] sm:$0x8]
  %v882 = vsel %vm865, 0, %v881
  %883 = vst [vmem:[#allocation2 + $0xbc] sm:$0x8] %v882
  %v884 = vld [vmem:[#allocation2 + $0xe0] sm:$0x8]
  %v885 = vsel %vm865, 0, %v884
  %886 = vst [vmem:[#allocation2 + $0xe0] sm:$0x8] %v885
  %v887 = vld [vmem:[#allocation2 + $0x104] sm:$0x8]
  %v888 = vsel %vm865, 0, %v887
  %889 = vst [vmem:[#allocation2 + $0x104] sm:$0x8] %v888
  %v890 = vld [vmem:[#allocation2 + $0x128] sm:$0x8]
  %v891 = vsel %vm865, 0, %v890
  %892 = vst [vmem:[#allocation2 + $0x128] sm:$0x8] %v891
  %v893 = vld [vmem:[#allocation2 + $0x14c] sm:$0x8]
  %v894 = vsel %vm865, 0, %v893
  %895 = vst [vmem:[#allocation2 + $0x14c] sm:$0x8] %v894
  %v896 = vld [vmem:[#allocation2 + $0x170] sm:$0x8]
  %v897 = vsel %vm865, 0, %v896
  %898 = vst [vmem:[#allocation2 + $0x170] sm:$0x8] %v897
  %v899 = vld [vmem:[#allocation2 + $0x194] sm:$0x8]
  %v900 = vsel %vm865, 0, %v899
  %901 = vst [vmem:[#allocation2 + $0x194] sm:$0x8] %v900
  %v902 = vld [vmem:[#allocation2 + $0x1b8] sm:$0x8]
  %v903 = vsel %vm865, 0, %v902
  %904 = vst [vmem:[#allocation2 + $0x1b8] sm:$0x8] %v903
  %v905 = vld [vmem:[#allocation2 + $0x1dc] sm:$0x8]
  %v906 = vsel %vm865, 0, %v905
  %907 = vst [vmem:[#allocation2 + $0x1dc] sm:$0x8] %v906
  %v908 = vld [vmem:[#allocation2 + $0x200] sm:$0x8]
  %v909 = vsel %vm865, 0, %v908
  %910 = vst [vmem:[#allocation2 + $0x200] sm:$0x8] %v909
  %v911 = vld [vmem:[#allocation2 + $0x224] sm:$0x8]
  %v912 = vsel %vm865, 0, %v911
  %913 = vst [vmem:[#allocation2 + $0x224] sm:$0x8] %v912
  %v914 = vrot.slane %v688, 4
  %v915 = vrot.slane %v691, 5
  %v916 = vor.u32 %v914, %v915
  %v917 = vrot.slane %v916, 4
  %v918 = vrot.slane %v695, 4
  %v919 = vrot.slane %v698, 5
  %v920 = vor.u32 %v918, %v919
  %v921 = vrot.slane %v920, 4
  %v922 = vrot.slane %v702, 4
  %v923 = vrot.slane %v705, 5
  %v924 = vor.u32 %v922, %v923
  %v925 = vrot.slane %v924, 4
  %v926 = vrot.slane %v709, 4
  %v927 = vrot.slane %v712, 5
  %v928 = vor.u32 %v926, %v927
  %v929 = vrot.slane %v928, 4
  %v930 = vrot.slane %v716, 4
  %v931 = vrot.slane %v719, 5
  %v932 = vor.u32 %v930, %v931
  %v933 = vrot.slane %v932, 4
  %v934 = vrot.slane %v723, 4
  %v935 = vrot.slane %v726, 5
  %v936 = vor.u32 %v934, %v935
  %v937 = vrot.slane %v936, 4
  %v938 = vrot.slane %v730, 4
  %v939 = vrot.slane %v733, 5
  %v940 = vor.u32 %v938, %v939
  %v941 = vrot.slane %v940, 4
  %v942 = vrot.slane %v737, 4
  %v943 = vrot.slane %v740, 5
  %v944 = vor.u32 %v942, %v943
  %v945 = vrot.slane %v944, 4
  %v946 = vrot.slane %v744, 4
  %v947 = vrot.slane %v747, 5
  %v948 = vor.u32 %v946, %v947
  %v949 = vrot.slane %v948, 4
  %v950 = vrot.slane %v751, 4
  %v951 = vrot.slane %v754, 5
  %v952 = vor.u32 %v950, %v951
  %v953 = vrot.slane %v952, 4
  %v954 = vrot.slane %v758, 4
  %v955 = vrot.slane %v761, 5
  %v956 = vor.u32 %v954, %v955
  %v957 = vrot.slane %v956, 4
  %v958 = vrot.slane %v765, 4
  %v959 = vrot.slane %v768, 5
  %v960 = vor.u32 %v958, %v959
  %v961 = vrot.slane %v960, 4
  %v962 = vrot.slane %v772, 4
  %v963 = vrot.slane %v775, 5
  %v964 = vor.u32 %v962, %v963
  %v965 = vrot.slane %v964, 4
  %v966 = vrot.slane %v779, 4
  %v967 = vrot.slane %v782, 5
  %v968 = vor.u32 %v966, %v967
  %v969 = vrot.slane %v968, 4
  %vm984 = vsmask.f32 3328
  %vm985 = vmand %vm800, %vm984
  %v986 = vld [vmem:[%s799 + $0x8] sm:$0xf]
  %v987 = vsel %vm985, %v917, %v986
  %988 = vst [vmem:[%s799 + $0x8] sm:$0xf] %v987
  %v989 = vld [vmem:[%s799 + $0x2c] sm:$0xf]
  %v990 = vsel %vm985, %v921, %v989
  %991 = vst [vmem:[%s799 + $0x2c] sm:$0xf] %v990
  %v992 = vld [vmem:[%s799 + $0x50] sm:$0xf]
  %v993 = vsel %vm985, %v925, %v992
  %994 = vst [vmem:[%s799 + $0x50] sm:$0xf] %v993
  %v995 = vld [vmem:[%s799 + $0x74] sm:$0xf]
  %v996 = vsel %vm985, %v929, %v995
  %997 = vst [vmem:[%s799 + $0x74] sm:$0xf] %v996
  %v998 = vld [vmem:[%s799 + $0x98] sm:$0xf]
  %v999 = vsel %vm985, %v933, %v998
  %1000 = vst [vmem:[%s799 + $0x98] sm:$0xf] %v999
  %v1001 = vld [vmem:[%s799 + $0xbc] sm:$0xf]
  %v1002 = vsel %vm985, %v937, %v1001
  %1003 = vst [vmem:[%s799 + $0xbc] sm:$0xf] %v1002
  %v1004 = vld [vmem:[%s799 + $0xe0] sm:$0xf]
  %v1005 = vsel %vm985, %v941, %v1004
  %1006 = vst [vmem:[%s799 + $0xe0] sm:$0xf] %v1005
  %v1007 = vld [vmem:[%s799 + $0x128] sm:$0xf]
  %v1008 = vsel %vm985, %v945, %v1007
  %1009 = vst [vmem:[%s799 + $0x128] sm:$0xf] %v1008
  %v1010 = vld [vmem:[%s799 + $0x14c] sm:$0xf]
  %v1011 = vsel %vm985, %v949, %v1010
  %1012 = vst [vmem:[%s799 + $0x14c] sm:$0xf] %v1011
  %v1013 = vld [vmem:[%s799 + $0x170] sm:$0xf]
  %v1014 = vsel %vm985, %v953, %v1013
  %1015 = vst [vmem:[%s799 + $0x170] sm:$0xf] %v1014
  %v1016 = vld [vmem:[%s799 + $0x194] sm:$0xf]
  %v1017 = vsel %vm985, %v957, %v1016
  %1018 = vst [vmem:[%s799 + $0x194] sm:$0xf] %v1017
  %v1019 = vld [vmem:[%s799 + $0x1b8] sm:$0xf]
  %v1020 = vsel %vm985, %v961, %v1019
  %1021 = vst [vmem:[%s799 + $0x1b8] sm:$0xf] %v1020
  %v1022 = vld [vmem:[%s799 + $0x1dc] sm:$0xf]
  %v1023 = vsel %vm985, %v965, %v1022
  %1024 = vst [vmem:[%s799 + $0x1dc] sm:$0xf] %v1023
  %v1025 = vld [vmem:[%s799 + $0x200] sm:$0xf]
  %v1026 = vsel %vm985, %v969, %v1025
  %1027 = vst [vmem:[%s799 + $0x200] sm:$0xf] %v1026
  %v1028 = vld [vmem:[#allocation2 + $0xc] sm:$0x1]
  %v1029 = vsel %vm596, 0, %v1028
  %1030 = vst [vmem:[#allocation2 + $0xc] sm:$0x1] %v1029
  %v1031 = vld [vmem:[#allocation2 + $0x30] sm:$0x1]
  %v1032 = vsel %vm596, 0, %v1031
  %1033 = vst [vmem:[#allocation2 + $0x30] sm:$0x1] %v1032
  %v1034 = vld [vmem:[#allocation2 + $0x54] sm:$0x1]
  %v1035 = vsel %vm596, 0, %v1034
  %1036 = vst [vmem:[#allocation2 + $0x54] sm:$0x1] %v1035
  %v1037 = vld [vmem:[#allocation2 + $0x78] sm:$0x1]
  %v1038 = vsel %vm596, 0, %v1037
  %1039 = vst [vmem:[#allocation2 + $0x78] sm:$0x1] %v1038
  %v1040 = vld [vmem:[#allocation2 + $0x9c] sm:$0x1]
  %v1041 = vsel %vm596, 0, %v1040
  %1042 = vst [vmem:[#allocation2 + $0x9c] sm:$0x1] %v1041
  %v1043 = vld [vmem:[#allocation2 + $0xc0] sm:$0x1]
  %v1044 = vsel %vm596, 0, %v1043
  %1045 = vst [vmem:[#allocation2 + $0xc0] sm:$0x1] %v1044
  %v1046 = vld [vmem:[#allocation2 + $0xe4] sm:$0x1]
  %v1047 = vsel %vm596, 0, %v1046
  %1048 = vst [vmem:[#allocation2 + $0xe4] sm:$0x1] %v1047
  %v1049 = vld [vmem:[#allocation2 + $0x108] sm:$0x1]
  %v1050 = vsel %vm596, 0, %v1049
  %1051 = vst [vmem:[#allocation2 + $0x108] sm:$0x1] %v1050
  %v1052 = vld [vmem:[#allocation2 + $0x12c] sm:$0x1]
  %v1053 = vsel %vm596, 0, %v1052
  %1054 = vst [vmem:[#allocation2 + $0x12c] sm:$0x1] %v1053
  %v1055 = vld [vmem:[#allocation2 + $0x150] sm:$0x1]
  %v1056 = vsel %vm596, 0, %v1055
  %1057 = vst [vmem:[#allocation2 + $0x150] sm:$0x1] %v1056
  %v1058 = vld [vmem:[#allocation2 + $0x174] sm:$0x1]
  %v1059 = vsel %vm596, 0, %v1058
  %1060 = vst [vmem:[#allocation2 + $0x174] sm:$0x1] %v1059
  %v1061 = vld [vmem:[#allocation2 + $0x198] sm:$0x1]
  %v1062 = vsel %vm596, 0, %v1061
  %1063 = vst [vmem:[#allocation2 + $0x198] sm:$0x1] %v1062
  %v1064 = vld [vmem:[#allocation2 + $0x1bc] sm:$0x1]
  %v1065 = vsel %vm596, 0, %v1064
  %1066 = vst [vmem:[#allocation2 + $0x1bc] sm:$0x1] %v1065
  %v1067 = vld [vmem:[#allocation2 + $0x1e0] sm:$0x1]
  %v1068 = vsel %vm596, 0, %v1067
  %1069 = vst [vmem:[#allocation2 + $0x1e0] sm:$0x1] %v1068
  %v1070 = vld [vmem:[#allocation2 + $0x204] sm:$0x1]
  %v1071 = vsel %vm596, 0, %v1070
  %1072 = vst [vmem:[#allocation2 + $0x204] sm:$0x1] %v1071
  %v1073 = vld [vmem:[#allocation2 + $0x228] sm:$0x1]
  %v1074 = vsel %vm596, 0, %v1073
  %1075 = vst [vmem:[#allocation2 + $0x228] sm:$0x1] %v1074
  %v1078 = vunpack.c.l.b16 %v583
  %v1079 = vunpack.c.l.b16 %v591
  %v1080 = vpack.c.b16 %v1078, %v1078
  %v1081 = vpack.c.b16 %v1079, %v1079
  %v1083 = vshrl.u32 %v1080, 16
  %v1085 = vrot.slane %v1083, 7
  %v1086 = vshll.u32 %v1080, 16
  %v1088 = vor.u32 %v1085, %v1086
  %v1090 = vshrl.u32 %v1081, 16
  %v1092 = vrot.slane %v1090, 7
  %v1093 = vshll.u32 %v1081, 16
  %v1095 = vor.u32 %v1092, %v1093
  %v1098 = vld [vmem:[#allocation2 + $0xc] sm:$0xf]
  %v1099 = vsel %vm802, %v693, %v1098
  %1100 = vst [vmem:[#allocation2 + $0xc] sm:$0xf] %v1099
  %v1101 = vld [vmem:[#allocation2 + $0x30] sm:$0xf]
  %v1102 = vsel %vm802, %v700, %v1101
  %1103 = vst [vmem:[#allocation2 + $0x30] sm:$0xf] %v1102
  %v1104 = vld [vmem:[#allocation2 + $0x54] sm:$0xf]
  %v1105 = vsel %vm802, %v707, %v1104
  %1106 = vst [vmem:[#allocation2 + $0x54] sm:$0xf] %v1105
  %v1107 = vld [vmem:[#allocation2 + $0x78] sm:$0xf]
  %v1108 = vsel %vm802, %v714, %v1107
  %1109 = vst [vmem:[#allocation2 + $0x78] sm:$0xf] %v1108
  %v1110 = vld [vmem:[#allocation2 + $0x9c] sm:$0xf]
  %v1111 = vsel %vm802, %v721, %v1110
  %1112 = vst [vmem:[#allocation2 + $0x9c] sm:$0xf] %v1111
  %v1113 = vld [vmem:[#allocation2 + $0xc0] sm:$0xf]
  %v1114 = vsel %vm802, %v728, %v1113
  %1115 = vst [vmem:[#allocation2 + $0xc0] sm:$0xf] %v1114
  %v1116 = vld [vmem:[#allocation2 + $0xe4] sm:$0xf]
  %v1117 = vsel %vm802, %v735, %v1116
  %1118 = vst [vmem:[#allocation2 + $0xe4] sm:$0xf] %v1117
  %v1119 = vld [vmem:[#allocation2 + $0x108] sm:$0xf]
  %v1120 = vsel %vm802, %v1088, %v1119
  %1121 = vst [vmem:[#allocation2 + $0x108] sm:$0xf] %v1120
  %v1122 = vld [vmem:[#allocation2 + $0x12c] sm:$0xf]
  %v1123 = vsel %vm802, %v742, %v1122
  %1124 = vst [vmem:[#allocation2 + $0x12c] sm:$0xf] %v1123
  %v1125 = vld [vmem:[#allocation2 + $0x150] sm:$0xf]
  %v1126 = vsel %vm802, %v749, %v1125
  %1127 = vst [vmem:[#allocation2 + $0x150] sm:$0xf] %v1126
  %v1128 = vld [vmem:[#allocation2 + $0x174] sm:$0xf]
  %v1129 = vsel %vm802, %v756, %v1128
  %1130 = vst [vmem:[#allocation2 + $0x174] sm:$0xf] %v1129
  %v1131 = vld [vmem:[#allocation2 + $0x198] sm:$0xf]
  %v1132 = vsel %vm802, %v763, %v1131
  %1133 = vst [vmem:[#allocation2 + $0x198] sm:$0xf] %v1132
  %v1134 = vld [vmem:[#allocation2 + $0x1bc] sm:$0xf]
  %v1135 = vsel %vm802, %v770, %v1134
  %1136 = vst [vmem:[#allocation2 + $0x1bc] sm:$0xf] %v1135
  %v1137 = vld [vmem:[#allocation2 + $0x1e0] sm:$0xf]
  %v1138 = vsel %vm802, %v777, %v1137
  %1139 = vst [vmem:[#allocation2 + $0x1e0] sm:$0xf] %v1138
  %v1140 = vld [vmem:[#allocation2 + $0x204] sm:$0xf]
  %v1141 = vsel %vm802, %v784, %v1140
  %1142 = vst [vmem:[#allocation2 + $0x204] sm:$0xf] %v1141
  %v1143 = vld [vmem:[#allocation2 + $0x228] sm:$0xf]
  %v1144 = vsel %vm802, %v1095, %v1143
  %1145 = vst [vmem:[#allocation2 + $0x228] sm:$0xf] %v1144
  %1146 = vst [vmem:[#allocation2 + $0x10] sm:$0xf] %v576
  %1147 = vst [vmem:[#allocation2 + $0x34] sm:$0xf] %v577
  %1148 = vst [vmem:[#allocation2 + $0x58] sm:$0xf] %v578
  %1149 = vst [vmem:[#allocation2 + $0x7c] sm:$0xf] %v579
  %1150 = vst [vmem:[#allocation2 + $0xa0] sm:$0xf] %v580
  %1151 = vst [vmem:[#allocation2 + $0xc4] sm:$0xf] %v581
  %1152 = vst [vmem:[#allocation2 + $0xe8] sm:$0xf] %v582
  %1153 = vst [vmem:[#allocation2 + $0x10c] sm:$0xf] %v583
  %1154 = vst [vmem:[#allocation2 + $0x130] sm:$0xf] %v584
  %1155 = vst [vmem:[#allocation2 + $0x154] sm:$0xf] %v585
  %1156 = vst [vmem:[#allocation2 + $0x178] sm:$0xf] %v586
  %1157 = vst [vmem:[#allocation2 + $0x19c] sm:$0xf] %v587
  %1158 = vst [vmem:[#allocation2 + $0x1c0] sm:$0xf] %v588
  %1159 = vst [vmem:[#allocation2 + $0x1e4] sm:$0xf] %v589
  %1160 = vst [vmem:[#allocation2 + $0x208] sm:$0xf] %v590
  %1161 = vst [vmem:[#allocation2 + $0x22c] sm:$0xf] %v591
  %v1162 = vld [vmem:[#allocation2 + $0x14] sm:$0x8]
  %v1163 = vsel %vm865, 0, %v1162
  %1164 = vst [vmem:[#allocation2 + $0x14] sm:$0x8] %v1163
  %v1165 = vld [vmem:[#allocation2 + $0x38] sm:$0x8]
  %v1166 = vsel %vm865, 0, %v1165
  %1167 = vst [vmem:[#allocation2 + $0x38] sm:$0x8] %v1166
  %v1168 = vld [vmem:[#allocation2 + $0x5c] sm:$0x8]
  %v1169 = vsel %vm865, 0, %v1168
  %1170 = vst [vmem:[#allocation2 + $0x5c] sm:$0x8] %v1169
  %v1171 = vld [vmem:[#allocation2 + $0x80] sm:$0x8]
  %v1172 = vsel %vm865, 0, %v1171
  %1173 = vst [vmem:[#allocation2 + $0x80] sm:$0x8] %v1172
  %v1174 = vld [vmem:[#allocation2 + $0xa4] sm:$0x8]
  %v1175 = vsel %vm865, 0, %v1174
  %1176 = vst [vmem:[#allocation2 + $0xa4] sm:$0x8] %v1175
  %v1177 = vld [vmem:[#allocation2 + $0xc8] sm:$0x8]
  %v1178 = vsel %vm865, 0, %v1177
  %1179 = vst [vmem:[#allocation2 + $0xc8] sm:$0x8] %v1178
  %v1180 = vld [vmem:[#allocation2 + $0xec] sm:$0x8]
  %v1181 = vsel %vm865, 0, %v1180
  %1182 = vst [vmem:[#allocation2 + $0xec] sm:$0x8] %v1181
  %v1183 = vld [vmem:[#allocation2 + $0x110] sm:$0x8]
  %v1184 = vsel %vm865, 0, %v1183
  %1185 = vst [vmem:[#allocation2 + $0x110] sm:$0x8] %v1184
  %v1186 = vld [vmem:[#allocation2 + $0x134] sm:$0x8]
  %v1187 = vsel %vm865, 0, %v1186
  %1188 = vst [vmem:[#allocation2 + $0x134] sm:$0x8] %v1187
  %v1189 = vld [vmem:[#allocation2 + $0x158] sm:$0x8]
  %v1190 = vsel %vm865, 0, %v1189
  %1191 = vst [vmem:[#allocation2 + $0x158] sm:$0x8] %v1190
  %v1192 = vld [vmem:[#allocation2 + $0x17c] sm:$0x8]
  %v1193 = vsel %vm865, 0, %v1192
  %1194 = vst [vmem:[#allocation2 + $0x17c] sm:$0x8] %v1193
  %v1195 = vld [vmem:[#allocation2 + $0x1a0] sm:$0x8]
  %v1196 = vsel %vm865, 0, %v1195
  %1197 = vst [vmem:[#allocation2 + $0x1a0] sm:$0x8] %v1196
  %v1198 = vld [vmem:[#allocation2 + $0x1c4] sm:$0x8]
  %v1199 = vsel %vm865, 0, %v1198
  %1200 = vst [vmem:[#allocation2 + $0x1c4] sm:$0x8] %v1199
  %v1201 = vld [vmem:[#allocation2 + $0x1e8] sm:$0x8]
  %v1202 = vsel %vm865, 0, %v1201
  %1203 = vst [vmem:[#allocation2 + $0x1e8] sm:$0x8] %v1202
  %v1204 = vld [vmem:[#allocation2 + $0x20c] sm:$0x8]
  %v1205 = vsel %vm865, 0, %v1204
  %1206 = vst [vmem:[#allocation2 + $0x20c] sm:$0x8] %v1205
  %v1207 = vld [vmem:[#allocation2 + $0x230] sm:$0x8]
  %v1208 = vsel %vm865, 0, %v1207
  %1209 = vst [vmem:[#allocation2 + $0x230] sm:$0x8] %v1208
  %v1210 = vrot.slane %v1083, 4
  %v1211 = vrot.slane %v1086, 5
  %v1212 = vor.u32 %v1210, %v1211
  %v1213 = vrot.slane %v1212, 4
  %v1214 = vrot.slane %v1090, 4
  %v1215 = vrot.slane %v1093, 5
  %v1216 = vor.u32 %v1214, %v1215
  %v1217 = vrot.slane %v1216, 4
  %v1220 = vld [vmem:[#allocation2 + $0x14] sm:$0xf]
  %v1221 = vsel %vm985, %v917, %v1220
  %1222 = vst [vmem:[#allocation2 + $0x14] sm:$0xf] %v1221
  %v1223 = vld [vmem:[#allocation2 + $0x38] sm:$0xf]
  %v1224 = vsel %vm985, %v921, %v1223
  %1225 = vst [vmem:[#allocation2 + $0x38] sm:$0xf] %v1224
  %v1226 = vld [vmem:[#allocation2 + $0x5c] sm:$0xf]
  %v1227 = vsel %vm985, %v925, %v1226
  %1228 = vst [vmem:[#allocation2 + $0x5c] sm:$0xf] %v1227
  %v1229 = vld [vmem:[#allocation2 + $0x80] sm:$0xf]
  %v1230 = vsel %vm985, %v929, %v1229
  %1231 = vst [vmem:[#allocation2 + $0x80] sm:$0xf] %v1230
  %v1232 = vld [vmem:[#allocation2 + $0xa4] sm:$0xf]
  %v1233 = vsel %vm985, %v933, %v1232
  %1234 = vst [vmem:[#allocation2 + $0xa4] sm:$0xf] %v1233
  %v1235 = vld [vmem:[#allocation2 + $0xc8] sm:$0xf]
  %v1236 = vsel %vm985, %v937, %v1235
  %1237 = vst [vmem:[#allocation2 + $0xc8] sm:$0xf] %v1236
  %v1238 = vld [vmem:[#allocation2 + $0xec] sm:$0xf]
  %v1239 = vsel %vm985, %v941, %v1238
  %1240 = vst [vmem:[#allocation2 + $0xec] sm:$0xf] %v1239
  %v1241 = vld [vmem:[#allocation2 + $0x110] sm:$0xf]
  %v1242 = vsel %vm985, %v1213, %v1241
  %1243 = vst [vmem:[#allocation2 + $0x110] sm:$0xf] %v1242
  %v1244 = vld [vmem:[#allocation2 + $0x134] sm:$0xf]
  %v1245 = vsel %vm985, %v945, %v1244
  %1246 = vst [vmem:[#allocation2 + $0x134] sm:$0xf] %v1245
  %v1247 = vld [vmem:[#allocation2 + $0x158] sm:$0xf]
  %v1248 = vsel %vm985, %v949, %v1247
  %1249 = vst [vmem:[#allocation2 + $0x158] sm:$0xf] %v1248
  %v1250 = vld [vmem:[#allocation2 + $0x17c] sm:$0xf]
  %v1251 = vsel %vm985, %v953, %v1250
  %1252 = vst [vmem:[#allocation2 + $0x17c] sm:$0xf] %v1251
  %v1253 = vld [vmem:[#allocation2 + $0x1a0] sm:$0xf]
  %v1254 = vsel %vm985, %v957, %v1253
  %1255 = vst [vmem:[#allocation2 + $0x1a0] sm:$0xf] %v1254
  %v1256 = vld [vmem:[#allocation2 + $0x1c4] sm:$0xf]
  %v1257 = vsel %vm985, %v961, %v1256
  %1258 = vst [vmem:[#allocation2 + $0x1c4] sm:$0xf] %v1257
  %v1259 = vld [vmem:[#allocation2 + $0x1e8] sm:$0xf]
  %v1260 = vsel %vm985, %v965, %v1259
  %1261 = vst [vmem:[#allocation2 + $0x1e8] sm:$0xf] %v1260
  %v1262 = vld [vmem:[#allocation2 + $0x20c] sm:$0xf]
  %v1263 = vsel %vm985, %v969, %v1262
  %1264 = vst [vmem:[#allocation2 + $0x20c] sm:$0xf] %v1263
  %v1265 = vld [vmem:[#allocation2 + $0x230] sm:$0xf]
  %v1266 = vsel %vm985, %v1217, %v1265
  %1267 = vst [vmem:[#allocation2 + $0x230] sm:$0xf] %v1266
  %s1268 = scalar_lea.vmem [#allocation2], 252
  %1269 = vst [vmem:[%s1268 + $0x18] sm:$0xf] 0
  %1270 = vst [vmem:[%s1268 + $0x138] sm:$0xf] 0
  %v1271 = vld [vmem:[#allocation2 + $0x18] sm:$0x1]
  %v1272 = vsel %vm596, 0, %v1271
  %1273 = vst [vmem:[#allocation2 + $0x18] sm:$0x1] %v1272
  %v1274 = vld [vmem:[#allocation2 + $0x3c] sm:$0x1]
  %v1275 = vsel %vm596, 0, %v1274
  %1276 = vst [vmem:[#allocation2 + $0x3c] sm:$0x1] %v1275
  %v1277 = vld [vmem:[#allocation2 + $0x60] sm:$0x1]
  %v1278 = vsel %vm596, 0, %v1277
  %1279 = vst [vmem:[#allocation2 + $0x60] sm:$0x1] %v1278
  %v1280 = vld [vmem:[#allocation2 + $0x84] sm:$0x1]
  %v1281 = vsel %vm596, 0, %v1280
  %1282 = vst [vmem:[#allocation2 + $0x84] sm:$0x1] %v1281
  %v1283 = vld [vmem:[#allocation2 + $0xa8] sm:$0x1]
  %v1284 = vsel %vm596, 0, %v1283
  %1285 = vst [vmem:[#allocation2 + $0xa8] sm:$0x1] %v1284
  %v1286 = vld [vmem:[#allocation2 + $0xcc] sm:$0x1]
  %v1287 = vsel %vm596, 0, %v1286
  %1288 = vst [vmem:[#allocation2 + $0xcc] sm:$0x1] %v1287
  %v1289 = vld [vmem:[#allocation2 + $0xf0] sm:$0x1]
  %v1290 = vsel %vm596, 0, %v1289
  %1291 = vst [vmem:[#allocation2 + $0xf0] sm:$0x1] %v1290
  %v1292 = vld [vmem:[#allocation2 + $0x114] sm:$0x1]
  %v1293 = vsel %vm596, 0, %v1292
  %1294 = vst [vmem:[#allocation2 + $0x114] sm:$0x1] %v1293
  %v1295 = vld [vmem:[#allocation2 + $0x138] sm:$0x1]
  %v1296 = vsel %vm596, 0, %v1295
  %1297 = vst [vmem:[#allocation2 + $0x138] sm:$0x1] %v1296
  %v1298 = vld [vmem:[#allocation2 + $0x15c] sm:$0x1]
  %v1299 = vsel %vm596, 0, %v1298
  %1300 = vst [vmem:[#allocation2 + $0x15c] sm:$0x1] %v1299
  %v1301 = vld [vmem:[#allocation2 + $0x180] sm:$0x1]
  %v1302 = vsel %vm596, 0, %v1301
  %1303 = vst [vmem:[#allocation2 + $0x180] sm:$0x1] %v1302
  %v1304 = vld [vmem:[#allocation2 + $0x1a4] sm:$0x1]
  %v1305 = vsel %vm596, 0, %v1304
  %1306 = vst [vmem:[#allocation2 + $0x1a4] sm:$0x1] %v1305
  %v1307 = vld [vmem:[#allocation2 + $0x1c8] sm:$0x1]
  %v1308 = vsel %vm596, 0, %v1307
  %1309 = vst [vmem:[#allocation2 + $0x1c8] sm:$0x1] %v1308
  %v1310 = vld [vmem:[#allocation2 + $0x1ec] sm:$0x1]
  %v1311 = vsel %vm596, 0, %v1310
  %1312 = vst [vmem:[#allocation2 + $0x1ec] sm:$0x1] %v1311
  %v1313 = vld [vmem:[#allocation2 + $0x210] sm:$0x1]
  %v1314 = vsel %vm596, 0, %v1313
  %1315 = vst [vmem:[#allocation2 + $0x210] sm:$0x1] %v1314
  %v1316 = vld [vmem:[#allocation2 + $0x234] sm:$0x1]
  %v1317 = vsel %vm596, 0, %v1316
  %1318 = vst [vmem:[#allocation2 + $0x234] sm:$0x1] %v1317
  %v1319 = vld [vmem:[#allocation2 + $0x18] sm:$0xf]
  %v1320 = vsel %vm802, %v700, %v1319
  %1321 = vst [vmem:[#allocation2 + $0x18] sm:$0xf] %v1320
  %v1322 = vld [vmem:[#allocation2 + $0x3c] sm:$0xf]
  %v1323 = vsel %vm802, %v707, %v1322
  %1324 = vst [vmem:[#allocation2 + $0x3c] sm:$0xf] %v1323
  %v1325 = vld [vmem:[#allocation2 + $0x60] sm:$0xf]
  %v1326 = vsel %vm802, %v714, %v1325
  %1327 = vst [vmem:[#allocation2 + $0x60] sm:$0xf] %v1326
  %v1328 = vld [vmem:[#allocation2 + $0x84] sm:$0xf]
  %v1329 = vsel %vm802, %v721, %v1328
  %1330 = vst [vmem:[#allocation2 + $0x84] sm:$0xf] %v1329
  %v1331 = vld [vmem:[#allocation2 + $0xa8] sm:$0xf]
  %v1332 = vsel %vm802, %v728, %v1331
  %1333 = vst [vmem:[#allocation2 + $0xa8] sm:$0xf] %v1332
  %v1334 = vld [vmem:[#allocation2 + $0xcc] sm:$0xf]
  %v1335 = vsel %vm802, %v735, %v1334
  %1336 = vst [vmem:[#allocation2 + $0xcc] sm:$0xf] %v1335
  %v1337 = vld [vmem:[#allocation2 + $0xf0] sm:$0xf]
  %v1338 = vsel %vm802, %v1088, %v1337
  %1339 = vst [vmem:[#allocation2 + $0xf0] sm:$0xf] %v1338
  %v1340 = vld [vmem:[#allocation2 + $0x138] sm:$0xf]
  %v1341 = vsel %vm802, %v749, %v1340
  %1342 = vst [vmem:[#allocation2 + $0x138] sm:$0xf] %v1341
  %v1343 = vld [vmem:[#allocation2 + $0x15c] sm:$0xf]
  %v1344 = vsel %vm802, %v756, %v1343
  %1345 = vst [vmem:[#allocation2 + $0x15c] sm:$0xf] %v1344
  %v1346 = vld [vmem:[#allocation2 + $0x180] sm:$0xf]
  %v1347 = vsel %vm802, %v763, %v1346
  %1348 = vst [vmem:[#allocation2 + $0x180] sm:$0xf] %v1347
  %v1349 = vld [vmem:[#allocation2 + $0x1a4] sm:$0xf]
  %v1350 = vsel %vm802, %v770, %v1349
  %1351 = vst [vmem:[#allocation2 + $0x1a4] sm:$0xf] %v1350
  %v1352 = vld [vmem:[#allocation2 + $0x1c8] sm:$0xf]
  %v1353 = vsel %vm802, %v777, %v1352
  %1354 = vst [vmem:[#allocation2 + $0x1c8] sm:$0xf] %v1353
  %v1355 = vld [vmem:[#allocation2 + $0x1ec] sm:$0xf]
  %v1356 = vsel %vm802, %v784, %v1355
  %1357 = vst [vmem:[#allocation2 + $0x1ec] sm:$0xf] %v1356
  %v1358 = vld [vmem:[#allocation2 + $0x210] sm:$0xf]
  %v1359 = vsel %vm802, %v1095, %v1358
  %1360 = vst [vmem:[#allocation2 + $0x210] sm:$0xf] %v1359
  %1361 = vst [vmem:[%s1268 + $0x1c] sm:$0xf] 0
  %1362 = vst [vmem:[%s1268 + $0x13c] sm:$0xf] 0
  %1363 = vst [vmem:[#allocation2 + $0x1c] sm:$0xf] %v577
  %1364 = vst [vmem:[#allocation2 + $0x40] sm:$0xf] %v578
  %1365 = vst [vmem:[#allocation2 + $0x64] sm:$0xf] %v579
  %1366 = vst [vmem:[#allocation2 + $0x88] sm:$0xf] %v580
  %1367 = vst [vmem:[#allocation2 + $0xac] sm:$0xf] %v581
  %1368 = vst [vmem:[#allocation2 + $0xd0] sm:$0xf] %v582
  %1369 = vst [vmem:[#allocation2 + $0xf4] sm:$0xf] %v583
  %1370 = vst [vmem:[#allocation2 + $0x13c] sm:$0xf] %v585
  %1371 = vst [vmem:[#allocation2 + $0x160] sm:$0xf] %v586
  %1372 = vst [vmem:[#allocation2 + $0x184] sm:$0xf] %v587
  %1373 = vst [vmem:[#allocation2 + $0x1a8] sm:$0xf] %v588
  %1374 = vst [vmem:[#allocation2 + $0x1cc] sm:$0xf] %v589
  %1375 = vst [vmem:[#allocation2 + $0x1f0] sm:$0xf] %v590
  %1376 = vst [vmem:[#allocation2 + $0x214] sm:$0xf] %v591
  %1377 = vst [vmem:[%s1268 + $0x20] sm:$0xf] 0
  %1378 = vst [vmem:[%s1268 + $0x140] sm:$0xf] 0
  %v1379 = vld [vmem:[#allocation2 + $0x20] sm:$0x8]
  %v1380 = vsel %vm865, 0, %v1379
  %1381 = vst [vmem:[#allocation2 + $0x20] sm:$0x8] %v1380
  %v1382 = vld [vmem:[#allocation2 + $0x44] sm:$0x8]
  %v1383 = vsel %vm865, 0, %v1382
  %1384 = vst [vmem:[#allocation2 + $0x44] sm:$0x8] %v1383
  %v1385 = vld [vmem:[#allocation2 + $0x68] sm:$0x8]
  %v1386 = vsel %vm865, 0, %v1385
  %1387 = vst [vmem:[#allocation2 + $0x68] sm:$0x8] %v1386
  %v1388 = vld [vmem:[#allocation2 + $0x8c] sm:$0x8]
  %v1389 = vsel %vm865, 0, %v1388
  %1390 = vst [vmem:[#allocation2 + $0x8c] sm:$0x8] %v1389
  %v1391 = vld [vmem:[#allocation2 + $0xb0] sm:$0x8]
  %v1392 = vsel %vm865, 0, %v1391
  %1393 = vst [vmem:[#allocation2 + $0xb0] sm:$0x8] %v1392
  %v1394 = vld [vmem:[#allocation2 + $0xd4] sm:$0x8]
  %v1395 = vsel %vm865, 0, %v1394
  %1396 = vst [vmem:[#allocation2 + $0xd4] sm:$0x8] %v1395
  %v1397 = vld [vmem:[#allocation2 + $0xf8] sm:$0x8]
  %v1398 = vsel %vm865, 0, %v1397
  %1399 = vst [vmem:[#allocation2 + $0xf8] sm:$0x8] %v1398
  %v1400 = vld [vmem:[#allocation2 + $0x11c] sm:$0x8]
  %v1401 = vsel %vm865, 0, %v1400
  %1402 = vst [vmem:[#allocation2 + $0x11c] sm:$0x8] %v1401
  %v1403 = vld [vmem:[#allocation2 + $0x140] sm:$0x8]
  %v1404 = vsel %vm865, 0, %v1403
  %1405 = vst [vmem:[#allocation2 + $0x140] sm:$0x8] %v1404
  %v1406 = vld [vmem:[#allocation2 + $0x164] sm:$0x8]
  %v1407 = vsel %vm865, 0, %v1406
  %1408 = vst [vmem:[#allocation2 + $0x164] sm:$0x8] %v1407
  %v1409 = vld [vmem:[#allocation2 + $0x188] sm:$0x8]
  %v1410 = vsel %vm865, 0, %v1409
  %1411 = vst [vmem:[#allocation2 + $0x188] sm:$0x8] %v1410
  %v1412 = vld [vmem:[#allocation2 + $0x1ac] sm:$0x8]
  %v1413 = vsel %vm865, 0, %v1412
  %1414 = vst [vmem:[#allocation2 + $0x1ac] sm:$0x8] %v1413
  %v1415 = vld [vmem:[#allocation2 + $0x1d0] sm:$0x8]
  %v1416 = vsel %vm865, 0, %v1415
  %1417 = vst [vmem:[#allocation2 + $0x1d0] sm:$0x8] %v1416
  %v1418 = vld [vmem:[#allocation2 + $0x1f4] sm:$0x8]
  %v1419 = vsel %vm865, 0, %v1418
  %1420 = vst [vmem:[#allocation2 + $0x1f4] sm:$0x8] %v1419
  %v1421 = vld [vmem:[#allocation2 + $0x218] sm:$0x8]
  %v1422 = vsel %vm865, 0, %v1421
  %1423 = vst [vmem:[#allocation2 + $0x218] sm:$0x8] %v1422
  %v1424 = vld [vmem:[#allocation2 + $0x23c] sm:$0x8]
  %v1425 = vsel %vm865, 0, %v1424
  %1426 = vst [vmem:[#allocation2 + $0x23c] sm:$0x8] %v1425
  %v1427 = vld [vmem:[#allocation2 + $0x20] sm:$0xf]
  %v1428 = vsel %vm985, %v921, %v1427
  %1429 = vst [vmem:[#allocation2 + $0x20] sm:$0xf] %v1428
  %v1430 = vld [vmem:[#allocation2 + $0x44] sm:$0xf]
  %v1431 = vsel %vm985, %v925, %v1430
  %1432 = vst [vmem:[#allocation2 + $0x44] sm:$0xf] %v1431
  %v1433 = vld [vmem:[#allocation2 + $0x68] sm:$0xf]
  %v1434 = vsel %vm985, %v929, %v1433
  %1435 = vst [vmem:[#allocation2 + $0x68] sm:$0xf] %v1434
  %v1436 = vld [vmem:[#allocation2 + $0x8c] sm:$0xf]
  %v1437 = vsel %vm985, %v933, %v1436
  %1438 = vst [vmem:[#allocation2 + $0x8c] sm:$0xf] %v1437
  %v1439 = vld [vmem:[#allocation2 + $0xb0] sm:$0xf]
  %v1440 = vsel %vm985, %v937, %v1439
  %1441 = vst [vmem:[#allocation2 + $0xb0] sm:$0xf] %v1440
  %v1442 = vld [vmem:[#allocation2 + $0xd4] sm:$0xf]
  %v1443 = vsel %vm985, %v941, %v1442
  %1444 = vst [vmem:[#allocation2 + $0xd4] sm:$0xf] %v1443
  %v1445 = vld [vmem:[#allocation2 + $0xf8] sm:$0xf]
  %v1446 = vsel %vm985, %v1213, %v1445
  %1447 = vst [vmem:[#allocation2 + $0xf8] sm:$0xf] %v1446
  %v1448 = vld [vmem:[#allocation2 + $0x140] sm:$0xf]
  %v1449 = vsel %vm985, %v949, %v1448
  %1450 = vst [vmem:[#allocation2 + $0x140] sm:$0xf] %v1449
  %v1451 = vld [vmem:[#allocation2 + $0x164] sm:$0xf]
  %v1452 = vsel %vm985, %v953, %v1451
  %1453 = vst [vmem:[#allocation2 + $0x164] sm:$0xf] %v1452
  %v1454 = vld [vmem:[#allocation2 + $0x188] sm:$0xf]
  %v1455 = vsel %vm985, %v957, %v1454
  %1456 = vst [vmem:[#allocation2 + $0x188] sm:$0xf] %v1455
  %v1457 = vld [vmem:[#allocation2 + $0x1ac] sm:$0xf]
  %v1458 = vsel %vm985, %v961, %v1457
  %1459 = vst [vmem:[#allocation2 + $0x1ac] sm:$0xf] %v1458
  %v1460 = vld [vmem:[#allocation2 + $0x1d0] sm:$0xf]
  %v1461 = vsel %vm985, %v965, %v1460
  %1462 = vst [vmem:[#allocation2 + $0x1d0] sm:$0xf] %v1461
  %v1463 = vld [vmem:[#allocation2 + $0x1f4] sm:$0xf]
  %v1464 = vsel %vm985, %v969, %v1463
  %1465 = vst [vmem:[#allocation2 + $0x1f4] sm:$0xf] %v1464
  %v1466 = vld [vmem:[#allocation2 + $0x218] sm:$0xf]
  %v1467 = vsel %vm985, %v1217, %v1466
  %1468 = vst [vmem:[#allocation2 + $0x218] sm:$0xf] %v1467
  %v1469 = vld [vmem:[#allocation2] sm:$0xff]
  %v1470 = vld [vmem:[#allocation2 + $0x8] sm:$0xff]
  %v1471 = vld [vmem:[#allocation2 + $0x10] sm:$0xff]
  %v1472 = vld [vmem:[#allocation2 + $0x18] sm:$0xff]
  %v1473 = vld [vmem:[#allocation2 + $0x20] sm:$0xf]
  %v1474 = vld [vmem:[#allocation2 + $0x24] sm:$0xff]
  %v1475 = vld [vmem:[#allocation2 + $0x2c] sm:$0xff]
  %v1476 = vld [vmem:[#allocation2 + $0x34] sm:$0xff]
  %v1477 = vld [vmem:[#allocation2 + $0x3c] sm:$0xff]
  %v1478 = vld [vmem:[#allocation2 + $0x44] sm:$0xf]
  %v1479 = vld [vmem:[#allocation2 + $0x48] sm:$0xff]
  %v1480 = vld [vmem:[#allocation2 + $0x50] sm:$0xff]
  %v1481 = vld [vmem:[#allocation2 + $0x58] sm:$0xff]
  %v1482 = vld [vmem:[#allocation2 + $0x60] sm:$0xff]
  %v1483 = vld [vmem:[#allocation2 + $0x68] sm:$0xf]
  %v1484 = vld [vmem:[#allocation2 + $0x6c] sm:$0xff]
  %v1485 = vld [vmem:[#allocation2 + $0x74] sm:$0xff]
  %v1486 = vld [vmem:[#allocation2 + $0x7c] sm:$0xff]
  %v1487 = vld [vmem:[#allocation2 + $0x84] sm:$0xff]
  %v1488 = vld [vmem:[#allocation2 + $0x8c] sm:$0xf]
  %v1489 = vld [vmem:[#allocation2 + $0x90] sm:$0xff]
  %v1490 = vld [vmem:[#allocation2 + $0x98] sm:$0xff]
  %v1491 = vld [vmem:[#allocation2 + $0xa0] sm:$0xff]
  %v1492 = vld [vmem:[#allocation2 + $0xa8] sm:$0xff]
  %v1493 = vld [vmem:[#allocation2 + $0xb0] sm:$0xf]
  %v1494 = vld [vmem:[#allocation2 + $0xb4] sm:$0xff]
  %v1495 = vld [vmem:[#allocation2 + $0xbc] sm:$0xff]
  %v1496 = vld [vmem:[#allocation2 + $0xc4] sm:$0xff]
  %v1497 = vld [vmem:[#allocation2 + $0xcc] sm:$0xff]
  %v1498 = vld [vmem:[#allocation2 + $0xd4] sm:$0xf]
  %v1499 = vld [vmem:[#allocation2 + $0xd8] sm:$0xff]
  %v1500 = vld [vmem:[#allocation2 + $0xe0] sm:$0xff]
  %v1501 = vld [vmem:[#allocation2 + $0xe8] sm:$0xff]
  %v1502 = vld [vmem:[#allocation2 + $0xf0] sm:$0xff]
  %v1503 = vld [vmem:[#allocation2 + $0xf8] sm:$0xf]
  %v1504 = vld [vmem:[#allocation2 + $0xfc] sm:$0xff]
  %v1505 = vld [vmem:[#allocation2 + $0x104] sm:$0xff]
  %v1506 = vld [vmem:[#allocation2 + $0x10c] sm:$0xff]
  %v1507 = vld [vmem:[#allocation2 + $0x114] sm:$0xff]
  %v1508 = vld [vmem:[#allocation2 + $0x11c] sm:$0xf]
  %v1509 = vld [vmem:[#allocation2 + $0x120] sm:$0xff]
  %v1510 = vld [vmem:[#allocation2 + $0x128] sm:$0xff]
  %v1511 = vld [vmem:[#allocation2 + $0x130] sm:$0xff]
  %v1512 = vld [vmem:[#allocation2 + $0x138] sm:$0xff]
  %v1513 = vld [vmem:[#allocation2 + $0x140] sm:$0xf]
  %v1514 = vld [vmem:[#allocation2 + $0x144] sm:$0xff]
  %v1515 = vld [vmem:[#allocation2 + $0x14c] sm:$0xff]
  %v1516 = vld [vmem:[#allocation2 + $0x154] sm:$0xff]
  %v1517 = vld [vmem:[#allocation2 + $0x15c] sm:$0xff]
  %v1518 = vld [vmem:[#allocation2 + $0x164] sm:$0xf]
  %v1519 = vld [vmem:[#allocation2 + $0x168] sm:$0xff]
  %v1520 = vld [vmem:[#allocation2 + $0x170] sm:$0xff]
  %v1521 = vld [vmem:[#allocation2 + $0x178] sm:$0xff]
  %v1522 = vld [vmem:[#allocation2 + $0x180] sm:$0xff]
  %v1523 = vld [vmem:[#allocation2 + $0x188] sm:$0xf]
  %v1524 = vld [vmem:[#allocation2 + $0x18c] sm:$0xff]
  %v1525 = vld [vmem:[#allocation2 + $0x194] sm:$0xff]
  %v1526 = vld [vmem:[#allocation2 + $0x19c] sm:$0xff]
  %v1527 = vld [vmem:[#allocation2 + $0x1a4] sm:$0xff]
  %v1528 = vld [vmem:[#allocation2 + $0x1ac] sm:$0xf]
  %v1529 = vld [vmem:[#allocation2 + $0x1b0] sm:$0xff]
  %v1530 = vld [vmem:[#allocation2 + $0x1b8] sm:$0xff]
  %v1531 = vld [vmem:[#allocation2 + $0x1c0] sm:$0xff]
  %v1532 = vld [vmem:[#allocation2 + $0x1c8] sm:$0xff]
  %v1533 = vld [vmem:[#allocation2 + $0x1d0] sm:$0xf]
  %v1534 = vld [vmem:[#allocation2 + $0x1d4] sm:$0xff]
  %v1535 = vld [vmem:[#allocation2 + $0x1dc] sm:$0xff]
  %v1536 = vld [vmem:[#allocation2 + $0x1e4] sm:$0xff]
  %v1537 = vld [vmem:[#allocation2 + $0x1ec] sm:$0xff]
  %v1538 = vld [vmem:[#allocation2 + $0x1f4] sm:$0xf]
  %v1539 = vld [vmem:[#allocation2 + $0x1f8] sm:$0xff]
  %v1540 = vld [vmem:[#allocation2 + $0x200] sm:$0xff]
  %v1541 = vld [vmem:[#allocation2 + $0x208] sm:$0xff]
  %v1542 = vld [vmem:[#allocation2 + $0x210] sm:$0xff]
  %v1543 = vld [vmem:[#allocation2 + $0x218] sm:$0xf]
  %v1544 = vld [vmem:[#allocation2 + $0x21c] sm:$0xff]
  %v1545 = vld [vmem:[#allocation2 + $0x224] sm:$0xff]
  %v1546 = vld [vmem:[#allocation2 + $0x22c] sm:$0xff]
  %v1547 = vld [vmem:[#allocation2 + $0x234] sm:$0xff]
  %v1548 = vld [vmem:[#allocation2 + $0x23c] sm:$0xf]
  %v1549 = vld [vmem:[%s2] sm:$0xf]
  %v1550 = vld [vmem:[%s2 + $0x4] sm:$0xf]
  %v1551 = vld [vmem:[%s2 + $0x8] sm:$0xf]
  %v1552 = vld [vmem:[%s2 + $0xc] sm:$0xf]
  %v1553 = vld [vmem:[%s2 + $0x10] sm:$0xf]
  %v1554 = vld [vmem:[%s2 + $0x14] sm:$0xf]
  %v1555 = vld [vmem:[%s2 + $0x18] sm:$0xf]
  %v1556 = vld [vmem:[%s2 + $0x1c] sm:$0xf]
  %v1557 = vld [vmem:[%s2 + $0x20] sm:$0xf]
  %v1558 = vld [vmem:[%s2 + $0x24] sm:$0xf]
  %v1559 = vld [vmem:[%s2 + $0x28] sm:$0xf]
  %v1560 = vld [vmem:[%s2 + $0x2c] sm:$0xf]
  %v1561 = vld [vmem:[%s2 + $0x30] sm:$0xf]
  %v1562 = vld [vmem:[%s2 + $0x34] sm:$0xf]
  %v1563 = vld [vmem:[%s2 + $0x38] sm:$0xf]
  %v1564 = vld [vmem:[%s2 + $0x3c] sm:$0xf]
  %v1565 = vld [vmem:[%s2 + $0x40] sm:$0xf]
  %v1566 = vld [vmem:[%s2 + $0x44] sm:$0xf]
  %v1567 = vld [vmem:[%s2 + $0x48] sm:$0xf]
  %v1568 = vld [vmem:[%s2 + $0x4c] sm:$0xf]
  %v1569 = vld [vmem:[%s2 + $0x50] sm:$0xf]
  %v1570 = vld [vmem:[%s2 + $0x54] sm:$0xf]
  %v1571 = vld [vmem:[%s2 + $0x58] sm:$0xf]
  %v1572 = vld [vmem:[%s2 + $0x5c] sm:$0xf]
  %v1573 = vld [vmem:[%s2 + $0x60] sm:$0xf]
  %v1574 = vld [vmem:[%s2 + $0x64] sm:$0xf]
  %v1575 = vld [vmem:[%s2 + $0x68] sm:$0xf]
  %v1576 = vld [vmem:[%s2 + $0x6c] sm:$0xf]
  %v1577 = vld [vmem:[%s2 + $0x70] sm:$0xf]
  %v1578 = vld [vmem:[%s2 + $0x74] sm:$0xf]
  %v1579 = vld [vmem:[%s2 + $0x78] sm:$0xf]
  %v1580 = vld [vmem:[%s2 + $0x7c] sm:$0xf]
  %v1581 = vld [vmem:[%s2 + $0x80] sm:$0xf]
  %v1582 = vld [vmem:[%s2 + $0x84] sm:$0xf]
  %v1583 = vld [vmem:[%s2 + $0x88] sm:$0xf]
  %v1584 = vld [vmem:[%s2 + $0x8c] sm:$0xf]
  %v1585 = vld [vmem:[%s2 + $0x90] sm:$0xf]
  %v1586 = vld [vmem:[%s2 + $0x94] sm:$0xf]
  %v1587 = vld [vmem:[%s2 + $0x98] sm:$0xf]
  %v1588 = vld [vmem:[%s2 + $0x9c] sm:$0xf]
  %v1589 = vld [vmem:[%s2 + $0xa0] sm:$0xf]
  %v1590 = vld [vmem:[%s2 + $0xa4] sm:$0xf]
  %v1591 = vld [vmem:[%s2 + $0xa8] sm:$0xf]
  %v1592 = vld [vmem:[%s2 + $0xac] sm:$0xf]
  %v1593 = vld [vmem:[%s2 + $0xb0] sm:$0xf]
  %v1594 = vld [vmem:[%s2 + $0xb4] sm:$0xf]
  %v1595 = vld [vmem:[%s2 + $0xb8] sm:$0xf]
  %v1596 = vld [vmem:[%s2 + $0xbc] sm:$0xf]
  %v1597 = vld [vmem:[%s2 + $0xc0] sm:$0xf]
  %v1598 = vld [vmem:[%s2 + $0xc4] sm:$0xf]
  %v1599 = vld [vmem:[%s2 + $0xc8] sm:$0xf]
  %v1600 = vld [vmem:[%s2 + $0xcc] sm:$0xf]
  %v1601 = vld [vmem:[%s2 + $0xd0] sm:$0xf]
  %v1602 = vld [vmem:[%s2 + $0xd4] sm:$0xf]
  %v1603 = vld [vmem:[%s2 + $0xd8] sm:$0xf]
  %v1604 = vld [vmem:[%s2 + $0xdc] sm:$0xf]
  %v1605 = vld [vmem:[%s2 + $0xe0] sm:$0xf]
  %v1606 = vld [vmem:[%s2 + $0xe4] sm:$0xf]
  %v1607 = vld [vmem:[%s2 + $0xe8] sm:$0xf]
  %v1608 = vld [vmem:[%s2 + $0xec] sm:$0xf]
  %v1609 = vld [vmem:[%s2 + $0xf0] sm:$0xf]
  %v1610 = vld [vmem:[%s2 + $0xf4] sm:$0xf]
  %v1611 = vld [vmem:[%s2 + $0xf8] sm:$0xf]
  %v1612 = vld [vmem:[%s2 + $0xfc] sm:$0xf]
  %v1613 = vld [vmem:[%s2 + $0x100] sm:$0xf]
  %v1614 = vld [vmem:[%s2 + $0x104] sm:$0xf]
  %v1615 = vld [vmem:[%s2 + $0x108] sm:$0xf]
  %v1616 = vld [vmem:[%s2 + $0x10c] sm:$0xf]
  %v1617 = vld [vmem:[%s2 + $0x110] sm:$0xf]
  %v1618 = vld [vmem:[%s2 + $0x114] sm:$0xf]
  %v1619 = vld [vmem:[%s2 + $0x118] sm:$0xf]
  %v1620 = vld [vmem:[%s2 + $0x11c] sm:$0xf]
  %v1621 = vld [vmem:[%s2 + $0x120] sm:$0xf]
  %v1622 = vld [vmem:[%s2 + $0x124] sm:$0xf]
  %v1623 = vld [vmem:[%s2 + $0x128] sm:$0xf]
  %v1624 = vld [vmem:[%s2 + $0x12c] sm:$0xf]
  %v1625 = vld [vmem:[%s2 + $0x130] sm:$0xf]
  %v1626 = vld [vmem:[%s2 + $0x134] sm:$0xf]
  %v1627 = vld [vmem:[%s2 + $0x138] sm:$0xf]
  %v1628 = vld [vmem:[%s2 + $0x13c] sm:$0xf]
  %v1629 = vld [vmem:[%s2 + $0x140] sm:$0xf]
  %v1630 = vld [vmem:[%s2 + $0x144] sm:$0xf]
  %v1631 = vld [vmem:[%s2 + $0x148] sm:$0xf]
  %v1632 = vld [vmem:[%s2 + $0x14c] sm:$0xf]
  %v1633 = vld [vmem:[%s2 + $0x150] sm:$0xf]
  %v1634 = vld [vmem:[%s2 + $0x154] sm:$0xf]
  %v1635 = vld [vmem:[%s2 + $0x158] sm:$0xf]
  %v1636 = vld [vmem:[%s2 + $0x15c] sm:$0xf]
  %v1637 = vld [vmem:[%s2 + $0x160] sm:$0xf]
  %v1638 = vld [vmem:[%s2 + $0x164] sm:$0xf]
  %v1639 = vld [vmem:[%s2 + $0x168] sm:$0xf]
  %v1640 = vld [vmem:[%s2 + $0x16c] sm:$0xf]
  %v1641 = vld [vmem:[%s2 + $0x170] sm:$0xf]
  %v1642 = vld [vmem:[%s2 + $0x174] sm:$0xf]
  %v1643 = vld [vmem:[%s2 + $0x178] sm:$0xf]
  %v1644 = vld [vmem:[%s2 + $0x17c] sm:$0xf]
  %v1645 = vld [vmem:[%s2 + $0x180] sm:$0xf]
  %v1646 = vld [vmem:[%s2 + $0x184] sm:$0xf]
  %v1647 = vld [vmem:[%s2 + $0x188] sm:$0xf]
  %v1648 = vld [vmem:[%s2 + $0x18c] sm:$0xf]
  %v1649 = vld [vmem:[%s2 + $0x190] sm:$0xf]
  %v1650 = vld [vmem:[%s2 + $0x194] sm:$0xf]
  %v1651 = vld [vmem:[%s2 + $0x198] sm:$0xf]
  %v1652 = vld [vmem:[%s2 + $0x19c] sm:$0xf]
  %v1653 = vld [vmem:[%s2 + $0x1a0] sm:$0xf]
  %v1654 = vld [vmem:[%s2 + $0x1a4] sm:$0xf]
  %v1655 = vld [vmem:[%s2 + $0x1a8] sm:$0xf]
  %v1656 = vld [vmem:[%s2 + $0x1ac] sm:$0xf]
  %v1657 = vld [vmem:[%s2 + $0x1b0] sm:$0xf]
  %v1658 = vld [vmem:[%s2 + $0x1b4] sm:$0xf]
  %v1659 = vld [vmem:[%s2 + $0x1b8] sm:$0xf]
  %v1660 = vld [vmem:[%s2 + $0x1bc] sm:$0xf]
  %v1661 = vld [vmem:[%s2 + $0x1c0] sm:$0xf]
  %v1662 = vld [vmem:[%s2 + $0x1c4] sm:$0xf]
  %v1663 = vld [vmem:[%s2 + $0x1c8] sm:$0xf]
  %v1664 = vld [vmem:[%s2 + $0x1cc] sm:$0xf]
  %v1665 = vld [vmem:[%s2 + $0x1d0] sm:$0xf]
  %v1666 = vld [vmem:[%s2 + $0x1d4] sm:$0xf]
  %v1667 = vld [vmem:[%s2 + $0x1d8] sm:$0xf]
  %v1668 = vld [vmem:[%s2 + $0x1dc] sm:$0xf]
  %v1669 = vld [vmem:[%s2 + $0x1e0] sm:$0xf]
  %v1670 = vld [vmem:[%s2 + $0x1e4] sm:$0xf]
  %v1671 = vld [vmem:[%s2 + $0x1e8] sm:$0xf]
  %v1672 = vld [vmem:[%s2 + $0x1ec] sm:$0xf]
  %v1673 = vld [vmem:[%s2 + $0x1f0] sm:$0xf]
  %v1674 = vld [vmem:[%s2 + $0x1f4] sm:$0xf]
  %v1675 = vld [vmem:[%s2 + $0x1f8] sm:$0xf]
  %v1676 = vld [vmem:[%s2 + $0x1fc] sm:$0xf]
  %v1677 = vld [vmem:[%s2 + $0x200] sm:$0xf]
  %v1678 = vld [vmem:[%s2 + $0x204] sm:$0xf]
  %v1679 = vld [vmem:[%s2 + $0x208] sm:$0xf]
  %v1680 = vld [vmem:[%s2 + $0x20c] sm:$0xf]
  %v1681 = vld [vmem:[%s2 + $0x210] sm:$0xf]
  %v1682 = vld [vmem:[%s2 + $0x214] sm:$0xf]
  %v1683 = vld [vmem:[%s2 + $0x218] sm:$0xf]
  %v1684 = vld [vmem:[%s2 + $0x21c] sm:$0xf]
  %v1685 = vld [vmem:[%s2 + $0x220] sm:$0xf]
  %v1686 = vld [vmem:[%s2 + $0x224] sm:$0xf]
  %v1687 = vld [vmem:[%s2 + $0x228] sm:$0xf]
  %v1688 = vld [vmem:[%s2 + $0x22c] sm:$0xf]
  %v1689 = vld [vmem:[%s2 + $0x230] sm:$0xf]
  %v1690 = vld [vmem:[%s2 + $0x234] sm:$0xf]
  %v1691 = vld [vmem:[%s2 + $0x238] sm:$0xf]
  %v1692 = vld [vmem:[%s2 + $0x23c] sm:$0xf]
  %v1773 = vunpack.c.l.b16 %v1469
  %v1774 = vunpack.c.h.b16 %v1469
  %v1775 = vunpack.c.l.b16 %v1470
  %v1776 = vunpack.c.h.b16 %v1470
  %v1777 = vunpack.c.l.b16 %v1471
  %v1778 = vunpack.c.h.b16 %v1471
  %v1779 = vunpack.c.l.b16 %v1472
  %v1780 = vunpack.c.h.b16 %v1472
  %v1781 = vunpack.c.l.b16 %v1473
  %v1782 = vunpack.c.l.b16 %v1474
  %v1783 = vunpack.c.h.b16 %v1474
  %v1784 = vunpack.c.l.b16 %v1475
  %v1785 = vunpack.c.h.b16 %v1475
  %v1786 = vunpack.c.l.b16 %v1476
  %v1787 = vunpack.c.h.b16 %v1476
  %v1788 = vunpack.c.l.b16 %v1477
  %v1789 = vunpack.c.h.b16 %v1477
  %v1790 = vunpack.c.l.b16 %v1478
  %v1791 = vunpack.c.l.b16 %v1479
  %v1792 = vunpack.c.h.b16 %v1479
  %v1793 = vunpack.c.l.b16 %v1480
  %v1794 = vunpack.c.h.b16 %v1480
  %v1795 = vunpack.c.l.b16 %v1481
  %v1796 = vunpack.c.h.b16 %v1481
  %v1797 = vunpack.c.l.b16 %v1482
  %v1798 = vunpack.c.h.b16 %v1482
  %v1799 = vunpack.c.l.b16 %v1483
  %v1800 = vunpack.c.l.b16 %v1484
  %v1801 = vunpack.c.h.b16 %v1484
  %v1802 = vunpack.c.l.b16 %v1485
  %v1803 = vunpack.c.h.b16 %v1485
  %v1804 = vunpack.c.l.b16 %v1486
  %v1805 = vunpack.c.h.b16 %v1486
  %v1806 = vunpack.c.l.b16 %v1487
  %v1807 = vunpack.c.h.b16 %v1487
  %v1808 = vunpack.c.l.b16 %v1488
  %v1809 = vunpack.c.l.b16 %v1489
  %v1810 = vunpack.c.h.b16 %v1489
  %v1811 = vunpack.c.l.b16 %v1490
  %v1812 = vunpack.c.h.b16 %v1490
  %v1813 = vunpack.c.l.b16 %v1491
  %v1814 = vunpack.c.h.b16 %v1491
  %v1815 = vunpack.c.l.b16 %v1492
  %v1816 = vunpack.c.h.b16 %v1492
  %v1817 = vunpack.c.l.b16 %v1493
  %v1818 = vunpack.c.l.b16 %v1494
  %v1819 = vunpack.c.h.b16 %v1494
  %v1820 = vunpack.c.l.b16 %v1495
  %v1821 = vunpack.c.h.b16 %v1495
  %v1822 = vunpack.c.l.b16 %v1496
  %v1823 = vunpack.c.h.b16 %v1496
  %v1824 = vunpack.c.l.b16 %v1497
  %v1825 = vunpack.c.h.b16 %v1497
  %v1826 = vunpack.c.l.b16 %v1498
  %v1827 = vunpack.c.l.b16 %v1499
  %v1828 = vunpack.c.h.b16 %v1499
  %v1829 = vunpack.c.l.b16 %v1500
  %v1830 = vunpack.c.h.b16 %v1500
  %v1831 = vunpack.c.l.b16 %v1501
  %v1832 = vunpack.c.h.b16 %v1501
  %v1833 = vunpack.c.l.b16 %v1502
  %v1834 = vunpack.c.h.b16 %v1502
  %v1835 = vunpack.c.l.b16 %v1503
  %v1836 = vunpack.c.l.b16 %v1504
  %v1837 = vunpack.c.h.b16 %v1504
  %v1838 = vunpack.c.l.b16 %v1505
  %v1839 = vunpack.c.h.b16 %v1505
  %v1840 = vunpack.c.l.b16 %v1506
  %v1841 = vunpack.c.h.b16 %v1506
  %v1842 = vunpack.c.l.b16 %v1507
  %v1843 = vunpack.c.h.b16 %v1507
  %v1844 = vunpack.c.l.b16 %v1508
  %v1845 = vunpack.c.l.b16 %v1509
  %v1846 = vunpack.c.h.b16 %v1509
  %v1847 = vunpack.c.l.b16 %v1510
  %v1848 = vunpack.c.h.b16 %v1510
  %v1849 = vunpack.c.l.b16 %v1511
  %v1850 = vunpack.c.h.b16 %v1511
  %v1851 = vunpack.c.l.b16 %v1512
  %v1852 = vunpack.c.h.b16 %v1512
  %v1853 = vunpack.c.l.b16 %v1513
  %v1854 = vunpack.c.l.b16 %v1514
  %v1855 = vunpack.c.h.b16 %v1514
  %v1856 = vunpack.c.l.b16 %v1515
  %v1857 = vunpack.c.h.b16 %v1515
  %v1858 = vunpack.c.l.b16 %v1516
  %v1859 = vunpack.c.h.b16 %v1516
  %v1860 = vunpack.c.l.b16 %v1517
  %v1861 = vunpack.c.h.b16 %v1517
  %v1862 = vunpack.c.l.b16 %v1518
  %v1863 = vunpack.c.l.b16 %v1519
  %v1864 = vunpack.c.h.b16 %v1519
  %v1865 = vunpack.c.l.b16 %v1520
  %v1866 = vunpack.c.h.b16 %v1520
  %v1867 = vunpack.c.l.b16 %v1521
  %v1868 = vunpack.c.h.b16 %v1521
  %v1869 = vunpack.c.l.b16 %v1522
  %v1870 = vunpack.c.h.b16 %v1522
  %v1871 = vunpack.c.l.b16 %v1523
  %v1872 = vunpack.c.l.b16 %v1524
  %v1873 = vunpack.c.h.b16 %v1524
  %v1874 = vunpack.c.l.b16 %v1525
  %v1875 = vunpack.c.h.b16 %v1525
  %v1876 = vunpack.c.l.b16 %v1526
  %v1877 = vunpack.c.h.b16 %v1526
  %v1878 = vunpack.c.l.b16 %v1527
  %v1879 = vunpack.c.h.b16 %v1527
  %v1880 = vunpack.c.l.b16 %v1528
  %v1881 = vunpack.c.l.b16 %v1529
  %v1882 = vunpack.c.h.b16 %v1529
  %v1883 = vunpack.c.l.b16 %v1530
  %v1884 = vunpack.c.h.b16 %v1530
  %v1885 = vunpack.c.l.b16 %v1531
  %v1886 = vunpack.c.h.b16 %v1531
  %v1887 = vunpack.c.l.b16 %v1532
  %v1888 = vunpack.c.h.b16 %v1532
  %v1889 = vunpack.c.l.b16 %v1533
  %v1890 = vunpack.c.l.b16 %v1534
  %v1891 = vunpack.c.h.b16 %v1534
  %v1892 = vunpack.c.l.b16 %v1535
  %v1893 = vunpack.c.h.b16 %v1535
  %v1894 = vunpack.c.l.b16 %v1536
  %v1895 = vunpack.c.h.b16 %v1536
  %v1896 = vunpack.c.l.b16 %v1537
  %v1897 = vunpack.c.h.b16 %v1537
  %v1898 = vunpack.c.l.b16 %v1538
  %v1899 = vunpack.c.l.b16 %v1539
  %v1900 = vunpack.c.h.b16 %v1539
  %v1901 = vunpack.c.l.b16 %v1540
  %v1902 = vunpack.c.h.b16 %v1540
  %v1903 = vunpack.c.l.b16 %v1541
  %v1904 = vunpack.c.h.b16 %v1541
  %v1905 = vunpack.c.l.b16 %v1542
  %v1906 = vunpack.c.h.b16 %v1542
  %v1907 = vunpack.c.l.b16 %v1543
  %v1908 = vunpack.c.l.b16 %v1544
  %v1909 = vunpack.c.h.b16 %v1544
  %v1910 = vunpack.c.l.b16 %v1545
  %v1911 = vunpack.c.h.b16 %v1545
  %v1912 = vunpack.c.l.b16 %v1546
  %v1913 = vunpack.c.h.b16 %v1546
  %v1914 = vunpack.c.l.b16 %v1547
  %v1915 = vunpack.c.h.b16 %v1547
  %v1916 = vunpack.c.l.b16 %v1548
  %v1917 = vpack.c.b16 %v1782, %v1773
  %v1918 = vpack.c.b16 %v1783, %v1774
  %v1919 = vpack.c.b16 %v1784, %v1775
  %v1920 = vpack.c.b16 %v1785, %v1776
  %v1921 = vpack.c.b16 %v1786, %v1777
  %v1922 = vpack.c.b16 %v1787, %v1778
  %v1923 = vpack.c.b16 %v1788, %v1779
  %v1924 = vpack.c.b16 %v1789, %v1780
  %v1925 = vpack.c.b16 %v1790, %v1781
  %v1926 = vpack.c.b16 %v1800, %v1791
  %v1927 = vpack.c.b16 %v1801, %v1792
  %v1928 = vpack.c.b16 %v1802, %v1793
  %v1929 = vpack.c.b16 %v1803, %v1794
  %v1930 = vpack.c.b16 %v1804, %v1795
  %v1931 = vpack.c.b16 %v1805, %v1796
  %v1932 = vpack.c.b16 %v1806, %v1797
  %v1933 = vpack.c.b16 %v1807, %v1798
  %v1934 = vpack.c.b16 %v1808, %v1799
  %v1935 = vpack.c.b16 %v1818, %v1809
  %v1936 = vpack.c.b16 %v1819, %v1810
  %v1937 = vpack.c.b16 %v1820, %v1811
  %v1938 = vpack.c.b16 %v1821, %v1812
  %v1939 = vpack.c.b16 %v1822, %v1813
  %v1940 = vpack.c.b16 %v1823, %v1814
  %v1941 = vpack.c.b16 %v1824, %v1815
  %v1942 = vpack.c.b16 %v1825, %v1816
  %v1943 = vpack.c.b16 %v1826, %v1817
  %v1944 = vpack.c.b16 %v1836, %v1827
  %v1945 = vpack.c.b16 %v1837, %v1828
  %v1946 = vpack.c.b16 %v1838, %v1829
  %v1947 = vpack.c.b16 %v1839, %v1830
  %v1948 = vpack.c.b16 %v1840, %v1831
  %v1949 = vpack.c.b16 %v1841, %v1832
  %v1950 = vpack.c.b16 %v1842, %v1833
  %v1951 = vpack.c.b16 %v1843, %v1834
  %v1952 = vpack.c.b16 %v1844, %v1835
  %v1953 = vpack.c.b16 %v1854, %v1845
  %v1954 = vpack.c.b16 %v1855, %v1846
  %v1955 = vpack.c.b16 %v1856, %v1847
  %v1956 = vpack.c.b16 %v1857, %v1848
  %v1957 = vpack.c.b16 %v1858, %v1849
  %v1958 = vpack.c.b16 %v1859, %v1850
  %v1959 = vpack.c.b16 %v1860, %v1851
  %v1960 = vpack.c.b16 %v1861, %v1852
  %v1961 = vpack.c.b16 %v1862, %v1853
  %v1962 = vpack.c.b16 %v1872, %v1863
  %v1963 = vpack.c.b16 %v1873, %v1864
  %v1964 = vpack.c.b16 %v1874, %v1865
  %v1965 = vpack.c.b16 %v1875, %v1866
  %v1966 = vpack.c.b16 %v1876, %v1867
  %v1967 = vpack.c.b16 %v1877, %v1868
  %v1968 = vpack.c.b16 %v1878, %v1869
  %v1969 = vpack.c.b16 %v1879, %v1870
  %v1970 = vpack.c.b16 %v1880, %v1871
  %v1971 = vpack.c.b16 %v1890, %v1881
  %v1972 = vpack.c.b16 %v1891, %v1882
  %v1973 = vpack.c.b16 %v1892, %v1883
  %v1974 = vpack.c.b16 %v1893, %v1884
  %v1975 = vpack.c.b16 %v1894, %v1885
  %v1976 = vpack.c.b16 %v1895, %v1886
  %v1977 = vpack.c.b16 %v1896, %v1887
  %v1978 = vpack.c.b16 %v1897, %v1888
  %v1979 = vpack.c.b16 %v1898, %v1889
  %v1980 = vpack.c.b16 %v1908, %v1899
  %v1981 = vpack.c.b16 %v1909, %v1900
  %v1982 = vpack.c.b16 %v1910, %v1901
  %v1983 = vpack.c.b16 %v1911, %v1902
  %v1984 = vpack.c.b16 %v1912, %v1903
  %v1985 = vpack.c.b16 %v1913, %v1904
  %v1986 = vpack.c.b16 %v1914, %v1905
  %v1987 = vpack.c.b16 %v1915, %v1906
  %v1988 = vpack.c.b16 %v1916, %v1907
  %v2205 = vunpack.c.l.b16 %v1549
  %v2206 = vunpack.c.l.b16 %v1550
  %v2207 = vunpack.c.l.b16 %v1551
  %v2208 = vunpack.c.l.b16 %v1552
  %v2209 = vunpack.c.l.b16 %v1553
  %v2210 = vunpack.c.l.b16 %v1554
  %v2211 = vunpack.c.l.b16 %v1555
  %v2212 = vunpack.c.l.b16 %v1556
  %v2213 = vunpack.c.l.b16 %v1557
  %v2214 = vunpack.c.l.b16 %v1558
  %v2215 = vunpack.c.l.b16 %v1559
  %v2216 = vunpack.c.l.b16 %v1560
  %v2217 = vunpack.c.l.b16 %v1561
  %v2218 = vunpack.c.l.b16 %v1562
  %v2219 = vunpack.c.l.b16 %v1563
  %v2220 = vunpack.c.l.b16 %v1564
  %v2221 = vunpack.c.l.b16 %v1565
  %v2222 = vunpack.c.l.b16 %v1566
  %v2223 = vunpack.c.l.b16 %v1567
  %v2224 = vunpack.c.l.b16 %v1568
  %v2225 = vunpack.c.l.b16 %v1569
  %v2226 = vunpack.c.l.b16 %v1570
  %v2227 = vunpack.c.l.b16 %v1571
  %v2228 = vunpack.c.l.b16 %v1572
  %v2229 = vunpack.c.l.b16 %v1573
  %v2230 = vunpack.c.l.b16 %v1574
  %v2231 = vunpack.c.l.b16 %v1575
  %v2232 = vunpack.c.l.b16 %v1576
  %v2233 = vunpack.c.l.b16 %v1577
  %v2234 = vunpack.c.l.b16 %v1578
  %v2235 = vunpack.c.l.b16 %v1579
  %v2236 = vunpack.c.l.b16 %v1580
  %v2237 = vunpack.c.l.b16 %v1581
  %v2238 = vunpack.c.l.b16 %v1582
  %v2239 = vunpack.c.l.b16 %v1583
  %v2240 = vunpack.c.l.b16 %v1584
  %v2241 = vunpack.c.l.b16 %v1585
  %v2242 = vunpack.c.l.b16 %v1586
  %v2243 = vunpack.c.l.b16 %v1587
  %v2244 = vunpack.c.l.b16 %v1588
  %v2245 = vunpack.c.l.b16 %v1589
  %v2246 = vunpack.c.l.b16 %v1590
  %v2247 = vunpack.c.l.b16 %v1591
  %v2248 = vunpack.c.l.b16 %v1592
  %v2249 = vunpack.c.l.b16 %v1593
  %v2250 = vunpack.c.l.b16 %v1594
  %v2251 = vunpack.c.l.b16 %v1595
  %v2252 = vunpack.c.l.b16 %v1596
  %v2253 = vunpack.c.l.b16 %v1597
  %v2254 = vunpack.c.l.b16 %v1598
  %v2255 = vunpack.c.l.b16 %v1599
  %v2256 = vunpack.c.l.b16 %v1600
  %v2257 = vunpack.c.l.b16 %v1601
  %v2258 = vunpack.c.l.b16 %v1602
  %v2259 = vunpack.c.l.b16 %v1603
  %v2260 = vunpack.c.l.b16 %v1604
  %v2261 = vunpack.c.l.b16 %v1605
  %v2262 = vunpack.c.l.b16 %v1606
  %v2263 = vunpack.c.l.b16 %v1607
  %v2264 = vunpack.c.l.b16 %v1608
  %v2265 = vunpack.c.l.b16 %v1609
  %v2266 = vunpack.c.l.b16 %v1610
  %v2267 = vunpack.c.l.b16 %v1611
  %v2268 = vunpack.c.l.b16 %v1612
  %v2269 = vunpack.c.l.b16 %v1613
  %v2270 = vunpack.c.l.b16 %v1614
  %v2271 = vunpack.c.l.b16 %v1615
  %v2272 = vunpack.c.l.b16 %v1616
  %v2273 = vunpack.c.l.b16 %v1617
  %v2274 = vunpack.c.l.b16 %v1618
  %v2275 = vunpack.c.l.b16 %v1619
  %v2276 = vunpack.c.l.b16 %v1620
  %v2277 = vunpack.c.l.b16 %v1621
  %v2278 = vunpack.c.l.b16 %v1622
  %v2279 = vunpack.c.l.b16 %v1623
  %v2280 = vunpack.c.l.b16 %v1624
  %v2281 = vunpack.c.l.b16 %v1625
  %v2282 = vunpack.c.l.b16 %v1626
  %v2283 = vunpack.c.l.b16 %v1627
  %v2284 = vunpack.c.l.b16 %v1628
  %v2285 = vunpack.c.l.b16 %v1629
  %v2286 = vunpack.c.l.b16 %v1630
  %v2287 = vunpack.c.l.b16 %v1631
  %v2288 = vunpack.c.l.b16 %v1632
  %v2289 = vunpack.c.l.b16 %v1633
  %v2290 = vunpack.c.l.b16 %v1634
  %v2291 = vunpack.c.l.b16 %v1635
  %v2292 = vunpack.c.l.b16 %v1636
  %v2293 = vunpack.c.l.b16 %v1637
  %v2294 = vunpack.c.l.b16 %v1638
  %v2295 = vunpack.c.l.b16 %v1639
  %v2296 = vunpack.c.l.b16 %v1640
  %v2297 = vunpack.c.l.b16 %v1641
  %v2298 = vunpack.c.l.b16 %v1642
  %v2299 = vunpack.c.l.b16 %v1643
  %v2300 = vunpack.c.l.b16 %v1644
  %v2301 = vunpack.c.l.b16 %v1645
  %v2302 = vunpack.c.l.b16 %v1646
  %v2303 = vunpack.c.l.b16 %v1647
  %v2304 = vunpack.c.l.b16 %v1648
  %v2305 = vunpack.c.l.b16 %v1649
  %v2306 = vunpack.c.l.b16 %v1650
  %v2307 = vunpack.c.l.b16 %v1651
  %v2308 = vunpack.c.l.b16 %v1652
  %v2309 = vunpack.c.l.b16 %v1653
  %v2310 = vunpack.c.l.b16 %v1654
  %v2311 = vunpack.c.l.b16 %v1655
  %v2312 = vunpack.c.l.b16 %v1656
  %v2313 = vunpack.c.l.b16 %v1657
  %v2314 = vunpack.c.l.b16 %v1658
  %v2315 = vunpack.c.l.b16 %v1659
  %v2316 = vunpack.c.l.b16 %v1660
  %v2317 = vunpack.c.l.b16 %v1661
  %v2318 = vunpack.c.l.b16 %v1662
  %v2319 = vunpack.c.l.b16 %v1663
  %v2320 = vunpack.c.l.b16 %v1664
  %v2321 = vunpack.c.l.b16 %v1665
  %v2322 = vunpack.c.l.b16 %v1666
  %v2323 = vunpack.c.l.b16 %v1667
  %v2324 = vunpack.c.l.b16 %v1668
  %v2325 = vunpack.c.l.b16 %v1669
  %v2326 = vunpack.c.l.b16 %v1670
  %v2327 = vunpack.c.l.b16 %v1671
  %v2328 = vunpack.c.l.b16 %v1672
  %v2329 = vunpack.c.l.b16 %v1673
  %v2330 = vunpack.c.l.b16 %v1674
  %v2331 = vunpack.c.l.b16 %v1675
  %v2332 = vunpack.c.l.b16 %v1676
  %v2333 = vunpack.c.l.b16 %v1677
  %v2334 = vunpack.c.l.b16 %v1678
  %v2335 = vunpack.c.l.b16 %v1679
  %v2336 = vunpack.c.l.b16 %v1680
  %v2337 = vunpack.c.l.b16 %v1681
  %v2338 = vunpack.c.l.b16 %v1682
  %v2339 = vunpack.c.l.b16 %v1683
  %v2340 = vunpack.c.l.b16 %v1684
  %v2341 = vunpack.c.l.b16 %v1685
  %v2342 = vunpack.c.l.b16 %v1686
  %v2343 = vunpack.c.l.b16 %v1687
  %v2344 = vunpack.c.l.b16 %v1688
  %v2345 = vunpack.c.l.b16 %v1689
  %v2346 = vunpack.c.l.b16 %v1690
  %v2347 = vunpack.c.l.b16 %v1691
  %v2348 = vunpack.c.l.b16 %v1692
  %v2349 = vpack.c.b16 %v2206, %v2205
  %v2350 = vpack.c.b16 %v2208, %v2207
  %v2351 = vpack.c.b16 %v2210, %v2209
  %v2352 = vpack.c.b16 %v2212, %v2211
  %v2353 = vpack.c.b16 %v2214, %v2213
  %v2354 = vpack.c.b16 %v2216, %v2215
  %v2355 = vpack.c.b16 %v2218, %v2217
  %v2356 = vpack.c.b16 %v2220, %v2219
  %v2357 = vpack.c.b16 %v2222, %v2221
  %v2358 = vpack.c.b16 %v2224, %v2223
  %v2359 = vpack.c.b16 %v2226, %v2225
  %v2360 = vpack.c.b16 %v2228, %v2227
  %v2361 = vpack.c.b16 %v2230, %v2229
  %v2362 = vpack.c.b16 %v2232, %v2231
  %v2363 = vpack.c.b16 %v2234, %v2233
  %v2364 = vpack.c.b16 %v2236, %v2235
  %v2365 = vpack.c.b16 %v2238, %v2237
  %v2366 = vpack.c.b16 %v2240, %v2239
  %v2367 = vpack.c.b16 %v2242, %v2241
  %v2368 = vpack.c.b16 %v2244, %v2243
  %v2369 = vpack.c.b16 %v2246, %v2245
  %v2370 = vpack.c.b16 %v2248, %v2247
  %v2371 = vpack.c.b16 %v2250, %v2249
  %v2372 = vpack.c.b16 %v2252, %v2251
  %v2373 = vpack.c.b16 %v2254, %v2253
  %v2374 = vpack.c.b16 %v2256, %v2255
  %v2375 = vpack.c.b16 %v2258, %v2257
  %v2376 = vpack.c.b16 %v2260, %v2259
  %v2377 = vpack.c.b16 %v2262, %v2261
  %v2378 = vpack.c.b16 %v2264, %v2263
  %v2379 = vpack.c.b16 %v2266, %v2265
  %v2380 = vpack.c.b16 %v2268, %v2267
  %v2381 = vpack.c.b16 %v2270, %v2269
  %v2382 = vpack.c.b16 %v2272, %v2271
  %v2383 = vpack.c.b16 %v2274, %v2273
  %v2384 = vpack.c.b16 %v2276, %v2275
  %v2385 = vpack.c.b16 %v2278, %v2277
  %v2386 = vpack.c.b16 %v2280, %v2279
  %v2387 = vpack.c.b16 %v2282, %v2281
  %v2388 = vpack.c.b16 %v2284, %v2283
  %v2389 = vpack.c.b16 %v2286, %v2285
  %v2390 = vpack.c.b16 %v2288, %v2287
  %v2391 = vpack.c.b16 %v2290, %v2289
  %v2392 = vpack.c.b16 %v2292, %v2291
  %v2393 = vpack.c.b16 %v2294, %v2293
  %v2394 = vpack.c.b16 %v2296, %v2295
  %v2395 = vpack.c.b16 %v2298, %v2297
  %v2396 = vpack.c.b16 %v2300, %v2299
  %v2397 = vpack.c.b16 %v2302, %v2301
  %v2398 = vpack.c.b16 %v2304, %v2303
  %v2399 = vpack.c.b16 %v2306, %v2305
  %v2400 = vpack.c.b16 %v2308, %v2307
  %v2401 = vpack.c.b16 %v2310, %v2309
  %v2402 = vpack.c.b16 %v2312, %v2311
  %v2403 = vpack.c.b16 %v2314, %v2313
  %v2404 = vpack.c.b16 %v2316, %v2315
  %v2405 = vpack.c.b16 %v2318, %v2317
  %v2406 = vpack.c.b16 %v2320, %v2319
  %v2407 = vpack.c.b16 %v2322, %v2321
  %v2408 = vpack.c.b16 %v2324, %v2323
  %v2409 = vpack.c.b16 %v2326, %v2325
  %v2410 = vpack.c.b16 %v2328, %v2327
  %v2411 = vpack.c.b16 %v2330, %v2329
  %v2412 = vpack.c.b16 %v2332, %v2331
  %v2413 = vpack.c.b16 %v2334, %v2333
  %v2414 = vpack.c.b16 %v2336, %v2335
  %v2415 = vpack.c.b16 %v2338, %v2337
  %v2416 = vpack.c.b16 %v2340, %v2339
  %v2417 = vpack.c.b16 %v2342, %v2341
  %v2418 = vpack.c.b16 %v2344, %v2343
  %v2419 = vpack.c.b16 %v2346, %v2345
  %v2420 = vpack.c.b16 %v2348, %v2347
  %2493 = vmatprep.subr.bf16.mxu0 0
  %2494 = vmatpush1.bf16.msra.mxu0 %v2349
  %2495 = vmatprep.subr.bf16.mxu0 0
  %2496 = vmatpush1.bf16.msra.mxu0 %v2350
  %2497 = vmatprep.subr.bf16.mxu0 0
  %2498 = vmatpush1.bf16.msra.mxu0 %v2351
  %2499 = vmatprep.subr.bf16.mxu0 0
  %2500 = vmatpush1.bf16.msra.mxu0 %v2352
  %2501 = vmatprep.subr.bf16.mxu0 0
  %2502 = vmatpush1.bf16.msra.mxu0 %v2353
  %2503 = vmatprep.subr.bf16.mxu0 0
  %2504 = vmatpush1.bf16.msra.mxu0 %v2354
  %2505 = vmatprep.subr.bf16.mxu0 0
  %2506 = vmatpush1.bf16.msra.mxu0 %v2355
  %2507 = vmatprep.subr.bf16.mxu0 0
  %2508 = vmatpush1.bf16.msra.mxu0 %v2356
  %2509 = vmatprep.subr.bf16.mxu0 0
  %2510 = vmatpush1.bf16.msra.mxu0 %v2357
  %2511 = vmatprep.subr.bf16.mxu0 0
  %2512 = vmatpush1.bf16.msra.mxu0 %v2358
  %2513 = vmatprep.subr.bf16.mxu0 0
  %2514 = vmatpush1.bf16.msra.mxu0 %v2359
  %2515 = vmatprep.subr.bf16.mxu0 0
  %2516 = vmatpush1.bf16.msra.mxu0 %v2360
  %2517 = vmatprep.subr.bf16.mxu0 0
  %2518 = vmatpush1.bf16.msra.mxu0 %v2361
  %2519 = vmatprep.subr.bf16.mxu0 0
  %2520 = vmatpush1.bf16.msra.mxu0 %v2362
  %2521 = vmatprep.subr.bf16.mxu0 0
  %2522 = vmatpush1.bf16.msra.mxu0 %v2363
  %2523 = vmatprep.subr.bf16.mxu0 0
  %2524 = vmatpush1.bf16.msra.mxu0 %v2364
  %2525 = vmatprep.mubr.bf16.mxu0 %v1918
  %2526 = vmatmul.mubr.bf16.gmra.mrb[0].mxu0 %v1917
  %v2527 = vpop.f32.mrb[0].mxu0
  %v2528 = vadd.f32 0.0, %v2527
  %v2529 = vpop.f32.mrb[0].mxu0
  %v2530 = vpop.f32.mrb[0].mxu0
  %v2531 = vadd.f32 0.0, %v2530
  %v2532 = vpop.f32.mrb[0].mxu0
  %2533 = vmatprep.mubr.bf16.mxu0 %v1927
  %2534 = vmatmul.mubr.bf16.gmra.mrb[0].mxu0 %v1926
  %v2535 = vpop.f32.mrb[0].mxu0
  %v2536 = vadd.f32 0.0, %v2535
  %v2537 = vpop.f32.mrb[0].mxu0
  %v2538 = vpop.f32.mrb[0].mxu0
  %v2539 = vadd.f32 0.0, %v2538
  %v2540 = vpop.f32.mrb[0].mxu0
  %2541 = vmatprep.mubr.bf16.mxu0 %v1936
  %2542 = vmatmul.mubr.bf16.gmra.mrb[0].mxu0 %v1935
  %v2543 = vpop.f32.mrb[0].mxu0
  %v2544 = vadd.f32 0.0, %v2543
  %v2545 = vpop.f32.mrb[0].mxu0
  %v2546 = vpop.f32.mrb[0].mxu0
  %v2547 = vadd.f32 0.0, %v2546
  %v2548 = vpop.f32.mrb[0].mxu0
  %2549 = vmatprep.mubr.bf16.mxu0 %v1945
  %2550 = vmatmul.mubr.bf16.gmra.mrb[0].mxu0 %v1944
  %v2551 = vpop.f32.mrb[0].mxu0
  %v2552 = vadd.f32 0.0, %v2551
  %v2553 = vpop.f32.mrb[0].mxu0
  %v2554 = vpop.f32.mrb[0].mxu0
  %v2555 = vadd.f32 0.0, %v2554
  %v2556 = vpop.f32.mrb[0].mxu0
  %2557 = vmatprep.mubr.bf16.mxu0 %v1954
  %2558 = vmatmul.mubr.bf16.gmra.mrb[0].mxu0 %v1953
  %v2559 = vpop.f32.mrb[0].mxu0
  %v2560 = vadd.f32 0.0, %v2559
  %v2561 = vpop.f32.mrb[0].mxu0
  %v2562 = vpop.f32.mrb[0].mxu0
  %v2563 = vadd.f32 0.0, %v2562
  %v2564 = vpop.f32.mrb[0].mxu0
  %2565 = vmatprep.mubr.bf16.mxu0 %v1963
  %2566 = vmatmul.mubr.bf16.gmra.mrb[0].mxu0 %v1962
  %v2567 = vpop.f32.mrb[0].mxu0
  %v2568 = vadd.f32 0.0, %v2567
  %v2569 = vpop.f32.mrb[0].mxu0
  %v2570 = vpop.f32.mrb[0].mxu0
  %v2571 = vadd.f32 0.0, %v2570
  %v2572 = vpop.f32.mrb[0].mxu0
  %2573 = vmatprep.mubr.bf16.mxu0 %v1972
  %2574 = vmatmul.mubr.bf16.gmra.mrb[0].mxu0 %v1971
  %v2575 = vpop.f32.mrb[0].mxu0
  %v2576 = vadd.f32 0.0, %v2575
  %v2577 = vpop.f32.mrb[0].mxu0
  %v2578 = vpop.f32.mrb[0].mxu0
  %v2579 = vadd.f32 0.0, %v2578
  %v2580 = vpop.f32.mrb[0].mxu0
  %2581 = vmatprep.mubr.bf16.mxu0 %v1981
  %2582 = vmatmul.mubr.bf16.gmra.mrb[0].mxu0 %v1980
  %v2583 = vpop.f32.mrb[0].mxu0
  %v2584 = vadd.f32 0.0, %v2583
  %v2585 = vpop.f32.mrb[0].mxu0
  %v2586 = vpop.f32.mrb[0].mxu0
  %v2587 = vadd.f32 0.0, %v2586
  %v2588 = vpop.f32.mrb[0].mxu0
  %2589 = vdwg.mxu0
  %2590 = vmatprep.subr.bf16.mxu0 0
  %2591 = vmatpush1.bf16.msra.mxu0 %v2365
  %2592 = vmatprep.subr.bf16.mxu0 0
  %2593 = vmatpush1.bf16.msra.mxu0 %v2366
  %2594 = vmatprep.subr.bf16.mxu0 0
  %2595 = vmatpush1.bf16.msra.mxu0 %v2367
  %2596 = vmatprep.subr.bf16.mxu0 0
  %2597 = vmatpush1.bf16.msra.mxu0 %v2368
  %2598 = vmatprep.subr.bf16.mxu0 0
  %2599 = vmatpush1.bf16.msra.mxu0 %v2369
  %2600 = vmatprep.subr.bf16.mxu0 0
  %2601 = vmatpush1.bf16.msra.mxu0 %v2370
  %2602 = vmatprep.subr.bf16.mxu0 0
  %2603 = vmatpush1.bf16.msra.mxu0 %v2371
  %2604 = vmatprep.subr.bf16.mxu0 0
  %2605 = vmatpush1.bf16.msra.mxu0 %v2372
  %2606 = vmatprep.subr.bf16.mxu0 0
  %2607 = vmatpush1.bf16.msra.mxu0 %v2373
  %2608 = vmatprep.subr.bf16.mxu0 0
  %2609 = vmatpush1.bf16.msra.mxu0 %v2374
  %2610 = vmatprep.subr.bf16.mxu0 0
  %2611 = vmatpush1.bf16.msra.mxu0 %v2375
  %2612 = vmatprep.subr.bf16.mxu0 0
  %2613 = vmatpush1.bf16.msra.mxu0 %v2376
  %2614 = vmatprep.subr.bf16.mxu0 0
  %2615 = vmatpush1.bf16.msra.mxu0 %v2377
  %2616 = vmatprep.subr.bf16.mxu0 0
  %2617 = vmatpush1.bf16.msra.mxu0 %v2378
  %2618 = vmatprep.subr.bf16.mxu0 0
  %2619 = vmatpush1.bf16.msra.mxu0 %v2379
  %2620 = vmatprep.subr.bf16.mxu0 0
  %2621 = vmatpush1.bf16.msra.mxu0 %v2380
  %2622 = vmatprep.mubr.bf16.mxu0 %v1920
  %2623 = vmatmul.mubr.bf16.gmra.mrb[0].mxu0 %v1919
  %v2624 = vpop.f32.mrb[0].mxu0
  %v2625 = vadd.f32 %v2528, %v2624
  %v2626 = vpop.f32.mrb[0].mxu0
  %v2627 = vpop.f32.mrb[0].mxu0
  %v2628 = vadd.f32 %v2531, %v2627
  %v2629 = vpop.f32.mrb[0].mxu0
  %2630 = vmatprep.mubr.bf16.mxu0 %v1929
  %2631 = vmatmul.mubr.bf16.gmra.mrb[0].mxu0 %v1928
  %v2632 = vpop.f32.mrb[0].mxu0
  %v2633 = vadd.f32 %v2536, %v2632
  %v2634 = vpop.f32.mrb[0].mxu0
  %v2635 = vpop.f32.mrb[0].mxu0
  %v2636 = vadd.f32 %v2539, %v2635
  %v2637 = vpop.f32.mrb[0].mxu0
  %2638 = vmatprep.mubr.bf16.mxu0 %v1938
  %2639 = vmatmul.mubr.bf16.gmra.mrb[0].mxu0 %v1937
  %v2640 = vpop.f32.mrb[0].mxu0
  %v2641 = vadd.f32 %v2544, %v2640
  %v2642 = vpop.f32.mrb[0].mxu0
  %v2643 = vpop.f32.mrb[0].mxu0
  %v2644 = vadd.f32 %v2547, %v2643
  %v2645 = vpop.f32.mrb[0].mxu0
  %2646 = vmatprep.mubr.bf16.mxu0 %v1947
  %2647 = vmatmul.mubr.bf16.gmra.mrb[0].mxu0 %v1946
  %v2648 = vpop.f32.mrb[0].mxu0
  %v2649 = vadd.f32 %v2552, %v2648
  %v2650 = vpop.f32.mrb[0].mxu0
  %v2651 = vpop.f32.mrb[0].mxu0
  %v2652 = vadd.f32 %v2555, %v2651
  %v2653 = vpop.f32.mrb[0].mxu0
  %2654 = vmatprep.mubr.bf16.mxu0 %v1956
  %2655 = vmatmul.mubr.bf16.gmra.mrb[0].mxu0 %v1955
  %v2656 = vpop.f32.mrb[0].mxu0
  %v2657 = vadd.f32 %v2560, %v2656
  %v2658 = vpop.f32.mrb[0].mxu0
  %v2659 = vpop.f32.mrb[0].mxu0
  %v2660 = vadd.f32 %v2563, %v2659
  %v2661 = vpop.f32.mrb[0].mxu0
  %2662 = vmatprep.mubr.bf16.mxu0 %v1965
  %2663 = vmatmul.mubr.bf16.gmra.mrb[0].mxu0 %v1964
  %v2664 = vpop.f32.mrb[0].mxu0
  %v2665 = vadd.f32 %v2568, %v2664
  %v2666 = vpop.f32.mrb[0].mxu0
  %v2667 = vpop.f32.mrb[0].mxu0
  %v2668 = vadd.f32 %v2571, %v2667
  %v2669 = vpop.f32.mrb[0].mxu0
  %2670 = vmatprep.mubr.bf16.mxu0 %v1974
  %2671 = vmatmul.mubr.bf16.gmra.mrb[0].mxu0 %v1973
  %v2672 = vpop.f32.mrb[0].mxu0
  %v2673 = vadd.f32 %v2576, %v2672
  %v2674 = vpop.f32.mrb[0].mxu0
  %v2675 = vpop.f32.mrb[0].mxu0
  %v2676 = vadd.f32 %v2579, %v2675
  %v2677 = vpop.f32.mrb[0].mxu0
  %2678 = vmatprep.mubr.bf16.mxu0 %v1983
  %2679 = vmatmul.mubr.bf16.gmra.mrb[0].mxu0 %v1982
  %v2680 = vpop.f32.mrb[0].mxu0
  %v2681 = vadd.f32 %v2584, %v2680
  %v2682 = vpop.f32.mrb[0].mxu0
  %v2683 = vpop.f32.mrb[0].mxu0
  %v2684 = vadd.f32 %v2587, %v2683
  %v2685 = vpop.f32.mrb[0].mxu0
  %2686 = vdwg.mxu0
  %2687 = vmatprep.subr.bf16.mxu0 0
  %2688 = vmatpush1.bf16.msra.mxu0 %v2381
  %2689 = vmatprep.subr.bf16.mxu0 0
  %2690 = vmatpush1.bf16.msra.mxu0 %v2382
  %2691 = vmatprep.subr.bf16.mxu0 0
  %2692 = vmatpush1.bf16.msra.mxu0 %v2383
  %2693 = vmatprep.subr.bf16.mxu0 0
  %2694 = vmatpush1.bf16.msra.mxu0 %v2384
  %2695 = vmatprep.subr.bf16.mxu0 0
  %2696 = vmatpush1.bf16.msra.mxu0 %v2385
  %2697 = vmatprep.subr.bf16.mxu0 0
  %2698 = vmatpush1.bf16.msra.mxu0 %v2386
  %2699 = vmatprep.subr.bf16.mxu0 0
  %2700 = vmatpush1.bf16.msra.mxu0 %v2387
  %2701 = vmatprep.subr.bf16.mxu0 0
  %2702 = vmatpush1.bf16.msra.mxu0 %v2388
  %2703 = vmatprep.subr.bf16.mxu0 0
  %2704 = vmatpush1.bf16.msra.mxu0 %v2389
  %2705 = vmatprep.subr.bf16.mxu0 0
  %2706 = vmatpush1.bf16.msra.mxu0 %v2390
  %2707 = vmatprep.subr.bf16.mxu0 0
  %2708 = vmatpush1.bf16.msra.mxu0 %v2391
  %2709 = vmatprep.subr.bf16.mxu0 0
  %2710 = vmatpush1.bf16.msra.mxu0 %v2392
  %2711 = vmatprep.subr.bf16.mxu0 0
  %2712 = vmatpush1.bf16.msra.mxu0 %v2393
  %2713 = vmatprep.subr.bf16.mxu0 0
  %2714 = vmatpush1.bf16.msra.mxu0 %v2394
  %2715 = vmatprep.subr.bf16.mxu0 0
  %2716 = vmatpush1.bf16.msra.mxu0 %v2395
  %2717 = vmatprep.subr.bf16.mxu0 0
  %2718 = vmatpush1.bf16.msra.mxu0 %v2396
  %2719 = vmatprep.mubr.bf16.mxu0 %v1922
  %2720 = vmatmul.mubr.bf16.gmra.mrb[0].mxu0 %v1921
  %v2721 = vpop.f32.mrb[0].mxu0
  %v2722 = vadd.f32 %v2625, %v2721
  %v2723 = vpop.f32.mrb[0].mxu0
  %v2724 = vpop.f32.mrb[0].mxu0
  %v2725 = vadd.f32 %v2628, %v2724
  %v2726 = vpop.f32.mrb[0].mxu0
  %2727 = vmatprep.mubr.bf16.mxu0 %v1931
  %2728 = vmatmul.mubr.bf16.gmra.mrb[0].mxu0 %v1930
  %v2729 = vpop.f32.mrb[0].mxu0
  %v2730 = vadd.f32 %v2633, %v2729
  %v2731 = vpop.f32.mrb[0].mxu0
  %v2732 = vpop.f32.mrb[0].mxu0
  %v2733 = vadd.f32 %v2636, %v2732
  %v2734 = vpop.f32.mrb[0].mxu0
  %2735 = vmatprep.mubr.bf16.mxu0 %v1940
  %2736 = vmatmul.mubr.bf16.gmra.mrb[0].mxu0 %v1939
  %v2737 = vpop.f32.mrb[0].mxu0
  %v2738 = vadd.f32 %v2641, %v2737
  %v2739 = vpop.f32.mrb[0].mxu0
  %v2740 = vpop.f32.mrb[0].mxu0
  %v2741 = vadd.f32 %v2644, %v2740
  %v2742 = vpop.f32.mrb[0].mxu0
  %2743 = vmatprep.mubr.bf16.mxu0 %v1949
  %2744 = vmatmul.mubr.bf16.gmra.mrb[0].mxu0 %v1948
  %v2745 = vpop.f32.mrb[0].mxu0
  %v2746 = vadd.f32 %v2649, %v2745
  %v2747 = vpop.f32.mrb[0].mxu0
  %v2748 = vpop.f32.mrb[0].mxu0
  %v2749 = vadd.f32 %v2652, %v2748
  %v2750 = vpop.f32.mrb[0].mxu0
  %2751 = vmatprep.mubr.bf16.mxu0 %v1958
  %2752 = vmatmul.mubr.bf16.gmra.mrb[0].mxu0 %v1957
  %v2753 = vpop.f32.mrb[0].mxu0
  %v2754 = vadd.f32 %v2657, %v2753
  %v2755 = vpop.f32.mrb[0].mxu0
  %v2756 = vpop.f32.mrb[0].mxu0
  %v2757 = vadd.f32 %v2660, %v2756
  %v2758 = vpop.f32.mrb[0].mxu0
  %2759 = vmatprep.mubr.bf16.mxu0 %v1967
  %2760 = vmatmul.mubr.bf16.gmra.mrb[0].mxu0 %v1966
  %v2761 = vpop.f32.mrb[0].mxu0
  %v2762 = vadd.f32 %v2665, %v2761
  %v2763 = vpop.f32.mrb[0].mxu0
  %v2764 = vpop.f32.mrb[0].mxu0
  %v2765 = vadd.f32 %v2668, %v2764
  %v2766 = vpop.f32.mrb[0].mxu0
  %2767 = vmatprep.mubr.bf16.mxu0 %v1976
  %2768 = vmatmul.mubr.bf16.gmra.mrb[0].mxu0 %v1975
  %v2769 = vpop.f32.mrb[0].mxu0
  %v2770 = vadd.f32 %v2673, %v2769
  %v2771 = vpop.f32.mrb[0].mxu0
  %v2772 = vpop.f32.mrb[0].mxu0
  %v2773 = vadd.f32 %v2676, %v2772
  %v2774 = vpop.f32.mrb[0].mxu0
  %2775 = vmatprep.mubr.bf16.mxu0 %v1985
  %2776 = vmatmul.mubr.bf16.gmra.mrb[0].mxu0 %v1984
  %v2777 = vpop.f32.mrb[0].mxu0
  %v2778 = vadd.f32 %v2681, %v2777
  %v2779 = vpop.f32.mrb[0].mxu0
  %v2780 = vpop.f32.mrb[0].mxu0
  %v2781 = vadd.f32 %v2684, %v2780
  %v2782 = vpop.f32.mrb[0].mxu0
  %2783 = vdwg.mxu0
  %2784 = vmatprep.subr.bf16.mxu0 0
  %2785 = vmatpush1.bf16.msra.mxu0 %v2397
  %2786 = vmatprep.subr.bf16.mxu0 0
  %2787 = vmatpush1.bf16.msra.mxu0 %v2398
  %2788 = vmatprep.subr.bf16.mxu0 0
  %2789 = vmatpush1.bf16.msra.mxu0 %v2399
  %2790 = vmatprep.subr.bf16.mxu0 0
  %2791 = vmatpush1.bf16.msra.mxu0 %v2400
  %2792 = vmatprep.subr.bf16.mxu0 0
  %2793 = vmatpush1.bf16.msra.mxu0 %v2401
  %2794 = vmatprep.subr.bf16.mxu0 0
  %2795 = vmatpush1.bf16.msra.mxu0 %v2402
  %2796 = vmatprep.subr.bf16.mxu0 0
  %2797 = vmatpush1.bf16.msra.mxu0 %v2403
  %2798 = vmatprep.subr.bf16.mxu0 0
  %2799 = vmatpush1.bf16.msra.mxu0 %v2404
  %2800 = vmatprep.subr.bf16.mxu0 0
  %2801 = vmatpush1.bf16.msra.mxu0 %v2405
  %2802 = vmatprep.subr.bf16.mxu0 0
  %2803 = vmatpush1.bf16.msra.mxu0 %v2406
  %2804 = vmatprep.subr.bf16.mxu0 0
  %2805 = vmatpush1.bf16.msra.mxu0 %v2407
  %2806 = vmatprep.subr.bf16.mxu0 0
  %2807 = vmatpush1.bf16.msra.mxu0 %v2408
  %2808 = vmatprep.subr.bf16.mxu0 0
  %2809 = vmatpush1.bf16.msra.mxu0 %v2409
  %2810 = vmatprep.subr.bf16.mxu0 0
  %2811 = vmatpush1.bf16.msra.mxu0 %v2410
  %2812 = vmatprep.subr.bf16.mxu0 0
  %2813 = vmatpush1.bf16.msra.mxu0 %v2411
  %2814 = vmatprep.subr.bf16.mxu0 0
  %2815 = vmatpush1.bf16.msra.mxu0 %v2412
  %2816 = vmatprep.mubr.bf16.mxu0 %v1924
  %2817 = vmatmul.mubr.bf16.gmra.mrb[0].mxu0 %v1923
  %v2818 = vpop.f32.mrb[0].mxu0
  %v2819 = vadd.f32 %v2722, %v2818
  %v2820 = vpop.f32.mrb[0].mxu0
  %v2821 = vpop.f32.mrb[0].mxu0
  %v2822 = vadd.f32 %v2725, %v2821
  %v2823 = vpop.f32.mrb[0].mxu0
  %2824 = vmatprep.mubr.bf16.mxu0 %v1933
  %2825 = vmatmul.mubr.bf16.gmra.mrb[0].mxu0 %v1932
  %v2826 = vpop.f32.mrb[0].mxu0
  %v2827 = vadd.f32 %v2730, %v2826
  %v2828 = vpop.f32.mrb[0].mxu0
  %v2829 = vpop.f32.mrb[0].mxu0
  %v2830 = vadd.f32 %v2733, %v2829
  %v2831 = vpop.f32.mrb[0].mxu0
  %2832 = vmatprep.mubr.bf16.mxu0 %v1942
  %2833 = vmatmul.mubr.bf16.gmra.mrb[0].mxu0 %v1941
  %v2834 = vpop.f32.mrb[0].mxu0
  %v2835 = vadd.f32 %v2738, %v2834
  %v2836 = vpop.f32.mrb[0].mxu0
  %v2837 = vpop.f32.mrb[0].mxu0
  %v2838 = vadd.f32 %v2741, %v2837
  %v2839 = vpop.f32.mrb[0].mxu0
  %2840 = vmatprep.mubr.bf16.mxu0 %v1951
  %2841 = vmatmul.mubr.bf16.gmra.mrb[0].mxu0 %v1950
  %v2842 = vpop.f32.mrb[0].mxu0
  %v2843 = vadd.f32 %v2746, %v2842
  %v2844 = vpop.f32.mrb[0].mxu0
  %v2845 = vpop.f32.mrb[0].mxu0
  %v2846 = vadd.f32 %v2749, %v2845
  %v2847 = vpop.f32.mrb[0].mxu0
  %2848 = vmatprep.mubr.bf16.mxu0 %v1960
  %2849 = vmatmul.mubr.bf16.gmra.mrb[0].mxu0 %v1959
  %v2850 = vpop.f32.mrb[0].mxu0
  %v2851 = vadd.f32 %v2754, %v2850
  %v2852 = vpop.f32.mrb[0].mxu0
  %v2853 = vpop.f32.mrb[0].mxu0
  %v2854 = vadd.f32 %v2757, %v2853
  %v2855 = vpop.f32.mrb[0].mxu0
  %2856 = vmatprep.mubr.bf16.mxu0 %v1969
  %2857 = vmatmul.mubr.bf16.gmra.mrb[0].mxu0 %v1968
  %v2858 = vpop.f32.mrb[0].mxu0
  %v2859 = vadd.f32 %v2762, %v2858
  %v2860 = vpop.f32.mrb[0].mxu0
  %v2861 = vpop.f32.mrb[0].mxu0
  %v2862 = vadd.f32 %v2765, %v2861
  %v2863 = vpop.f32.mrb[0].mxu0
  %2864 = vmatprep.mubr.bf16.mxu0 %v1978
  %2865 = vmatmul.mubr.bf16.gmra.mrb[0].mxu0 %v1977
  %v2866 = vpop.f32.mrb[0].mxu0
  %v2867 = vadd.f32 %v2770, %v2866
  %v2868 = vpop.f32.mrb[0].mxu0
  %v2869 = vpop.f32.mrb[0].mxu0
  %v2870 = vadd.f32 %v2773, %v2869
  %v2871 = vpop.f32.mrb[0].mxu0
  %2872 = vmatprep.mubr.bf16.mxu0 %v1987
  %2873 = vmatmul.mubr.bf16.gmra.mrb[0].mxu0 %v1986
  %v2874 = vpop.f32.mrb[0].mxu0
  %v2875 = vadd.f32 %v2778, %v2874
  %v2876 = vpop.f32.mrb[0].mxu0
  %v2877 = vpop.f32.mrb[0].mxu0
  %v2878 = vadd.f32 %v2781, %v2877
  %v2879 = vpop.f32.mrb[0].mxu0
  %2880 = vdwg.mxu0
  %2881 = vmatprep.subr.bf16.mxu0 0
  %2882 = vmatpush1.bf16.msra.mxu0 %v2413
  %2883 = vmatprep.subr.bf16.mxu0 0
  %2884 = vmatpush1.bf16.msra.mxu0 %v2414
  %2885 = vmatprep.subr.bf16.mxu0 0
  %2886 = vmatpush1.bf16.msra.mxu0 %v2415
  %2887 = vmatprep.subr.bf16.mxu0 0
  %2888 = vmatpush1.bf16.msra.mxu0 %v2416
  %2889 = vmatprep.subr.bf16.mxu0 0
  %2890 = vmatpush1.bf16.msra.mxu0 %v2417
  %2891 = vmatprep.subr.bf16.mxu0 0
  %2892 = vmatpush1.bf16.msra.mxu0 %v2418
  %2893 = vmatprep.subr.bf16.mxu0 0
  %2894 = vmatpush1.bf16.msra.mxu0 %v2419
  %2895 = vmatprep.subr.bf16.mxu0 0
  %2896 = vmatpush1.bf16.msra.mxu0 %v2420
  %2897 = vmatprep.subr.bf16.mxu0 0
  %2898 = vmatpush1.bf16.msra.mxu0 0
  %2899 = vmatprep.subr.bf16.mxu0 0
  %2900 = vmatpush1.bf16.msra.mxu0 0
  %2901 = vmatprep.subr.bf16.mxu0 0
  %2902 = vmatpush1.bf16.msra.mxu0 0
  %2903 = vmatprep.subr.bf16.mxu0 0
  %2904 = vmatpush1.bf16.msra.mxu0 0
  %2905 = vmatprep.subr.bf16.mxu0 0
  %2906 = vmatpush1.bf16.msra.mxu0 0
  %2907 = vmatprep.subr.bf16.mxu0 0
  %2908 = vmatpush1.bf16.msra.mxu0 0
  %2909 = vmatprep.subr.bf16.mxu0 0
  %2910 = vmatpush1.bf16.msra.mxu0 0
  %2911 = vmatprep.subr.bf16.mxu0 0
  %2912 = vmatpush1.bf16.msra.mxu0 0
  %2913 = vmatprep.mubr.bf16.mxu0 0
  %2914 = vmatmul.mubr.bf16.gmra.mrb[0].mxu0 %v1925
  %v2915 = vpop.f32.mrb[0].mxu0
  %v2916 = vadd.f32 %v2819, %v2915
  %v2917 = vpop.f32.mrb[0].mxu0
  %v2918 = vpop.f32.mrb[0].mxu0
  %v2919 = vadd.f32 %v2822, %v2918
  %v2920 = vpop.f32.mrb[0].mxu0
  %2921 = vmatprep.mubr.bf16.mxu0 0
  %2922 = vmatmul.mubr.bf16.gmra.mrb[0].mxu0 %v1934
  %v2923 = vpop.f32.mrb[0].mxu0
  %v2924 = vadd.f32 %v2827, %v2923
  %v2925 = vpop.f32.mrb[0].mxu0
  %v2926 = vpop.f32.mrb[0].mxu0
  %v2927 = vadd.f32 %v2830, %v2926
  %v2928 = vpop.f32.mrb[0].mxu0
  %2929 = vmatprep.mubr.bf16.mxu0 0
  %2930 = vmatmul.mubr.bf16.gmra.mrb[0].mxu0 %v1943
  %v2931 = vpop.f32.mrb[0].mxu0
  %v2932 = vadd.f32 %v2835, %v2931
  %v2933 = vpop.f32.mrb[0].mxu0
  %v2934 = vpop.f32.mrb[0].mxu0
  %v2935 = vadd.f32 %v2838, %v2934
  %v2936 = vpop.f32.mrb[0].mxu0
  %2937 = vmatprep.mubr.bf16.mxu0 0
  %2938 = vmatmul.mubr.bf16.gmra.mrb[0].mxu0 %v1952
  %v2939 = vpop.f32.mrb[0].mxu0
  %v2940 = vadd.f32 %v2843, %v2939
  %v2941 = vpop.f32.mrb[0].mxu0
  %v2942 = vpop.f32.mrb[0].mxu0
  %v2943 = vadd.f32 %v2846, %v2942
  %v2944 = vpop.f32.mrb[0].mxu0
  %2945 = vmatprep.mubr.bf16.mxu0 0
  %2946 = vmatmul.mubr.bf16.gmra.mrb[0].mxu0 %v1961
  %v2947 = vpop.f32.mrb[0].mxu0
  %v2948 = vadd.f32 %v2851, %v2947
  %v2949 = vpop.f32.mrb[0].mxu0
  %v2950 = vpop.f32.mrb[0].mxu0
  %v2951 = vadd.f32 %v2854, %v2950
  %v2952 = vpop.f32.mrb[0].mxu0
  %2953 = vmatprep.mubr.bf16.mxu0 0
  %2954 = vmatmul.mubr.bf16.gmra.mrb[0].mxu0 %v1970
  %v2955 = vpop.f32.mrb[0].mxu0
  %v2956 = vadd.f32 %v2859, %v2955
  %v2957 = vpop.f32.mrb[0].mxu0
  %v2958 = vpop.f32.mrb[0].mxu0
  %v2959 = vadd.f32 %v2862, %v2958
  %v2960 = vpop.f32.mrb[0].mxu0
  %2961 = vmatprep.mubr.bf16.mxu0 0
  %2962 = vmatmul.mubr.bf16.gmra.mrb[0].mxu0 %v1979
  %v2963 = vpop.f32.mrb[0].mxu0
  %v2964 = vadd.f32 %v2867, %v2963
  %v2965 = vpop.f32.mrb[0].mxu0
  %v2966 = vpop.f32.mrb[0].mxu0
  %v2967 = vadd.f32 %v2870, %v2966
  %v2968 = vpop.f32.mrb[0].mxu0
  %2969 = vmatprep.mubr.bf16.mxu0 0
  %2970 = vmatmul.mubr.bf16.gmra.mrb[0].mxu0 %v1988
  %v2971 = vpop.f32.mrb[0].mxu0
  %v2972 = vadd.f32 %v2875, %v2971
  %v2973 = vpop.f32.mrb[0].mxu0
  %v2974 = vpop.f32.mrb[0].mxu0
  %v2975 = vadd.f32 %v2878, %v2974
  %v2976 = vpop.f32.mrb[0].mxu0
  %2977 = vdwg.mxu0
  %v2978 = vadd.f32 %v2916, %v2919
  %v2979 = vadd.f32 %v2978, %v2924
  %v2980 = vadd.f32 %v2979, %v2927
  %v2981 = vadd.f32 %v2980, %v2932
  %v2982 = vadd.f32 %v2981, %v2935
  %v2983 = vadd.f32 %v2982, %v2940
  %v2984 = vadd.f32 %v2983, %v2943
  %v2985 = vadd.f32 %v2984, %v2948
  %v2986 = vadd.f32 %v2985, %v2951
  %v2987 = vadd.f32 %v2986, %v2956
  %v2988 = vadd.f32 %v2987, %v2959
  %v2989 = vadd.f32 %v2988, %v2964
  %v2990 = vadd.f32 %v2989, %v2967
  %v2991 = vadd.f32 %v2990, %v2972
  %v2992 = vadd.f32 %v2991, %v2975
  %v2993 = vrot.slane %v2992, 4
  %v2994 = vadd.f32 %v2992, %v2993
  %v2995 = vrot.slane %v2994, 2
  %v2996 = vadd.f32 %v2994, %v2995
  %v2997 = vrot.slane %v2996, 1
  %v2998 = vadd.f32 %v2996, %v2997
  %v2999 = vmul.f32 %v2998, 0.0078125
  %v3000 = vsub.f32 %v2916, %v2999
  %v3001 = vsub.f32 %v2919, %v2999
  %v3002 = vsub.f32 %v2924, %v2999
  %v3003 = vsub.f32 %v2927, %v2999
  %v3004 = vsub.f32 %v2932, %v2999
  %v3005 = vsub.f32 %v2935, %v2999
  %v3006 = vsub.f32 %v2940, %v2999
  %v3007 = vsub.f32 %v2943, %v2999
  %v3008 = vsub.f32 %v2948, %v2999
  %v3009 = vsub.f32 %v2951, %v2999
  %v3010 = vsub.f32 %v2956, %v2999
  %v3011 = vsub.f32 %v2959, %v2999
  %v3012 = vsub.f32 %v2964, %v2999
  %v3013 = vsub.f32 %v2967, %v2999
  %v3014 = vsub.f32 %v2972, %v2999
  %v3015 = vsub.f32 %v2975, %v2999
  %v3016 = vmul.f32 %v3000, %v3000
  %v3017 = vmul.f32 %v3001, %v3001
  %v3018 = vmul.f32 %v3002, %v3002
  %v3019 = vmul.f32 %v3003, %v3003
  %v3020 = vmul.f32 %v3004, %v3004
  %v3021 = vmul.f32 %v3005, %v3005
  %v3022 = vmul.f32 %v3006, %v3006
  %v3023 = vmul.f32 %v3007, %v3007
  %v3024 = vmul.f32 %v3008, %v3008
  %v3025 = vmul.f32 %v3009, %v3009
  %v3026 = vmul.f32 %v3010, %v3010
  %v3027 = vmul.f32 %v3011, %v3011
  %v3028 = vmul.f32 %v3012, %v3012
  %v3029 = vmul.f32 %v3013, %v3013
  %v3030 = vmul.f32 %v3014, %v3014
  %v3031 = vmul.f32 %v3015, %v3015
  %v3032 = vadd.f32 %v3016, %v3017
  %v3033 = vadd.f32 %v3032, %v3018
  %v3034 = vadd.f32 %v3033, %v3019
  %v3035 = vadd.f32 %v3034, %v3020
  %v3036 = vadd.f32 %v3035, %v3021
  %v3037 = vadd.f32 %v3036, %v3022
  %v3038 = vadd.f32 %v3037, %v3023
  %v3039 = vadd.f32 %v3038, %v3024
  %v3040 = vadd.f32 %v3039, %v3025
  %v3041 = vadd.f32 %v3040, %v3026
  %v3042 = vadd.f32 %v3041, %v3027
  %v3043 = vadd.f32 %v3042, %v3028
  %v3044 = vadd.f32 %v3043, %v3029
  %v3045 = vadd.f32 %v3044, %v3030
  %v3046 = vadd.f32 %v3045, %v3031
  %v3047 = vrot.slane %v3046, 4
  %v3048 = vadd.f32 %v3046, %v3047
  %v3049 = vrot.slane %v3048, 2
  %v3050 = vadd.f32 %v3048, %v3049
  %v3051 = vrot.slane %v3050, 1
  %v3052 = vadd.f32 %v3050, %v3051
  %v3053 = vmul.f32 %v3052, 0.0078125
  %v3054 = vadd.f32 %v3053, 1e-05
  %v3055 = vrsqrt.pop %v3054
  %v3056 = vmul.f32 %v3000, %v3055
  %v3057 = vmul.f32 %v3001, %v3055
  %v3058 = vmul.f32 %v3002, %v3055
  %v3059 = vmul.f32 %v3003, %v3055
  %v3060 = vmul.f32 %v3004, %v3055
  %v3061 = vmul.f32 %v3005, %v3055
  %v3062 = vmul.f32 %v3006, %v3055
  %v3063 = vmul.f32 %v3007, %v3055
  %v3064 = vmul.f32 %v3008, %v3055
  %v3065 = vmul.f32 %v3009, %v3055
  %v3066 = vmul.f32 %v3010, %v3055
  %v3067 = vmul.f32 %v3011, %v3055
  %v3068 = vmul.f32 %v3012, %v3055
  %v3069 = vmul.f32 %v3013, %v3055
  %v3070 = vmul.f32 %v3014, %v3055
  %v3071 = vmul.f32 %v3015, %v3055
  %v3072 = vlaneseq
  %v3073 = vshrl.u32 %v3072, 7
  %v3074 = vsub.s32 4, %v3073
  %v3075 = vrot.slane %v18, %v3074
  %v3076 = vmul.f32 %v3056, %v3075
  %v3077 = vmul.f32 %v3057, %v3075
  %v3078 = vmul.f32 %v3058, %v3075
  %v3079 = vmul.f32 %v3059, %v3075
  %v3080 = vmul.f32 %v3060, %v3075
  %v3081 = vmul.f32 %v3061, %v3075
  %v3082 = vmul.f32 %v3062, %v3075
  %v3083 = vmul.f32 %v3063, %v3075
  %v3084 = vmul.f32 %v3064, %v3075
  %v3085 = vmul.f32 %v3065, %v3075
  %v3086 = vmul.f32 %v3066, %v3075
  %v3087 = vmul.f32 %v3067, %v3075
  %v3088 = vmul.f32 %v3068, %v3075
  %v3089 = vmul.f32 %v3069, %v3075
  %v3090 = vmul.f32 %v3070, %v3075
  %v3091 = vmul.f32 %v3071, %v3075
  %v3092 = vlaneseq
  %v3093 = vshrl.u32 %v3092, 7
  %v3094 = vsub.s32 5, %v3093
  %v3095 = vrot.slane %v18, %v3094
  %v3096 = vadd.f32 %v3076, %v3095
  %v3097 = vadd.f32 %v3077, %v3095
  %v3098 = vadd.f32 %v3078, %v3095
  %v3099 = vadd.f32 %v3079, %v3095
  %v3100 = vadd.f32 %v3080, %v3095
  %v3101 = vadd.f32 %v3081, %v3095
  %v3102 = vadd.f32 %v3082, %v3095
  %v3103 = vadd.f32 %v3083, %v3095
  %v3104 = vadd.f32 %v3084, %v3095
  %v3105 = vadd.f32 %v3085, %v3095
  %v3106 = vadd.f32 %v3086, %v3095
  %v3107 = vadd.f32 %v3087, %v3095
  %v3108 = vadd.f32 %v3088, %v3095
  %v3109 = vadd.f32 %v3089, %v3095
  %v3110 = vadd.f32 %v3090, %v3095
  %v3111 = vadd.f32 %v3091, %v3095
  %v3112 = vadd.f32 %v410, %v3096
  %v3113 = vadd.f32 %v411, %v3097
  %v3114 = vadd.f32 %v412, %v3098
  %v3115 = vadd.f32 %v413, %v3099
  %v3116 = vadd.f32 %v414, %v3100
  %v3117 = vadd.f32 %v415, %v3101
  %v3118 = vadd.f32 %v416, %v3102
  %v3119 = vadd.f32 %v417, %v3103
  %v3120 = vadd.f32 %v418, %v3104
  %v3121 = vadd.f32 %v419, %v3105
  %v3122 = vadd.f32 %v420, %v3106
  %v3123 = vadd.f32 %v421, %v3107
  %v3124 = vadd.f32 %v422, %v3108
  %v3125 = vadd.f32 %v423, %v3109
  %v3126 = vadd.f32 %v424, %v3110
  %v3127 = vadd.f32 %v425, %v3111
  %v3128 = vmax.f32 %v3112, 0.0
  %v3129 = vmax.f32 %v3113, 0.0
  %v3130 = vmax.f32 %v3114, 0.0
  %v3131 = vmax.f32 %v3115, 0.0
  %v3132 = vmax.f32 %v3116, 0.0
  %v3133 = vmax.f32 %v3117, 0.0
  %v3134 = vmax.f32 %v3118, 0.0
  %v3135 = vmax.f32 %v3119, 0.0
  %v3136 = vmax.f32 %v3120, 0.0
  %v3137 = vmax.f32 %v3121, 0.0
  %v3138 = vmax.f32 %v3122, 0.0
  %v3139 = vmax.f32 %v3123, 0.0
  %v3140 = vmax.f32 %v3124, 0.0
  %v3141 = vmax.f32 %v3125, 0.0
  %v3142 = vmax.f32 %v3126, 0.0
  %v3143 = vmax.f32 %v3127, 0.0
  %3144 = vst [vmem:[%s4] sm:$0xff] %v3128
  %3145 = vst [vmem:[%s4 + $0x8] sm:$0xff] %v3129
  %3146 = vst [vmem:[%s4 + $0x10] sm:$0xff] %v3130
  %3147 = vst [vmem:[%s4 + $0x18] sm:$0xff] %v3131
  %3148 = vst [vmem:[%s4 + $0x20] sm:$0xff] %v3132
  %3149 = vst [vmem:[%s4 + $0x28] sm:$0xff] %v3133
  %3150 = vst [vmem:[%s4 + $0x30] sm:$0xff] %v3134
  %3151 = vst [vmem:[%s4 + $0x38] sm:$0xff] %v3135
  %3152 = vst [vmem:[%s4 + $0x40] sm:$0xff] %v3136
  %3153 = vst [vmem:[%s4 + $0x48] sm:$0xff] %v3137
  %3154 = vst [vmem:[%s4 + $0x50] sm:$0xff] %v3138
  %3155 = vst [vmem:[%s4 + $0x58] sm:$0xff] %v3139
  %3156 = vst [vmem:[%s4 + $0x60] sm:$0xff] %v3140
  %3157 = vst [vmem:[%s4 + $0x68] sm:$0xff] %v3141
  %3158 = vst [vmem:[%s4 + $0x70] sm:$0xff] %v3142
  %3159 = vst [vmem:[%s4 + $0x78] sm:$0xff] %v3143
  // Predicated region
  $region18: #{basic_block_2_forward.1} parent=0 // pred_check
    _
  $region19: #{basic_block_2_forward.1} parent=0 // pred_check_branch
    %3161 = sbr.rel (0) target = $region21
  $region20: #{basic_block_2_forward.1} parent=0 // pred_region
    _
  $region21: #{basic_block_2_forward.1} parent=0 // pred_fallthru
    _
  // Predicated region
  $region22: #{basic_block_2_forward.1} parent=0 // pred_check
    _
  $region23: #{basic_block_2_forward.1} parent=0 // pred_check_branch
    %3163 = sbr.rel (0) target = $region25
  $region24: #{basic_block_2_forward.1} parent=0 // pred_region
    _
  $region25: #{basic_block_2_forward.1} parent=0 // pred_fallthru
    _

</llo_original>
